<compile_context>
chip_gen: v6e
topology: v6e:2x2x1
jax: 0.10.0
libtpu: 0.0.40
codegen_flags: <defaults>
</compile_context>

<pallas_src>
import functools

import numpy as np
import jax
import jax.numpy as jnp
from jax.experimental import pallas as pl
from jax.experimental.pallas import tpu as pltpu


_LANE = 128
_TN_MAX = 256                       # output-column tile (>=2 blocks when cout>=512)
_VMEM_LIMIT = 32 * 1024 * 1024

_VMEM = pl.BlockSpec(memory_space=pltpu.MemorySpace.VMEM)
_CP_GRID = pltpu.CompilerParams(dimension_semantics=("parallel",),
                                vmem_limit_bytes=_VMEM_LIMIT)
_CP_PLAIN = pltpu.CompilerParams(vmem_limit_bytes=_VMEM_LIMIT)


def _round_up(x, m):
    return (x + m - 1) // m * m


def _cpad(c):
    return _round_up(c, _LANE)


# ----------------------------------------------------------------------------
# Fused (matmul | 9-tap 3x3 conv) + BatchNorm(batch stats) + residual + act
# ----------------------------------------------------------------------------
def _fused_kernel(*refs, has_bias, has_bn, has_res, act, conv):
    it = iter(refs)
    x_ref = next(it)
    w_ref = next(it)
    b_ref = next(it) if has_bias else None
    if has_bn:
        g_ref = next(it)
        beta_ref = next(it)
    r_ref = next(it) if has_res else None
    o_ref = next(it)

    if conv is None:
        y = jnp.dot(x_ref[...], w_ref[...], preferred_element_type=jnp.float32)
    else:
        # stride-1 3x3 conv fused as 9 shifted matmuls on the halo-padded,
        # row-flattened NHWC activation; boundary taps masked via 2-D iota.
        h, w, m, cin, halo = conv
        row = jax.lax.broadcasted_iota(jnp.int32, (m, 1), 0)
        w_pos = row % w
        h_pos = (row % (h * w)) // w
        y = jnp.zeros((m, w_ref.shape[1]), jnp.float32)
        tap = 0
        for oi in (-1, 0, 1):
            for oj in (-1, 0, 1):
                xt = x_ref[pl.ds(halo + oi * w + oj, m), :]
                conds = []
                if oi < 0:
                    conds.append(h_pos >= -oi)
                if oi > 0:
                    conds.append(h_pos < h - oi)
                if oj < 0:
                    conds.append(w_pos >= -oj)
                if oj > 0:
                    conds.append(w_pos < w - oj)
                if conds:
                    valid = conds[0]
                    for c in conds[1:]:
                        valid = jnp.logical_and(valid, c)
                    xt = xt * valid.astype(xt.dtype)
                y = y + jnp.dot(xt, w_ref[pl.ds(tap * cin, cin), :],
                                preferred_element_type=jnp.float32)
                tap += 1

    if has_bias:
        y = y + b_ref[...]
    if has_bn:
        # BatchNorm training mode: batch statistics, biased variance, eps=1e-5.
        mean = jnp.mean(y, axis=0, keepdims=True)
        var = jnp.mean(jnp.square(y - mean), axis=0, keepdims=True)
        y = (y - mean) * jax.lax.rsqrt(var + 1e-5) * g_ref[...] + beta_ref[...]
    if has_res:
        y = y + r_ref[...].astype(jnp.float32)
    if act == 1:
        y = jnp.maximum(y, 0.0)
    elif act == 2:
        y = pl.reciprocal(1.0 + jnp.exp(-y), approx=True)     # sigmoid (EUP)
    o_ref[...] = y.astype(o_ref.dtype)


def _fused_call(x, wmat, *, bias=None, bn=None, res=None, act=0,
                out_dtype=jnp.bfloat16, conv_hw=None):
    """act( BN( x@w | conv3x3(x,w) (+bias) ) (+res) ), one pallas_call."""
    kdim, n_out = wmat.shape
    assert n_out % _LANE == 0
    if x.dtype != jnp.bfloat16:
        x = x.astype(jnp.bfloat16)

    if conv_hw is None:
        m = x.shape[0]
        assert x.shape[1] == kdim
        conv = None
    else:
        n_im, h, w = conv_hw
        m = n_im * h * w
        cin = kdim // 9
        halo = w + 1
        assert x.shape == (m + 2 * halo, cin)
        conv = (h, w, m, cin, halo)

    tn = n_out if n_out <= _TN_MAX else _TN_MAX
    assert n_out % tn == 0

    inputs = [x, wmat]
    in_specs = [pl.BlockSpec(x.shape, lambda j: (0, 0)),
                pl.BlockSpec((kdim, tn), lambda j: (0, j))]
    if bias is not None:
        inputs.append(bias)
        in_specs.append(pl.BlockSpec((1, tn), lambda j: (0, j)))
    if bn is not None:
        gamma, beta = bn
        inputs += [gamma, beta]
        in_specs += [pl.BlockSpec((1, tn), lambda j: (0, j)),
                     pl.BlockSpec((1, tn), lambda j: (0, j))]
    if res is not None:
        inputs.append(res)
        in_specs.append(pl.BlockSpec((m, tn), lambda j: (0, j)))

    kernel = functools.partial(_fused_kernel,
                               has_bias=bias is not None,
                               has_bn=bn is not None,
                               has_res=res is not None,
                               act=act, conv=conv)
    return pl.pallas_call(
        kernel,
        out_shape=jax.ShapeDtypeStruct((m, n_out), out_dtype),
        grid=(n_out // tn,),
        in_specs=in_specs,
        out_specs=pl.BlockSpec((m, tn), lambda j: (0, j)),
        compiler_params=_CP_GRID,
    )(*inputs)


# ----------------------------------------------------------------------------
# Conv wrappers (zero glue for 1x1; one small pad for the fused 3x3 path)
# ----------------------------------------------------------------------------
def _im2col(xp, kh, kw, stride, ho, wo):
    n, _, _, cin = xp.shape
    cols = []
    for ki in range(kh):
        for kj in range(kw):
            cols.append(xp[:, ki:ki + stride * (ho - 1) + 1:stride,
                            kj:kj + stride * (wo - 1) + 1:stride, :])
    return jnp.concatenate(cols, axis=-1).reshape(n * ho * wo, kh * kw * cin)


def conv1x1_bn_act(x_nhwc, wmat, *, stride=1, bn=None, act=0, res=None,
                   out_dtype=jnp.bfloat16):
    if stride > 1:
        x_nhwc = x_nhwc[:, ::stride, ::stride, :]
    n, ho, wo, cin = x_nhwc.shape
    cout = wmat.shape[1]
    res2 = None if res is None else res.reshape(n * ho * wo, cout)
    y = _fused_call(x_nhwc.reshape(n * ho * wo, cin), wmat,
                    bn=bn, act=act, res=res2, out_dtype=out_dtype)
    return y.reshape(n, ho, wo, cout)


def conv3x3_bn_act(x_nhwc, wmat, *, stride=1, bn=None, act=0,
                   out_dtype=jnp.bfloat16):
    n, h, w, cin = x_nhwc.shape
    cout = wmat.shape[1]
    if stride == 1:
        m = n * h * w
        halo = w + 1
        x2 = jnp.pad(x_nhwc.reshape(m, cin), ((halo, halo), (0, 0)))
        y = _fused_call(x2, wmat, bn=bn, act=act, out_dtype=out_dtype,
                        conv_hw=(n, h, w))
        return y.reshape(n, h, w, cout)
    # stride-2 3x3 (first block of stages 2-4 only): JAX-side im2col.
    xp = jnp.pad(x_nhwc, ((0, 0), (1, 1), (1, 1), (0, 0)))
    ho = (h + 2 - 3) // stride + 1
    wo = (w + 2 - 3) // stride + 1
    pat = _im2col(xp, 3, 3, stride, ho, wo)
    y = _fused_call(pat, wmat, bn=bn, act=act, out_dtype=out_dtype)
    return y.reshape(n, ho, wo, cout)


def conv_im2col_bn_act(x_nhwc, wmat, kh, kw, stride, padding, *, bn=None,
                       act=0, out_dtype=jnp.bfloat16):
    n = x_nhwc.shape[0]
    xp = jnp.pad(x_nhwc, ((0, 0), (padding, padding),
                          (padding, padding), (0, 0))) if padding else x_nhwc
    hp, wp = xp.shape[1], xp.shape[2]
    ho = (hp - kh) // stride + 1
    wo = (wp - kw) // stride + 1
    pat = _im2col(xp, kh, kw, stride, ho, wo)
    y = _fused_call(pat, wmat, bn=bn, act=act, out_dtype=out_dtype)
    return y.reshape(n, ho, wo, wmat.shape[1])


def conv_transpose_bn_act(x_nhwc, wmat, *, bn, act, k=3, stride=2,
                          out_dtype=jnp.bfloat16):
    """ConvTranspose2d(k, stride, pad=0) + BN + act as ONE fused conv call.

    conv_transpose(x, W) == conv(dilate_s(x) padded by k-1, flipped/channel-
    swapped W, stride 1).  The ConvTranspose bias is dropped: a per-channel
    constant shift is exactly cancelled by the training-mode BatchNorm.
    """
    cin = wmat.shape[0] // (k * k)
    if x_nhwc.shape[-1] != cin:
        x_nhwc = x_nhwc[..., :cin]              # drop lane padding of prev layer
    pad_cfg = ((0, 0, 0), (k - 1, k - 1, stride - 1),
               (k - 1, k - 1, stride - 1), (0, 0, 0))
    xp = jax.lax.pad(x_nhwc, jnp.zeros((), x_nhwc.dtype), pad_cfg)
    n, hp, wp, _ = xp.shape
    ho, wo = hp - k + 1, wp - k + 1
    pat = _im2col(xp, k, k, 1, ho, wo)
    y = _fused_call(pat, wmat, bn=bn, act=act, out_dtype=out_dtype)
    return y.reshape(n, ho, wo, wmat.shape[1])


def maxpool_3x3_s2_p1(x_nhwc):
    # TODO(synk): one-off 3x3 max-pool kept as a tiny plain-JAX reduction.
    n, h, w, c = x_nhwc.shape
    xp = jnp.pad(x_nhwc, ((0, 0), (1, 1), (1, 1), (0, 0)),
                 constant_values=-jnp.inf)
    ho = (h + 2 - 3) // 2 + 1
    wo = (w + 2 - 3) // 2 + 1
    out = None
    for ki in range(3):
        for kj in range(3):
            s = xp[:, ki:ki + 2 * (ho - 1) + 1:2, kj:kj + 2 * (wo - 1) + 1:2, :]
            out = s if out is None else jnp.maximum(out, s)
    return out


# ----------------------------------------------------------------------------
# Bilinear resize (all planes per invocation, lane-dense output)
# ----------------------------------------------------------------------------
def _bilinear_kernel(x_ref, ah_ref, awt_ref, o_ref):
    for p in range(x_ref.shape[0]):
        t = jnp.dot(ah_ref[...], x_ref[p], preferred_element_type=jnp.float32)
        o_ref[p] = jnp.dot(t, awt_ref[...], preferred_element_type=jnp.float32)


def _bilinear_matrix(out_size, in_size):
    # F.interpolate(mode='bilinear', align_corners=False) weights.
    a = np.zeros((out_size, in_size), np.float32)
    scale = in_size / out_size
    for o in range(out_size):
        src = max((o + 0.5) * scale - 0.5, 0.0)
        i0 = min(int(np.floor(src)), in_size - 1)
        i1 = min(i0 + 1, in_size - 1)
        w1 = src - i0
        a[o, i0] += 1.0 - w1
        a[o, i1] += w1
    return a


def bilinear_resize_to_nchw(x_nhwc, out_size, channels):
    n, h, w, _ = x_nhwc.shape
    planes = jnp.transpose(x_nhwc[..., :channels],
                           (0, 3, 1, 2)).reshape(n * channels, h, w)
    planes = planes.astype(jnp.float32)
    ow_p = _round_up(out_size, _LANE)
    a_h = jnp.asarray(_bilinear_matrix(out_size, h))
    a_wt = jnp.asarray(np.pad(_bilinear_matrix(out_size, w).T,
                              ((0, 0), (0, ow_p - out_size))))
    out = pl.pallas_call(
        _bilinear_kernel,
        out_shape=jax.ShapeDtypeStruct((n * channels, out_size, ow_p),
                                       jnp.float32),
        in_specs=[_VMEM, _VMEM, _VMEM],
        out_specs=_VMEM,
        compiler_params=_CP_PLAIN,
    )(planes, a_h, a_wt)
    return out[:, :, :out_size].reshape(n, channels, out_size, out_size)


# ----------------------------------------------------------------------------
# Reparameterization (matches the torch in-place semantics)
# ----------------------------------------------------------------------------
def _reparam_kernel(mu_ref, var_ref, eps_ref, ts_ref, z_ref, t_ref, mu_o, var_o):
    mu = mu_ref[...]
    var = var_ref[...]
    z_ref[...] = eps_ref[...] * jnp.sqrt(var) + mu          # eps * std + mu
    mu2 = mu + 0.1                                          # torch .add_(0.1)
    var2 = var + 0.1
    t_ref[...] = mu2 + var2 * ts_ref[...]                   # StudentT(df, loc, scale)
    mu_o[...] = mu2
    var_o[...] = var2


@functools.partial(jax.jit, static_argnames=("embed_dim",))
def reparameterize(mu, var, key, embed_dim):
    k1, k2 = jax.random.split(key)
    # TODO(synk): torch RNG has no Pallas equivalent; normal / StudentT draws
    # come from jax.random, the affine combination runs in the kernel.
    eps = jax.random.normal(k1, mu.shape, dtype=jnp.float32)
    t_std = jax.random.t(k2, float(embed_dim - 1), shape=mu.shape,
                         dtype=jnp.float32)
    z, t, mu2, var2 = pl.pallas_call(
        _reparam_kernel,
        out_shape=tuple(jax.ShapeDtypeStruct(mu.shape, jnp.float32)
                        for _ in range(4)),
        in_specs=[_VMEM] * 4,
        out_specs=(_VMEM,) * 4,
        compiler_params=_CP_PLAIN,
    )(mu, var, eps, t_std)
    return z, t, mu2, var2


# ----------------------------------------------------------------------------
# ResNet_VAE forward (encode -> reparameterize -> decode)
# ----------------------------------------------------------------------------
@jax.jit
def stem(x_nchw, sp):
    x = jnp.transpose(x_nchw, (0, 2, 3, 1)).astype(jnp.bfloat16)   # NCHW->NHWC
    x = conv_im2col_bn_act(x, sp["w"], 7, 7, 2, 3, bn=sp["bn"], act=1)
    return maxpool_3x3_s2_p1(x)


@functools.partial(jax.jit, static_argnames=("stride",))
def bottleneck(x, blk, stride):
    out = conv1x1_bn_act(x, blk["w1"], bn=blk["bn1"], act=1)
    out = conv3x3_bn_act(out, blk["w2"], stride=stride, bn=blk["bn2"], act=1)
    if "wd" in blk:
        idn = conv1x1_bn_act(x, blk["wd"], stride=stride, bn=blk["bnd"], act=0)
    else:
        idn = x
    # conv3 + BN + residual add + ReLU fused into a single pallas_call.
    return conv1x1_bn_act(out, blk["w3"], bn=blk["bn3"], act=1, res=idn)


@functools.partial(jax.jit, static_argnames=("embed",))
def encode_head(x4d, hp, embed):
    feat = jnp.mean(x4d.astype(jnp.float32), axis=(1, 2))   # avgpool + flatten
    # Linear biases feeding a training-mode BN are exact no-ops and are dropped.
    h = _fused_call(feat, hp["fc1_w"], bn=hp["bn1"], act=1)
    h = _fused_call(h, hp["fc2_w"], bn=hp["bn2"], act=1)
    # ReLU on both heads is what the reference module does.
    mu = _fused_call(h, hp["fc3_mu"][0], bias=hp["fc3_mu"][1], act=1,
                     out_dtype=jnp.float32)
    var = _fused_call(h, hp["fc3_var"][0], bias=hp["fc3_var"][1], act=1,
                      out_dtype=jnp.float32)
    return mu[:, :embed], var[:, :embed]


@functools.partial(jax.jit, static_argnames=("img_size",))
def decode(t, dp, img_size):
    h = _fused_call(t, dp["fc4_w"], bn=dp["bn4"], act=1)
    h = _fused_call(h, dp["fc5_w"], bn=dp["bn5"], act=1)
    b = h.shape[0]
    x = jnp.transpose(h.reshape(b, 64, 4, 4), (0, 2, 3, 1))          # -> NHWC
    x = conv_transpose_bn_act(x, dp["ct6_w"], bn=dp["bn6"], act=1)   # 4 -> 9
    x = conv_transpose_bn_act(x, dp["ct7_w"], bn=dp["bn7"], act=1)   # 9 -> 19
    x = conv_transpose_bn_act(x, dp["ct8_w"], bn=dp["bn8"], act=2,
                              out_dtype=jnp.float32)                 # 19 -> 39
    return bilinear_resize_to_nchw(x, img_size, channels=3)


def resnet_vae_forward(x, P, key, img_size, embed_dim):
    a = stem(x, P["stem"])
    for blocks in P["layers"]:
        for blk, s in blocks:
            a = bottleneck(a, blk, stride=s)
    mu, var = encode_head(a, P["head"], embed=embed_dim)
    z, t, mu, var = reparameterize(mu, var, key, embed_dim=embed_dim)
    x_reconst = decode(t, P["dec"], img_size=img_size)
    return x_reconst, z, mu, var, t


# ----------------------------------------------------------------------------
# Deterministic synthetic parameters, pre-padded / pre-cast for the kernels
# (shapes match the PyTorch module / torchvision resnet152)
# ----------------------------------------------------------------------------
def make_params(fc_h1, fc_h2, embed):
    rng = np.random.default_rng(0)

    def conv_mat(cout, cin, kh, kw, pad_cin=True):
        fan = cin * kh * kw
        w = rng.normal(0.0, np.sqrt(2.0 / fan),
                       (cout, cin, kh, kw)).astype(np.float32)
        cin_p = _cpad(cin) if pad_cin else cin
        cout_p = _cpad(cout)
        m = np.zeros((kh, kw, cin_p, cout_p), np.float32)
        m[:, :, :cin, :cout] = np.transpose(w, (2, 3, 1, 0))
        return jnp.asarray(m.reshape(kh * kw * cin_p, cout_p),
                           dtype=jnp.bfloat16)

    def bn(c):
        cp = _cpad(c)
        g = np.zeros((1, cp), np.float32)
        g[:, :c] = 1.0
        return (jnp.asarray(g), jnp.asarray(np.zeros((1, cp), np.float32)))

    def linear_w(cin, cout):
        bd = 1.0 / np.sqrt(cin)
        w = rng.uniform(-bd, bd, (cin, cout)).astype(np.float32)
        m = np.zeros((cin, _cpad(cout)), np.float32)
        m[:, :cout] = w
        return jnp.asarray(m, dtype=jnp.bfloat16)

    def linear_wb(cin, cout):
        bd = 1.0 / np.sqrt(cin)
        w = rng.uniform(-bd, bd, (cin, cout)).astype(np.float32)
        b = rng.uniform(-bd, bd, (1, cout)).astype(np.float32)
        cp = _cpad(cout)
        wm = np.zeros((cin, cp), np.float32)
        wm[:, :cout] = w
        bm = np.zeros((1, cp), np.float32)
        bm[:, :cout] = b
        return (jnp.asarray(wm, dtype=jnp.bfloat16), jnp.asarray(bm))

    def convT_mat(cin, cout, k):
        # PyTorch ConvTranspose2d weight (cin, cout, k, k) -> equivalent
        # stride-1 conv weight: channel swap + spatial flip -> matmul layout.
        bd = 1.0 / np.sqrt(cin * k * k)
        w = rng.uniform(-bd, bd, (cin, cout, k, k)).astype(np.float32)
        wc = np.transpose(w[:, :, ::-1, ::-1], (1, 0, 2, 3))
        cout_p = _cpad(cout)
        m = np.zeros((k, k, cin, cout_p), np.float32)
        m[:, :, :, :cout] = np.transpose(wc, (2, 3, 1, 0))
        return jnp.asarray(m.reshape(k * k * cin, cout_p), dtype=jnp.bfloat16)

    P = {"stem": {"w": conv_mat(64, 3, 7, 7, pad_cin=False), "bn": bn(64)}}

    # ResNet-152 bottleneck stages: [3, 8, 36, 3]
    layers = []
    inplanes = 64
    for planes, nblocks, stride in zip((64, 128, 256, 512), (3, 8, 36, 3),
                                       (1, 2, 2, 2)):
        blocks = []
        for bi in range(nblocks):
            s = stride if bi == 0 else 1
            blk = {"w1": conv_mat(planes, inplanes, 1, 1), "bn1": bn(planes),
                   "w2": conv_mat(planes, planes, 3, 3), "bn2": bn(planes),
                   "w3": conv_mat(planes * 4, planes, 1, 1),
                   "bn3": bn(planes * 4)}
            if s != 1 or inplanes != planes * 4:
                blk["wd"] = conv_mat(planes * 4, inplanes, 1, 1)
                blk["bnd"] = bn(planes * 4)
            inplanes = planes * 4
            blocks.append((blk, s))
        layers.append(blocks)
    P["layers"] = layers

    P["head"] = {"fc1_w": linear_w(2048, fc_h1), "bn1": bn(fc_h1),
                 "fc2_w": linear_w(fc_h1, fc_h2), "bn2": bn(fc_h2),
                 "fc3_mu": linear_wb(fc_h2, embed),
                 "fc3_var": linear_wb(fc_h2, embed)}

    P["dec"] = {"fc4_w": linear_w(embed, fc_h2), "bn4": bn(fc_h2),
                "fc5_w": linear_w(fc_h2, 64 * 4 * 4), "bn5": bn(64 * 4 * 4),
                "ct6_w": convT_mat(64, 32, 3), "bn6": bn(32),
                "ct7_w": convT_mat(32, 8, 3), "bn7": bn(8),
                "ct8_w": convT_mat(8, 3, 3), "bn8": bn(3)}
    return P


if __name__ == "__main__":
    FC_H1, FC_H2, EMBED = 256, 128, 64
    IMG, BATCH = 64, 2          # img_size must survive resnet's /32 downsampling

    P = make_params(FC_H1, FC_H2, EMBED)

    key = jax.random.PRNGKey(0)
    kx, kr = jax.random.split(key)
    x = jax.random.normal(kx, (BATCH, 3, IMG, IMG), dtype=jnp.float32)

    outs = resnet_vae_forward(x, P, kr, IMG, EMBED)
    outs = jax.block_until_ready(outs)
    x_reconst, z, mu, var, t = outs

    assert x_reconst.shape == (BATCH, 3, IMG, IMG)
    assert z.shape == (BATCH, EMBED) and mu.shape == (BATCH, EMBED)
    assert var.shape == (BATCH, EMBED) and t.shape == (BATCH, EMBED)
    for a in (x_reconst, z, mu, var, t):
        assert bool(jnp.isfinite(a).all())
    print("KERNEL_OK")
</pallas_src>

<mosaic_0001>
module attributes {stable_mosaic.version = 11 : i64} {
  func.func @_fused_kernel(%arg0: i32, %arg1: memref<2048x147xbf16, #tpu.memory_space<vmem>>, %arg2: memref<147x128xbf16, #tpu.memory_space<vmem>>, %arg3: memref<1x128xf32, #tpu.memory_space<vmem>>, %arg4: memref<1x128xf32, #tpu.memory_space<vmem>>, %arg5: memref<2048x128xbf16, #tpu.memory_space<vmem>>) attributes {dimension_semantics = [#tpu.dimension_semantics<parallel>], iteration_bounds = array<i64: 1>, scalar_prefetch = 0 : i64, scratch_operands = 0 : i64, tpu.core_type = #tpu.core_type<tc>, window_params = [{pipeline_mode = #tpu.pipeline_mode<synchronous>, transform_indices = @transform_0, window_bounds = array<i64: 2048, 147>}, {transform_indices = @transform_1, window_bounds = array<i64: 147, 128>}, {transform_indices = @transform_2, window_bounds = array<i64: 1, 128>}, {transform_indices = @transform_3, window_bounds = array<i64: 1, 128>}, {transform_indices = @transform_4, window_bounds = array<i64: 2048, 128>}]} {
    %c0 = arith.constant 0 : index
    %c0_0 = arith.constant 0 : index
    %0 = vector.load %arg1[%c0, %c0_0] : memref<2048x147xbf16, #tpu.memory_space<vmem>>, vector<2048x147xbf16>
    %c0_1 = arith.constant 0 : index
    %c0_2 = arith.constant 0 : index
    %1 = vector.load %arg2[%c0_1, %c0_2] : memref<147x128xbf16, #tpu.memory_space<vmem>>, vector<147x128xbf16>
    %cst = arith.constant dense<0.000000e+00> : vector<2048x128xf32>
    %2 = tpu.matmul %0, %1, %cst {dimension_numbers = #tpu.dot_dimension_numbers<[1], [0], [0], [1], [0, 0, 1, 1], [], []>} : vector<2048x147xbf16>, vector<147x128xbf16>, vector<2048x128xf32> -> vector<2048x128xf32>
    %cst_3 = arith.constant dense<0.000000e+00> : vector<128xf32>
    %3 = vector.multi_reduction <add>, %2, %cst_3 [0] : vector<2048x128xf32> to vector<128xf32>
    %4 = vector.shape_cast %3 : vector<128xf32> to vector<1x128xf32>
    %cst_4 = arith.constant 2.048000e+03 : f32
    %5 = vector.broadcast %cst_4 : f32 to vector<1x128xf32>
    %6 = arith.divf %4, %5 : vector<1x128xf32>
    %7 = vector.broadcast %6 : vector<1x128xf32> to vector<2048x128xf32>
    %8 = arith.subf %2, %7 : vector<2048x128xf32>
    %9 = arith.mulf %8, %8 : vector<2048x128xf32>
    %cst_5 = arith.constant dense<0.000000e+00> : vector<128xf32>
    %10 = vector.multi_reduction <add>, %9, %cst_5 [0] : vector<2048x128xf32> to vector<128xf32>
    %11 = vector.shape_cast %10 : vector<128xf32> to vector<1x128xf32>
    %cst_6 = arith.constant 2.048000e+03 : f32
    %12 = vector.broadcast %cst_6 : f32 to vector<1x128xf32>
    %13 = arith.divf %11, %12 : vector<1x128xf32>
    %14 = vector.broadcast %6 : vector<1x128xf32> to vector<2048x128xf32>
    %15 = arith.subf %2, %14 : vector<2048x128xf32>
    %cst_7 = arith.constant 9.99999974E-6 : f32
    %16 = vector.broadcast %cst_7 : f32 to vector<1x128xf32>
    %17 = arith.addf %13, %16 : vector<1x128xf32>
    %18 = math.rsqrt %17 : vector<1x128xf32>
    %19 = vector.broadcast %18 : vector<1x128xf32> to vector<2048x128xf32>
    %20 = arith.mulf %15, %19 : vector<2048x128xf32>
    %c0_8 = arith.constant 0 : index
    %c0_9 = arith.constant 0 : index
    %21 = vector.load %arg3[%c0_8, %c0_9] : memref<1x128xf32, #tpu.memory_space<vmem>>, vector<1x128xf32>
    %22 = vector.broadcast %21 : vector<1x128xf32> to vector<2048x128xf32>
    %23 = arith.mulf %20, %22 : vector<2048x128xf32>
    %c0_10 = arith.constant 0 : index
    %c0_11 = arith.constant 0 : index
    %24 = vector.load %arg4[%c0_10, %c0_11] : memref<1x128xf32, #tpu.memory_space<vmem>>, vector<1x128xf32>
    %25 = vector.broadcast %24 : vector<1x128xf32> to vector<2048x128xf32>
    %26 = arith.addf %23, %25 : vector<2048x128xf32>
    %cst_12 = arith.constant 0.000000e+00 : f32
    %27 = vector.broadcast %cst_12 : f32 to vector<2048x128xf32>
    %28 = arith.maximumf %26, %27 : vector<2048x128xf32>
    %29 = arith.truncf %28 : vector<2048x128xf32> to vector<2048x128xbf16>
    %c0_13 = arith.constant 0 : index
    %c0_14 = arith.constant 0 : index
    %30 = vector.load %arg5[%c0_13, %c0_14] : memref<2048x128xbf16, #tpu.memory_space<vmem>>, vector<2048x128xbf16>
    tpu.vector_store %arg5[%c0_13, %c0_14], %29 {strides = array<i32>} : memref<2048x128xbf16, #tpu.memory_space<vmem>>, vector<2048x128xbf16>,
    return
  }
  func.func @transform_0(%arg0: i32) -> (i32, i32) {
    %c0_i32 = arith.constant 0 : i32
    %c0_i32_0 = arith.constant 0 : i32
    %c0_i32_1 = arith.constant 0 : i32
    return %c0_i32, %c0_i32_0 : i32, i32
  }
  func.func @transform_1(%arg0: i32) -> (i32, i32) {
    %c0_i32 = arith.constant 0 : i32
    %c0_i32_0 = arith.constant 0 : i32
    return %c0_i32, %arg0 : i32, i32
  }
  func.func @transform_2(%arg0: i32) -> (i32, i32) {
    %c0_i32 = arith.constant 0 : i32
    %c0_i32_0 = arith.constant 0 : i32
    return %c0_i32, %arg0 : i32, i32
  }
  func.func @transform_3(%arg0: i32) -> (i32, i32) {
    %c0_i32 = arith.constant 0 : i32
    %c0_i32_0 = arith.constant 0 : i32
    return %c0_i32, %arg0 : i32, i32
  }
  func.func @transform_4(%arg0: i32) -> (i32, i32) {
    %c0_i32 = arith.constant 0 : i32
    %c0_i32_0 = arith.constant 0 : i32
    return %c0_i32, %arg0 : i32, i32
  }
}

</mosaic_0001>

<llo_original>
// kernel: stem.1
$region0: #{stem.1}
  #allocation0 [shape = 'u32[]', space=smem, size = 0x4, offset = 0x4, fixed_abs, tag = 'smem constant byte address 0x4 - core index']
  #allocation1 [shape = 'u32[144,128]{1,0:T(1,128)}', space=vmem, size = 0x12000, scoped, tag = 'internal scratch']
  %s0 = inlined_call_operand.vmem [shape: bf16[2048,147], index: 0, kind: input, shape index: {}]
  %s1 = inlined_call_operand.vmem [shape: bf16[147,128], index: 1, kind: input, shape index: {}]
  %s2 = inlined_call_operand.vmem [shape: f32[1,128], index: 2, kind: input, shape index: {}]
  %s3 = inlined_call_operand.vmem [shape: f32[1,128], index: 3, kind: input, shape index: {}]
  %s4 = inlined_call_operand.vmem [shape: bf16[2048,128], index: 4, kind: output, shape index: {}]
  %s5 = sld [smem:[#allocation0]]
  $region26: #{stem.1} parent=0
    _
  %s7 = ssub.s32 1, %s5
  %s8 = scalar_select 0, %s7, %s5
  // Predicated region
  $region2: #{stem.1} parent=0 // pred_check
    _
  $region3: #{stem.1} parent=0 // pred_check_branch
    %10 = sbr.rel (0) target = $region5
  $region4: #{stem.1} parent=0 // pred_region
    _
  $region5: #{stem.1} parent=0 // pred_fallthru
    _
  // Predicated region
  $region6: #{stem.1} parent=0 // pred_check
    _
  $region7: #{stem.1} parent=0 // pred_check_branch
    %12 = sbr.rel (0) target = $region9
  $region8: #{stem.1} parent=0 // pred_region
    _
  $region9: #{stem.1} parent=0 // pred_fallthru
    _
  // Predicated region
  $region10: #{stem.1} parent=0 // pred_check
    _
  $region11: #{stem.1} parent=0 // pred_check_branch
    %14 = sbr.rel (0) target = $region13
  $region12: #{stem.1} parent=0 // pred_region
    _
  $region13: #{stem.1} parent=0 // pred_fallthru
    _
  // Predicated region
  $region14: #{stem.1} parent=0 // pred_check
    _
  $region15: #{stem.1} parent=0 // pred_check_branch
    %16 = sbr.rel (0) target = $region17
  $region16: #{stem.1} parent=0 // pred_region
    _
  $region17: #{stem.1} parent=0 // pred_fallthru
    _
  %v18 = vld [vmem:[%s0] sm:$0xff]
  %v19 = vld [vmem:[%s0 + $0x8] sm:$0xff]
  %v20 = vld [vmem:[%s0 + $0x10] sm:$0xff]
  %v21 = vld [vmem:[%s0 + $0x18] sm:$0xff]
  %v22 = vld [vmem:[%s0 + $0x20] sm:$0xff]
  %v23 = vld [vmem:[%s0 + $0x28] sm:$0xff]
  %v24 = vld [vmem:[%s0 + $0x30] sm:$0xff]
  %v25 = vld [vmem:[%s0 + $0x38] sm:$0xff]
  %v26 = vld [vmem:[%s0 + $0x40] sm:$0xff]
  %v27 = vld [vmem:[%s0 + $0x48] sm:$0xff]
  %v28 = vld [vmem:[%s0 + $0x50] sm:$0xff]
  %v29 = vld [vmem:[%s0 + $0x58] sm:$0xff]
  %v30 = vld [vmem:[%s0 + $0x60] sm:$0xff]
  %v31 = vld [vmem:[%s0 + $0x68] sm:$0xff]
  %v32 = vld [vmem:[%s0 + $0x70] sm:$0xff]
  %v33 = vld [vmem:[%s0 + $0x78] sm:$0xff]
  %v34 = vld [vmem:[%s0 + $0x80] sm:$0xff]
  %v35 = vld [vmem:[%s0 + $0x88] sm:$0xff]
  %v36 = vld [vmem:[%s0 + $0x90] sm:$0xff]
  %v37 = vld [vmem:[%s0 + $0x98] sm:$0xff]
  %v38 = vld [vmem:[%s0 + $0xa0] sm:$0xff]
  %v39 = vld [vmem:[%s0 + $0xa8] sm:$0xff]
  %v40 = vld [vmem:[%s0 + $0xb0] sm:$0xff]
  %v41 = vld [vmem:[%s0 + $0xb8] sm:$0xff]
  %v42 = vld [vmem:[%s0 + $0xc0] sm:$0xff]
  %v43 = vld [vmem:[%s0 + $0xc8] sm:$0xff]
  %v44 = vld [vmem:[%s0 + $0xd0] sm:$0xff]
  %v45 = vld [vmem:[%s0 + $0xd8] sm:$0xff]
  %v46 = vld [vmem:[%s0 + $0xe0] sm:$0xff]
  %v47 = vld [vmem:[%s0 + $0xe8] sm:$0xff]
  %v48 = vld [vmem:[%s0 + $0xf0] sm:$0xff]
  %v49 = vld [vmem:[%s0 + $0xf8] sm:$0xff]
  %v50 = vld [vmem:[%s0 + $0x100] sm:$0xff]
  %v51 = vld [vmem:[%s0 + $0x108] sm:$0xff]
  %v52 = vld [vmem:[%s0 + $0x110] sm:$0xff]
  %v53 = vld [vmem:[%s0 + $0x118] sm:$0xff]
  %v54 = vld [vmem:[%s0 + $0x120] sm:$0xff]
  %v55 = vld [vmem:[%s0 + $0x128] sm:$0xff]
  %v56 = vld [vmem:[%s0 + $0x130] sm:$0xff]
  %v57 = vld [vmem:[%s0 + $0x138] sm:$0xff]
  %v58 = vld [vmem:[%s0 + $0x140] sm:$0xff]
  %v59 = vld [vmem:[%s0 + $0x148] sm:$0xff]
  %v60 = vld [vmem:[%s0 + $0x150] sm:$0xff]
  %v61 = vld [vmem:[%s0 + $0x158] sm:$0xff]
  %v62 = vld [vmem:[%s0 + $0x160] sm:$0xff]
  %v63 = vld [vmem:[%s0 + $0x168] sm:$0xff]
  %v64 = vld [vmem:[%s0 + $0x170] sm:$0xff]
  %v65 = vld [vmem:[%s0 + $0x178] sm:$0xff]
  %v66 = vld [vmem:[%s0 + $0x180] sm:$0xff]
  %v67 = vld [vmem:[%s0 + $0x188] sm:$0xff]
  %v68 = vld [vmem:[%s0 + $0x190] sm:$0xff]
  %v69 = vld [vmem:[%s0 + $0x198] sm:$0xff]
  %v70 = vld [vmem:[%s0 + $0x1a0] sm:$0xff]
  %v71 = vld [vmem:[%s0 + $0x1a8] sm:$0xff]
  %v72 = vld [vmem:[%s0 + $0x1b0] sm:$0xff]
  %v73 = vld [vmem:[%s0 + $0x1b8] sm:$0xff]
  %v74 = vld [vmem:[%s0 + $0x1c0] sm:$0xff]
  %v75 = vld [vmem:[%s0 + $0x1c8] sm:$0xff]
  %v76 = vld [vmem:[%s0 + $0x1d0] sm:$0xff]
  %v77 = vld [vmem:[%s0 + $0x1d8] sm:$0xff]
  %v78 = vld [vmem:[%s0 + $0x1e0] sm:$0xff]
  %v79 = vld [vmem:[%s0 + $0x1e8] sm:$0xff]
  %v80 = vld [vmem:[%s0 + $0x1f0] sm:$0xff]
  %v81 = vld [vmem:[%s0 + $0x1f8] sm:$0xff]
  %v82 = vld [vmem:[%s0 + $0x200] sm:$0xff]
  %v83 = vld [vmem:[%s0 + $0x208] sm:$0xff]
  %v84 = vld [vmem:[%s0 + $0x210] sm:$0xff]
  %v85 = vld [vmem:[%s0 + $0x218] sm:$0xff]
  %v86 = vld [vmem:[%s0 + $0x220] sm:$0xff]
  %v87 = vld [vmem:[%s0 + $0x228] sm:$0xff]
  %v88 = vld [vmem:[%s0 + $0x230] sm:$0xff]
  %v89 = vld [vmem:[%s0 + $0x238] sm:$0xff]
  %v90 = vld [vmem:[%s0 + $0x240] sm:$0xff]
  %v91 = vld [vmem:[%s0 + $0x248] sm:$0xff]
  %v92 = vld [vmem:[%s0 + $0x250] sm:$0xff]
  %v93 = vld [vmem:[%s0 + $0x258] sm:$0xff]
  %v94 = vld [vmem:[%s0 + $0x260] sm:$0xff]
  %v95 = vld [vmem:[%s0 + $0x268] sm:$0xff]
  %v96 = vld [vmem:[%s0 + $0x270] sm:$0xff]
  %v97 = vld [vmem:[%s0 + $0x278] sm:$0xff]
  %v98 = vld [vmem:[%s0 + $0x280] sm:$0xff]
  %v99 = vld [vmem:[%s0 + $0x288] sm:$0xff]
  %v100 = vld [vmem:[%s0 + $0x290] sm:$0xff]
  %v101 = vld [vmem:[%s0 + $0x298] sm:$0xff]
  %v102 = vld [vmem:[%s0 + $0x2a0] sm:$0xff]
  %v103 = vld [vmem:[%s0 + $0x2a8] sm:$0xff]
  %v104 = vld [vmem:[%s0 + $0x2b0] sm:$0xff]
  %v105 = vld [vmem:[%s0 + $0x2b8] sm:$0xff]
  %v106 = vld [vmem:[%s0 + $0x2c0] sm:$0xff]
  %v107 = vld [vmem:[%s0 + $0x2c8] sm:$0xff]
  %v108 = vld [vmem:[%s0 + $0x2d0] sm:$0xff]
  %v109 = vld [vmem:[%s0 + $0x2d8] sm:$0xff]
  %v110 = vld [vmem:[%s0 + $0x2e0] sm:$0xff]
  %v111 = vld [vmem:[%s0 + $0x2e8] sm:$0xff]
  %v112 = vld [vmem:[%s0 + $0x2f0] sm:$0xff]
  %v113 = vld [vmem:[%s0 + $0x2f8] sm:$0xff]
  %v114 = vld [vmem:[%s0 + $0x300] sm:$0xff]
  %v115 = vld [vmem:[%s0 + $0x308] sm:$0xff]
  %v116 = vld [vmem:[%s0 + $0x310] sm:$0xff]
  %v117 = vld [vmem:[%s0 + $0x318] sm:$0xff]
  %v118 = vld [vmem:[%s0 + $0x320] sm:$0xff]
  %v119 = vld [vmem:[%s0 + $0x328] sm:$0xff]
  %v120 = vld [vmem:[%s0 + $0x330] sm:$0xff]
  %v121 = vld [vmem:[%s0 + $0x338] sm:$0xff]
  %v122 = vld [vmem:[%s0 + $0x340] sm:$0xff]
  %v123 = vld [vmem:[%s0 + $0x348] sm:$0xff]
  %v124 = vld [vmem:[%s0 + $0x350] sm:$0xff]
  %v125 = vld [vmem:[%s0 + $0x358] sm:$0xff]
  %v126 = vld [vmem:[%s0 + $0x360] sm:$0xff]
  %v127 = vld [vmem:[%s0 + $0x368] sm:$0xff]
  %v128 = vld [vmem:[%s0 + $0x370] sm:$0xff]
  %v129 = vld [vmem:[%s0 + $0x378] sm:$0xff]
  %v130 = vld [vmem:[%s0 + $0x380] sm:$0xff]
  %v131 = vld [vmem:[%s0 + $0x388] sm:$0xff]
  %v132 = vld [vmem:[%s0 + $0x390] sm:$0xff]
  %v133 = vld [vmem:[%s0 + $0x398] sm:$0xff]
  %v134 = vld [vmem:[%s0 + $0x3a0] sm:$0xff]
  %v135 = vld [vmem:[%s0 + $0x3a8] sm:$0xff]
  %v136 = vld [vmem:[%s0 + $0x3b0] sm:$0xff]
  %v137 = vld [vmem:[%s0 + $0x3b8] sm:$0xff]
  %v138 = vld [vmem:[%s0 + $0x3c0] sm:$0xff]
  %v139 = vld [vmem:[%s0 + $0x3c8] sm:$0xff]
  %v140 = vld [vmem:[%s0 + $0x3d0] sm:$0xff]
  %v141 = vld [vmem:[%s0 + $0x3d8] sm:$0xff]
  %v142 = vld [vmem:[%s0 + $0x3e0] sm:$0xff]
  %v143 = vld [vmem:[%s0 + $0x3e8] sm:$0xff]
  %v144 = vld [vmem:[%s0 + $0x3f0] sm:$0xff]
  %v145 = vld [vmem:[%s0 + $0x3f8] sm:$0xff]
  %v146 = vld [vmem:[%s0 + $0x400] sm:$0xff]
  %v147 = vld [vmem:[%s0 + $0x408] sm:$0xff]
  %v148 = vld [vmem:[%s0 + $0x410] sm:$0xff]
  %v149 = vld [vmem:[%s0 + $0x418] sm:$0xff]
  %v150 = vld [vmem:[%s0 + $0x420] sm:$0xff]
  %v151 = vld [vmem:[%s0 + $0x428] sm:$0xff]
  %v152 = vld [vmem:[%s0 + $0x430] sm:$0xff]
  %v153 = vld [vmem:[%s0 + $0x438] sm:$0xff]
  %v154 = vld [vmem:[%s0 + $0x440] sm:$0xff]
  %v155 = vld [vmem:[%s0 + $0x448] sm:$0xff]
  %v156 = vld [vmem:[%s0 + $0x450] sm:$0xff]
  %v157 = vld [vmem:[%s0 + $0x458] sm:$0xff]
  %v158 = vld [vmem:[%s0 + $0x460] sm:$0xff]
  %v159 = vld [vmem:[%s0 + $0x468] sm:$0xff]
  %v160 = vld [vmem:[%s0 + $0x470] sm:$0xff]
  %v161 = vld [vmem:[%s0 + $0x478] sm:$0xff]
  %v162 = vld [vmem:[%s0 + $0x480] sm:$0xff]
  %v163 = vld [vmem:[%s0 + $0x488] sm:$0xff]
  %v164 = vld [vmem:[%s0 + $0x490] sm:$0xff]
  %v165 = vld [vmem:[%s0 + $0x498] sm:$0xff]
  %v166 = vld [vmem:[%s0 + $0x4a0] sm:$0xff]
  %v167 = vld [vmem:[%s0 + $0x4a8] sm:$0xff]
  %v168 = vld [vmem:[%s0 + $0x4b0] sm:$0xff]
  %v169 = vld [vmem:[%s0 + $0x4b8] sm:$0xff]
  %v170 = vld [vmem:[%s0 + $0x4c0] sm:$0xff]
  %v171 = vld [vmem:[%s0 + $0x4c8] sm:$0xff]
  %v172 = vld [vmem:[%s0 + $0x4d0] sm:$0xff]
  %v173 = vld [vmem:[%s0 + $0x4d8] sm:$0xff]
  %v174 = vld [vmem:[%s0 + $0x4e0] sm:$0xff]
  %v175 = vld [vmem:[%s0 + $0x4e8] sm:$0xff]
  %v176 = vld [vmem:[%s0 + $0x4f0] sm:$0xff]
  %v177 = vld [vmem:[%s0 + $0x4f8] sm:$0xff]
  %v178 = vld [vmem:[%s0 + $0x500] sm:$0xff]
  %v179 = vld [vmem:[%s0 + $0x508] sm:$0xff]
  %v180 = vld [vmem:[%s0 + $0x510] sm:$0xff]
  %v181 = vld [vmem:[%s0 + $0x518] sm:$0xff]
  %v182 = vld [vmem:[%s0 + $0x520] sm:$0xff]
  %v183 = vld [vmem:[%s0 + $0x528] sm:$0xff]
  %v184 = vld [vmem:[%s0 + $0x530] sm:$0xff]
  %v185 = vld [vmem:[%s0 + $0x538] sm:$0xff]
  %v186 = vld [vmem:[%s0 + $0x540] sm:$0xff]
  %v187 = vld [vmem:[%s0 + $0x548] sm:$0xff]
  %v188 = vld [vmem:[%s0 + $0x550] sm:$0xff]
  %v189 = vld [vmem:[%s0 + $0x558] sm:$0xff]
  %v190 = vld [vmem:[%s0 + $0x560] sm:$0xff]
  %v191 = vld [vmem:[%s0 + $0x568] sm:$0xff]
  %v192 = vld [vmem:[%s0 + $0x570] sm:$0xff]
  %v193 = vld [vmem:[%s0 + $0x578] sm:$0xff]
  %v194 = vld [vmem:[%s0 + $0x580] sm:$0xff]
  %v195 = vld [vmem:[%s0 + $0x588] sm:$0xff]
  %v196 = vld [vmem:[%s0 + $0x590] sm:$0xff]
  %v197 = vld [vmem:[%s0 + $0x598] sm:$0xff]
  %v198 = vld [vmem:[%s0 + $0x5a0] sm:$0xff]
  %v199 = vld [vmem:[%s0 + $0x5a8] sm:$0xff]
  %v200 = vld [vmem:[%s0 + $0x5b0] sm:$0xff]
  %v201 = vld [vmem:[%s0 + $0x5b8] sm:$0xff]
  %v202 = vld [vmem:[%s0 + $0x5c0] sm:$0xff]
  %v203 = vld [vmem:[%s0 + $0x5c8] sm:$0xff]
  %v204 = vld [vmem:[%s0 + $0x5d0] sm:$0xff]
  %v205 = vld [vmem:[%s0 + $0x5d8] sm:$0xff]
  %v206 = vld [vmem:[%s0 + $0x5e0] sm:$0xff]
  %v207 = vld [vmem:[%s0 + $0x5e8] sm:$0xff]
  %v208 = vld [vmem:[%s0 + $0x5f0] sm:$0xff]
  %v209 = vld [vmem:[%s0 + $0x5f8] sm:$0xff]
  %v210 = vld [vmem:[%s0 + $0x600] sm:$0xff]
  %v211 = vld [vmem:[%s0 + $0x608] sm:$0xff]
  %v212 = vld [vmem:[%s0 + $0x610] sm:$0xff]
  %v213 = vld [vmem:[%s0 + $0x618] sm:$0xff]
  %v214 = vld [vmem:[%s0 + $0x620] sm:$0xff]
  %v215 = vld [vmem:[%s0 + $0x628] sm:$0xff]
  %v216 = vld [vmem:[%s0 + $0x630] sm:$0xff]
  %v217 = vld [vmem:[%s0 + $0x638] sm:$0xff]
  %v218 = vld [vmem:[%s0 + $0x640] sm:$0xff]
  %v219 = vld [vmem:[%s0 + $0x648] sm:$0xff]
  %v220 = vld [vmem:[%s0 + $0x650] sm:$0xff]
  %v221 = vld [vmem:[%s0 + $0x658] sm:$0xff]
  %v222 = vld [vmem:[%s0 + $0x660] sm:$0xff]
  %v223 = vld [vmem:[%s0 + $0x668] sm:$0xff]
  %v224 = vld [vmem:[%s0 + $0x670] sm:$0xff]
  %v225 = vld [vmem:[%s0 + $0x678] sm:$0xff]
  %v226 = vld [vmem:[%s0 + $0x680] sm:$0xff]
  %v227 = vld [vmem:[%s0 + $0x688] sm:$0xff]
  %v228 = vld [vmem:[%s0 + $0x690] sm:$0xff]
  %v229 = vld [vmem:[%s0 + $0x698] sm:$0xff]
  %v230 = vld [vmem:[%s0 + $0x6a0] sm:$0xff]
  %v231 = vld [vmem:[%s0 + $0x6a8] sm:$0xff]
  %v232 = vld [vmem:[%s0 + $0x6b0] sm:$0xff]
  %v233 = vld [vmem:[%s0 + $0x6b8] sm:$0xff]
  %v234 = vld [vmem:[%s0 + $0x6c0] sm:$0xff]
  %v235 = vld [vmem:[%s0 + $0x6c8] sm:$0xff]
  %v236 = vld [vmem:[%s0 + $0x6d0] sm:$0xff]
  %v237 = vld [vmem:[%s0 + $0x6d8] sm:$0xff]
  %v238 = vld [vmem:[%s0 + $0x6e0] sm:$0xff]
  %v239 = vld [vmem:[%s0 + $0x6e8] sm:$0xff]
  %v240 = vld [vmem:[%s0 + $0x6f0] sm:$0xff]
  %v241 = vld [vmem:[%s0 + $0x6f8] sm:$0xff]
  %v242 = vld [vmem:[%s0 + $0x700] sm:$0xff]
  %v243 = vld [vmem:[%s0 + $0x708] sm:$0xff]
  %v244 = vld [vmem:[%s0 + $0x710] sm:$0xff]
  %v245 = vld [vmem:[%s0 + $0x718] sm:$0xff]
  %v246 = vld [vmem:[%s0 + $0x720] sm:$0xff]
  %v247 = vld [vmem:[%s0 + $0x728] sm:$0xff]
  %v248 = vld [vmem:[%s0 + $0x730] sm:$0xff]
  %v249 = vld [vmem:[%s0 + $0x738] sm:$0xff]
  %v250 = vld [vmem:[%s0 + $0x740] sm:$0xff]
  %v251 = vld [vmem:[%s0 + $0x748] sm:$0xff]
  %v252 = vld [vmem:[%s0 + $0x750] sm:$0xff]
  %v253 = vld [vmem:[%s0 + $0x758] sm:$0xff]
  %v254 = vld [vmem:[%s0 + $0x760] sm:$0xff]
  %v255 = vld [vmem:[%s0 + $0x768] sm:$0xff]
  %v256 = vld [vmem:[%s0 + $0x770] sm:$0xff]
  %v257 = vld [vmem:[%s0 + $0x778] sm:$0xff]
  %v258 = vld [vmem:[%s0 + $0x780] sm:$0xff]
  %v259 = vld [vmem:[%s0 + $0x788] sm:$0xff]
  %v260 = vld [vmem:[%s0 + $0x790] sm:$0xff]
  %v261 = vld [vmem:[%s0 + $0x798] sm:$0xff]
  %v262 = vld [vmem:[%s0 + $0x7a0] sm:$0xff]
  %v263 = vld [vmem:[%s0 + $0x7a8] sm:$0xff]
  %v264 = vld [vmem:[%s0 + $0x7b0] sm:$0xff]
  %v265 = vld [vmem:[%s0 + $0x7b8] sm:$0xff]
  %v266 = vld [vmem:[%s0 + $0x7c0] sm:$0xff]
  %v267 = vld [vmem:[%s0 + $0x7c8] sm:$0xff]
  %v268 = vld [vmem:[%s0 + $0x7d0] sm:$0xff]
  %v269 = vld [vmem:[%s0 + $0x7d8] sm:$0xff]
  %v270 = vld [vmem:[%s0 + $0x7e0] sm:$0xff]
  %v271 = vld [vmem:[%s0 + $0x7e8] sm:$0xff]
  %v272 = vld [vmem:[%s0 + $0x7f0] sm:$0xff]
  %v273 = vld [vmem:[%s0 + $0x7f8] sm:$0xff]
  %v274 = vld [vmem:[%s1] sm:$0xf]
  %v275 = vld [vmem:[%s1 + $0x4] sm:$0xf]
  %v276 = vld [vmem:[%s1 + $0x8] sm:$0xf]
  %v277 = vld [vmem:[%s1 + $0xc] sm:$0xf]
  %v278 = vld [vmem:[%s1 + $0x10] sm:$0xf]
  %v279 = vld [vmem:[%s1 + $0x14] sm:$0xf]
  %v280 = vld [vmem:[%s1 + $0x18] sm:$0xf]
  %v281 = vld [vmem:[%s1 + $0x1c] sm:$0xf]
  %v282 = vld [vmem:[%s1 + $0x20] sm:$0xf]
  %v283 = vld [vmem:[%s1 + $0x24] sm:$0xf]
  %v284 = vld [vmem:[%s1 + $0x28] sm:$0xf]
  %v285 = vld [vmem:[%s1 + $0x2c] sm:$0xf]
  %v286 = vld [vmem:[%s1 + $0x30] sm:$0xf]
  %v287 = vld [vmem:[%s1 + $0x34] sm:$0xf]
  %v288 = vld [vmem:[%s1 + $0x38] sm:$0xf]
  %v289 = vld [vmem:[%s1 + $0x3c] sm:$0xf]
  %v290 = vld [vmem:[%s1 + $0x40] sm:$0xf]
  %v291 = vld [vmem:[%s1 + $0x44] sm:$0xf]
  %v292 = vld [vmem:[%s1 + $0x48] sm:$0x3]
  %v549 = vunpack.c.l.b16 %v18
  %v550 = vunpack.c.h.b16 %v18
  %v551 = vunpack.c.l.b16 %v19
  %v552 = vunpack.c.h.b16 %v19
  %v553 = vunpack.c.l.b16 %v20
  %v554 = vunpack.c.h.b16 %v20
  %v555 = vunpack.c.l.b16 %v21
  %v556 = vunpack.c.h.b16 %v21
  %v557 = vunpack.c.l.b16 %v22
  %v558 = vunpack.c.h.b16 %v22
  %v559 = vunpack.c.l.b16 %v23
  %v560 = vunpack.c.h.b16 %v23
  %v561 = vunpack.c.l.b16 %v24
  %v562 = vunpack.c.h.b16 %v24
  %v563 = vunpack.c.l.b16 %v25
  %v564 = vunpack.c.h.b16 %v25
  %v565 = vunpack.c.l.b16 %v26
  %v566 = vunpack.c.h.b16 %v26
  %v567 = vunpack.c.l.b16 %v27
  %v568 = vunpack.c.h.b16 %v27
  %v569 = vunpack.c.l.b16 %v28
  %v570 = vunpack.c.h.b16 %v28
  %v571 = vunpack.c.l.b16 %v29
  %v572 = vunpack.c.h.b16 %v29
  %v573 = vunpack.c.l.b16 %v30
  %v574 = vunpack.c.h.b16 %v30
  %v575 = vunpack.c.l.b16 %v31
  %v576 = vunpack.c.h.b16 %v31
  %v577 = vunpack.c.l.b16 %v32
  %v578 = vunpack.c.h.b16 %v32
  %v579 = vunpack.c.l.b16 %v33
  %v580 = vunpack.c.h.b16 %v33
  %v581 = vunpack.c.l.b16 %v34
  %v582 = vunpack.c.h.b16 %v34
  %v583 = vunpack.c.l.b16 %v35
  %v584 = vunpack.c.h.b16 %v35
  %v585 = vunpack.c.l.b16 %v36
  %v586 = vunpack.c.h.b16 %v36
  %v587 = vunpack.c.l.b16 %v37
  %v588 = vunpack.c.h.b16 %v37
  %v589 = vunpack.c.l.b16 %v38
  %v590 = vunpack.c.h.b16 %v38
  %v591 = vunpack.c.l.b16 %v39
  %v592 = vunpack.c.h.b16 %v39
  %v593 = vunpack.c.l.b16 %v40
  %v594 = vunpack.c.h.b16 %v40
  %v595 = vunpack.c.l.b16 %v41
  %v596 = vunpack.c.h.b16 %v41
  %v597 = vunpack.c.l.b16 %v42
  %v598 = vunpack.c.h.b16 %v42
  %v599 = vunpack.c.l.b16 %v43
  %v600 = vunpack.c.h.b16 %v43
  %v601 = vunpack.c.l.b16 %v44
  %v602 = vunpack.c.h.b16 %v44
  %v603 = vunpack.c.l.b16 %v45
  %v604 = vunpack.c.h.b16 %v45
  %v605 = vunpack.c.l.b16 %v46
  %v606 = vunpack.c.h.b16 %v46
  %v607 = vunpack.c.l.b16 %v47
  %v608 = vunpack.c.h.b16 %v47
  %v609 = vunpack.c.l.b16 %v48
  %v610 = vunpack.c.h.b16 %v48
  %v611 = vunpack.c.l.b16 %v49
  %v612 = vunpack.c.h.b16 %v49
  %v613 = vunpack.c.l.b16 %v50
  %v614 = vunpack.c.h.b16 %v50
  %v615 = vunpack.c.l.b16 %v51
  %v616 = vunpack.c.h.b16 %v51
  %v617 = vunpack.c.l.b16 %v52
  %v618 = vunpack.c.h.b16 %v52
  %v619 = vunpack.c.l.b16 %v53
  %v620 = vunpack.c.h.b16 %v53
  %v621 = vunpack.c.l.b16 %v54
  %v622 = vunpack.c.h.b16 %v54
  %v623 = vunpack.c.l.b16 %v55
  %v624 = vunpack.c.h.b16 %v55
  %v625 = vunpack.c.l.b16 %v56
  %v626 = vunpack.c.h.b16 %v56
  %v627 = vunpack.c.l.b16 %v57
  %v628 = vunpack.c.h.b16 %v57
  %v629 = vunpack.c.l.b16 %v58
  %v630 = vunpack.c.h.b16 %v58
  %v631 = vunpack.c.l.b16 %v59
  %v632 = vunpack.c.h.b16 %v59
  %v633 = vunpack.c.l.b16 %v60
  %v634 = vunpack.c.h.b16 %v60
  %v635 = vunpack.c.l.b16 %v61
  %v636 = vunpack.c.h.b16 %v61
  %v637 = vunpack.c.l.b16 %v62
  %v638 = vunpack.c.h.b16 %v62
  %v639 = vunpack.c.l.b16 %v63
  %v640 = vunpack.c.h.b16 %v63
  %v641 = vunpack.c.l.b16 %v64
  %v642 = vunpack.c.h.b16 %v64
  %v643 = vunpack.c.l.b16 %v65
  %v644 = vunpack.c.h.b16 %v65
  %v645 = vunpack.c.l.b16 %v66
  %v646 = vunpack.c.h.b16 %v66
  %v647 = vunpack.c.l.b16 %v67
  %v648 = vunpack.c.h.b16 %v67
  %v649 = vunpack.c.l.b16 %v68
  %v650 = vunpack.c.h.b16 %v68
  %v651 = vunpack.c.l.b16 %v69
  %v652 = vunpack.c.h.b16 %v69
  %v653 = vunpack.c.l.b16 %v70
  %v654 = vunpack.c.h.b16 %v70
  %v655 = vunpack.c.l.b16 %v71
  %v656 = vunpack.c.h.b16 %v71
  %v657 = vunpack.c.l.b16 %v72
  %v658 = vunpack.c.h.b16 %v72
  %v659 = vunpack.c.l.b16 %v73
  %v660 = vunpack.c.h.b16 %v73
  %v661 = vunpack.c.l.b16 %v74
  %v662 = vunpack.c.h.b16 %v74
  %v663 = vunpack.c.l.b16 %v75
  %v664 = vunpack.c.h.b16 %v75
  %v665 = vunpack.c.l.b16 %v76
  %v666 = vunpack.c.h.b16 %v76
  %v667 = vunpack.c.l.b16 %v77
  %v668 = vunpack.c.h.b16 %v77
  %v669 = vunpack.c.l.b16 %v78
  %v670 = vunpack.c.h.b16 %v78
  %v671 = vunpack.c.l.b16 %v79
  %v672 = vunpack.c.h.b16 %v79
  %v673 = vunpack.c.l.b16 %v80
  %v674 = vunpack.c.h.b16 %v80
  %v675 = vunpack.c.l.b16 %v81
  %v676 = vunpack.c.h.b16 %v81
  %v677 = vunpack.c.l.b16 %v82
  %v678 = vunpack.c.h.b16 %v82
  %v679 = vunpack.c.l.b16 %v83
  %v680 = vunpack.c.h.b16 %v83
  %v681 = vunpack.c.l.b16 %v84
  %v682 = vunpack.c.h.b16 %v84
  %v683 = vunpack.c.l.b16 %v85
  %v684 = vunpack.c.h.b16 %v85
  %v685 = vunpack.c.l.b16 %v86
  %v686 = vunpack.c.h.b16 %v86
  %v687 = vunpack.c.l.b16 %v87
  %v688 = vunpack.c.h.b16 %v87
  %v689 = vunpack.c.l.b16 %v88
  %v690 = vunpack.c.h.b16 %v88
  %v691 = vunpack.c.l.b16 %v89
  %v692 = vunpack.c.h.b16 %v89
  %v693 = vunpack.c.l.b16 %v90
  %v694 = vunpack.c.h.b16 %v90
  %v695 = vunpack.c.l.b16 %v91
  %v696 = vunpack.c.h.b16 %v91
  %v697 = vunpack.c.l.b16 %v92
  %v698 = vunpack.c.h.b16 %v92
  %v699 = vunpack.c.l.b16 %v93
  %v700 = vunpack.c.h.b16 %v93
  %v701 = vunpack.c.l.b16 %v94
  %v702 = vunpack.c.h.b16 %v94
  %v703 = vunpack.c.l.b16 %v95
  %v704 = vunpack.c.h.b16 %v95
  %v705 = vunpack.c.l.b16 %v96
  %v706 = vunpack.c.h.b16 %v96
  %v707 = vunpack.c.l.b16 %v97
  %v708 = vunpack.c.h.b16 %v97
  %v709 = vunpack.c.l.b16 %v98
  %v710 = vunpack.c.h.b16 %v98
  %v711 = vunpack.c.l.b16 %v99
  %v712 = vunpack.c.h.b16 %v99
  %v713 = vunpack.c.l.b16 %v100
  %v714 = vunpack.c.h.b16 %v100
  %v715 = vunpack.c.l.b16 %v101
  %v716 = vunpack.c.h.b16 %v101
  %v717 = vunpack.c.l.b16 %v102
  %v718 = vunpack.c.h.b16 %v102
  %v719 = vunpack.c.l.b16 %v103
  %v720 = vunpack.c.h.b16 %v103
  %v721 = vunpack.c.l.b16 %v104
  %v722 = vunpack.c.h.b16 %v104
  %v723 = vunpack.c.l.b16 %v105
  %v724 = vunpack.c.h.b16 %v105
  %v725 = vunpack.c.l.b16 %v106
  %v726 = vunpack.c.h.b16 %v106
  %v727 = vunpack.c.l.b16 %v107
  %v728 = vunpack.c.h.b16 %v107
  %v729 = vunpack.c.l.b16 %v108
  %v730 = vunpack.c.h.b16 %v108
  %v731 = vunpack.c.l.b16 %v109
  %v732 = vunpack.c.h.b16 %v109
  %v733 = vunpack.c.l.b16 %v110
  %v734 = vunpack.c.h.b16 %v110
  %v735 = vunpack.c.l.b16 %v111
  %v736 = vunpack.c.h.b16 %v111
  %v737 = vunpack.c.l.b16 %v112
  %v738 = vunpack.c.h.b16 %v112
  %v739 = vunpack.c.l.b16 %v113
  %v740 = vunpack.c.h.b16 %v113
  %v741 = vunpack.c.l.b16 %v114
  %v742 = vunpack.c.h.b16 %v114
  %v743 = vunpack.c.l.b16 %v115
  %v744 = vunpack.c.h.b16 %v115
  %v745 = vunpack.c.l.b16 %v116
  %v746 = vunpack.c.h.b16 %v116
  %v747 = vunpack.c.l.b16 %v117
  %v748 = vunpack.c.h.b16 %v117
  %v749 = vunpack.c.l.b16 %v118
  %v750 = vunpack.c.h.b16 %v118
  %v751 = vunpack.c.l.b16 %v119
  %v752 = vunpack.c.h.b16 %v119
  %v753 = vunpack.c.l.b16 %v120
  %v754 = vunpack.c.h.b16 %v120
  %v755 = vunpack.c.l.b16 %v121
  %v756 = vunpack.c.h.b16 %v121
  %v757 = vunpack.c.l.b16 %v122
  %v758 = vunpack.c.h.b16 %v122
  %v759 = vunpack.c.l.b16 %v123
  %v760 = vunpack.c.h.b16 %v123
  %v761 = vunpack.c.l.b16 %v124
  %v762 = vunpack.c.h.b16 %v124
  %v763 = vunpack.c.l.b16 %v125
  %v764 = vunpack.c.h.b16 %v125
  %v765 = vunpack.c.l.b16 %v126
  %v766 = vunpack.c.h.b16 %v126
  %v767 = vunpack.c.l.b16 %v127
  %v768 = vunpack.c.h.b16 %v127
  %v769 = vunpack.c.l.b16 %v128
  %v770 = vunpack.c.h.b16 %v128
  %v771 = vunpack.c.l.b16 %v129
  %v772 = vunpack.c.h.b16 %v129
  %v773 = vunpack.c.l.b16 %v130
  %v774 = vunpack.c.h.b16 %v130
  %v775 = vunpack.c.l.b16 %v131
  %v776 = vunpack.c.h.b16 %v131
  %v777 = vunpack.c.l.b16 %v132
  %v778 = vunpack.c.h.b16 %v132
  %v779 = vunpack.c.l.b16 %v133
  %v780 = vunpack.c.h.b16 %v133
  %v781 = vunpack.c.l.b16 %v134
  %v782 = vunpack.c.h.b16 %v134
  %v783 = vunpack.c.l.b16 %v135
  %v784 = vunpack.c.h.b16 %v135
  %v785 = vunpack.c.l.b16 %v136
  %v786 = vunpack.c.h.b16 %v136
  %v787 = vunpack.c.l.b16 %v137
  %v788 = vunpack.c.h.b16 %v137
  %v789 = vunpack.c.l.b16 %v138
  %v790 = vunpack.c.h.b16 %v138
  %v791 = vunpack.c.l.b16 %v139
  %v792 = vunpack.c.h.b16 %v139
  %v793 = vunpack.c.l.b16 %v140
  %v794 = vunpack.c.h.b16 %v140
  %v795 = vunpack.c.l.b16 %v141
  %v796 = vunpack.c.h.b16 %v141
  %v797 = vunpack.c.l.b16 %v142
  %v798 = vunpack.c.h.b16 %v142
  %v799 = vunpack.c.l.b16 %v143
  %v800 = vunpack.c.h.b16 %v143
  %v801 = vunpack.c.l.b16 %v144
  %v802 = vunpack.c.h.b16 %v144
  %v803 = vunpack.c.l.b16 %v145
  %v804 = vunpack.c.h.b16 %v145
  %v805 = vunpack.c.l.b16 %v146
  %v806 = vunpack.c.h.b16 %v146
  %v807 = vunpack.c.l.b16 %v147
  %v808 = vunpack.c.h.b16 %v147
  %v809 = vunpack.c.l.b16 %v148
  %v810 = vunpack.c.h.b16 %v148
  %v811 = vunpack.c.l.b16 %v149
  %v812 = vunpack.c.h.b16 %v149
  %v813 = vunpack.c.l.b16 %v150
  %v814 = vunpack.c.h.b16 %v150
  %v815 = vunpack.c.l.b16 %v151
  %v816 = vunpack.c.h.b16 %v151
  %v817 = vunpack.c.l.b16 %v152
  %v818 = vunpack.c.h.b16 %v152
  %v819 = vunpack.c.l.b16 %v153
  %v820 = vunpack.c.h.b16 %v153
  %v821 = vunpack.c.l.b16 %v154
  %v822 = vunpack.c.h.b16 %v154
  %v823 = vunpack.c.l.b16 %v155
  %v824 = vunpack.c.h.b16 %v155
  %v825 = vunpack.c.l.b16 %v156
  %v826 = vunpack.c.h.b16 %v156
  %v827 = vunpack.c.l.b16 %v157
  %v828 = vunpack.c.h.b16 %v157
  %v829 = vunpack.c.l.b16 %v158
  %v830 = vunpack.c.h.b16 %v158
  %v831 = vunpack.c.l.b16 %v159
  %v832 = vunpack.c.h.b16 %v159
  %v833 = vunpack.c.l.b16 %v160
  %v834 = vunpack.c.h.b16 %v160
  %v835 = vunpack.c.l.b16 %v161
  %v836 = vunpack.c.h.b16 %v161
  %v837 = vunpack.c.l.b16 %v162
  %v838 = vunpack.c.h.b16 %v162
  %v839 = vunpack.c.l.b16 %v163
  %v840 = vunpack.c.h.b16 %v163
  %v841 = vunpack.c.l.b16 %v164
  %v842 = vunpack.c.h.b16 %v164
  %v843 = vunpack.c.l.b16 %v165
  %v844 = vunpack.c.h.b16 %v165
  %v845 = vunpack.c.l.b16 %v166
  %v846 = vunpack.c.h.b16 %v166
  %v847 = vunpack.c.l.b16 %v167
  %v848 = vunpack.c.h.b16 %v167
  %v849 = vunpack.c.l.b16 %v168
  %v850 = vunpack.c.h.b16 %v168
  %v851 = vunpack.c.l.b16 %v169
  %v852 = vunpack.c.h.b16 %v169
  %v853 = vunpack.c.l.b16 %v170
  %v854 = vunpack.c.h.b16 %v170
  %v855 = vunpack.c.l.b16 %v171
  %v856 = vunpack.c.h.b16 %v171
  %v857 = vunpack.c.l.b16 %v172
  %v858 = vunpack.c.h.b16 %v172
  %v859 = vunpack.c.l.b16 %v173
  %v860 = vunpack.c.h.b16 %v173
  %v861 = vunpack.c.l.b16 %v174
  %v862 = vunpack.c.h.b16 %v174
  %v863 = vunpack.c.l.b16 %v175
  %v864 = vunpack.c.h.b16 %v175
  %v865 = vunpack.c.l.b16 %v176
  %v866 = vunpack.c.h.b16 %v176
  %v867 = vunpack.c.l.b16 %v177
  %v868 = vunpack.c.h.b16 %v177
  %v869 = vunpack.c.l.b16 %v178
  %v870 = vunpack.c.h.b16 %v178
  %v871 = vunpack.c.l.b16 %v179
  %v872 = vunpack.c.h.b16 %v179
  %v873 = vunpack.c.l.b16 %v180
  %v874 = vunpack.c.h.b16 %v180
  %v875 = vunpack.c.l.b16 %v181
  %v876 = vunpack.c.h.b16 %v181
  %v877 = vunpack.c.l.b16 %v182
  %v878 = vunpack.c.h.b16 %v182
  %v879 = vunpack.c.l.b16 %v183
  %v880 = vunpack.c.h.b16 %v183
  %v881 = vunpack.c.l.b16 %v184
  %v882 = vunpack.c.h.b16 %v184
  %v883 = vunpack.c.l.b16 %v185
  %v884 = vunpack.c.h.b16 %v185
  %v885 = vunpack.c.l.b16 %v186
  %v886 = vunpack.c.h.b16 %v186
  %v887 = vunpack.c.l.b16 %v187
  %v888 = vunpack.c.h.b16 %v187
  %v889 = vunpack.c.l.b16 %v188
  %v890 = vunpack.c.h.b16 %v188
  %v891 = vunpack.c.l.b16 %v189
  %v892 = vunpack.c.h.b16 %v189
  %v893 = vunpack.c.l.b16 %v190
  %v894 = vunpack.c.h.b16 %v190
  %v895 = vunpack.c.l.b16 %v191
  %v896 = vunpack.c.h.b16 %v191
  %v897 = vunpack.c.l.b16 %v192
  %v898 = vunpack.c.h.b16 %v192
  %v899 = vunpack.c.l.b16 %v193
  %v900 = vunpack.c.h.b16 %v193
  %v901 = vunpack.c.l.b16 %v194
  %v902 = vunpack.c.h.b16 %v194
  %v903 = vunpack.c.l.b16 %v195
  %v904 = vunpack.c.h.b16 %v195
  %v905 = vunpack.c.l.b16 %v196
  %v906 = vunpack.c.h.b16 %v196
  %v907 = vunpack.c.l.b16 %v197
  %v908 = vunpack.c.h.b16 %v197
  %v909 = vunpack.c.l.b16 %v198
  %v910 = vunpack.c.h.b16 %v198
  %v911 = vunpack.c.l.b16 %v199
  %v912 = vunpack.c.h.b16 %v199
  %v913 = vunpack.c.l.b16 %v200
  %v914 = vunpack.c.h.b16 %v200
  %v915 = vunpack.c.l.b16 %v201
  %v916 = vunpack.c.h.b16 %v201
  %v917 = vunpack.c.l.b16 %v202
  %v918 = vunpack.c.h.b16 %v202
  %v919 = vunpack.c.l.b16 %v203
  %v920 = vunpack.c.h.b16 %v203
  %v921 = vunpack.c.l.b16 %v204
  %v922 = vunpack.c.h.b16 %v204
  %v923 = vunpack.c.l.b16 %v205
  %v924 = vunpack.c.h.b16 %v205
  %v925 = vunpack.c.l.b16 %v206
  %v926 = vunpack.c.h.b16 %v206
  %v927 = vunpack.c.l.b16 %v207
  %v928 = vunpack.c.h.b16 %v207
  %v929 = vunpack.c.l.b16 %v208
  %v930 = vunpack.c.h.b16 %v208
  %v931 = vunpack.c.l.b16 %v209
  %v932 = vunpack.c.h.b16 %v209
  %v933 = vunpack.c.l.b16 %v210
  %v934 = vunpack.c.h.b16 %v210
  %v935 = vunpack.c.l.b16 %v211
  %v936 = vunpack.c.h.b16 %v211
  %v937 = vunpack.c.l.b16 %v212
  %v938 = vunpack.c.h.b16 %v212
  %v939 = vunpack.c.l.b16 %v213
  %v940 = vunpack.c.h.b16 %v213
  %v941 = vunpack.c.l.b16 %v214
  %v942 = vunpack.c.h.b16 %v214
  %v943 = vunpack.c.l.b16 %v215
  %v944 = vunpack.c.h.b16 %v215
  %v945 = vunpack.c.l.b16 %v216
  %v946 = vunpack.c.h.b16 %v216
  %v947 = vunpack.c.l.b16 %v217
  %v948 = vunpack.c.h.b16 %v217
  %v949 = vunpack.c.l.b16 %v218
  %v950 = vunpack.c.h.b16 %v218
  %v951 = vunpack.c.l.b16 %v219
  %v952 = vunpack.c.h.b16 %v219
  %v953 = vunpack.c.l.b16 %v220
  %v954 = vunpack.c.h.b16 %v220
  %v955 = vunpack.c.l.b16 %v221
  %v956 = vunpack.c.h.b16 %v221
  %v957 = vunpack.c.l.b16 %v222
  %v958 = vunpack.c.h.b16 %v222
  %v959 = vunpack.c.l.b16 %v223
  %v960 = vunpack.c.h.b16 %v223
  %v961 = vunpack.c.l.b16 %v224
  %v962 = vunpack.c.h.b16 %v224
  %v963 = vunpack.c.l.b16 %v225
  %v964 = vunpack.c.h.b16 %v225
  %v965 = vunpack.c.l.b16 %v226
  %v966 = vunpack.c.h.b16 %v226
  %v967 = vunpack.c.l.b16 %v227
  %v968 = vunpack.c.h.b16 %v227
  %v969 = vunpack.c.l.b16 %v228
  %v970 = vunpack.c.h.b16 %v228
  %v971 = vunpack.c.l.b16 %v229
  %v972 = vunpack.c.h.b16 %v229
  %v973 = vunpack.c.l.b16 %v230
  %v974 = vunpack.c.h.b16 %v230
  %v975 = vunpack.c.l.b16 %v231
  %v976 = vunpack.c.h.b16 %v231
  %v977 = vunpack.c.l.b16 %v232
  %v978 = vunpack.c.h.b16 %v232
  %v979 = vunpack.c.l.b16 %v233
  %v980 = vunpack.c.h.b16 %v233
  %v981 = vunpack.c.l.b16 %v234
  %v982 = vunpack.c.h.b16 %v234
  %v983 = vunpack.c.l.b16 %v235
  %v984 = vunpack.c.h.b16 %v235
  %v985 = vunpack.c.l.b16 %v236
  %v986 = vunpack.c.h.b16 %v236
  %v987 = vunpack.c.l.b16 %v237
  %v988 = vunpack.c.h.b16 %v237
  %v989 = vunpack.c.l.b16 %v238
  %v990 = vunpack.c.h.b16 %v238
  %v991 = vunpack.c.l.b16 %v239
  %v992 = vunpack.c.h.b16 %v239
  %v993 = vunpack.c.l.b16 %v240
  %v994 = vunpack.c.h.b16 %v240
  %v995 = vunpack.c.l.b16 %v241
  %v996 = vunpack.c.h.b16 %v241
  %v997 = vunpack.c.l.b16 %v242
  %v998 = vunpack.c.h.b16 %v242
  %v999 = vunpack.c.l.b16 %v243
  %v1000 = vunpack.c.h.b16 %v243
  %v1001 = vunpack.c.l.b16 %v244
  %v1002 = vunpack.c.h.b16 %v244
  %v1003 = vunpack.c.l.b16 %v245
  %v1004 = vunpack.c.h.b16 %v245
  %v1005 = vunpack.c.l.b16 %v246
  %v1006 = vunpack.c.h.b16 %v246
  %v1007 = vunpack.c.l.b16 %v247
  %v1008 = vunpack.c.h.b16 %v247
  %v1009 = vunpack.c.l.b16 %v248
  %v1010 = vunpack.c.h.b16 %v248
  %v1011 = vunpack.c.l.b16 %v249
  %v1012 = vunpack.c.h.b16 %v249
  %v1013 = vunpack.c.l.b16 %v250
  %v1014 = vunpack.c.h.b16 %v250
  %v1015 = vunpack.c.l.b16 %v251
  %v1016 = vunpack.c.h.b16 %v251
  %v1017 = vunpack.c.l.b16 %v252
  %v1018 = vunpack.c.h.b16 %v252
  %v1019 = vunpack.c.l.b16 %v253
  %v1020 = vunpack.c.h.b16 %v253
  %v1021 = vunpack.c.l.b16 %v254
  %v1022 = vunpack.c.h.b16 %v254
  %v1023 = vunpack.c.l.b16 %v255
  %v1024 = vunpack.c.h.b16 %v255
  %v1025 = vunpack.c.l.b16 %v256
  %v1026 = vunpack.c.h.b16 %v256
  %v1027 = vunpack.c.l.b16 %v257
  %v1028 = vunpack.c.h.b16 %v257
  %v1029 = vunpack.c.l.b16 %v258
  %v1030 = vunpack.c.h.b16 %v258
  %v1031 = vunpack.c.l.b16 %v259
  %v1032 = vunpack.c.h.b16 %v259
  %v1033 = vunpack.c.l.b16 %v260
  %v1034 = vunpack.c.h.b16 %v260
  %v1035 = vunpack.c.l.b16 %v261
  %v1036 = vunpack.c.h.b16 %v261
  %v1037 = vunpack.c.l.b16 %v262
  %v1038 = vunpack.c.h.b16 %v262
  %v1039 = vunpack.c.l.b16 %v263
  %v1040 = vunpack.c.h.b16 %v263
  %v1041 = vunpack.c.l.b16 %v264
  %v1042 = vunpack.c.h.b16 %v264
  %v1043 = vunpack.c.l.b16 %v265
  %v1044 = vunpack.c.h.b16 %v265
  %v1045 = vunpack.c.l.b16 %v266
  %v1046 = vunpack.c.h.b16 %v266
  %v1047 = vunpack.c.l.b16 %v267
  %v1048 = vunpack.c.h.b16 %v267
  %v1049 = vunpack.c.l.b16 %v268
  %v1050 = vunpack.c.h.b16 %v268
  %v1051 = vunpack.c.l.b16 %v269
  %v1052 = vunpack.c.h.b16 %v269
  %v1053 = vunpack.c.l.b16 %v270
  %v1054 = vunpack.c.h.b16 %v270
  %v1055 = vunpack.c.l.b16 %v271
  %v1056 = vunpack.c.h.b16 %v271
  %v1057 = vunpack.c.l.b16 %v272
  %v1058 = vunpack.c.h.b16 %v272
  %v1059 = vunpack.c.l.b16 %v273
  %v1060 = vunpack.c.h.b16 %v273
  %v1061 = vpack.c.b16 %v551, %v549
  %v1062 = vpack.c.b16 %v552, %v550
  %v1063 = vpack.c.b16 %v555, %v553
  %v1064 = vpack.c.b16 %v556, %v554
  %v1065 = vpack.c.b16 %v559, %v557
  %v1066 = vpack.c.b16 %v560, %v558
  %v1067 = vpack.c.b16 %v563, %v561
  %v1068 = vpack.c.b16 %v564, %v562
  %v1069 = vpack.c.b16 %v567, %v565
  %v1070 = vpack.c.b16 %v568, %v566
  %v1071 = vpack.c.b16 %v571, %v569
  %v1072 = vpack.c.b16 %v572, %v570
  %v1073 = vpack.c.b16 %v575, %v573
  %v1074 = vpack.c.b16 %v576, %v574
  %v1075 = vpack.c.b16 %v579, %v577
  %v1076 = vpack.c.b16 %v580, %v578
  %v1077 = vpack.c.b16 %v583, %v581
  %v1078 = vpack.c.b16 %v584, %v582
  %v1079 = vpack.c.b16 %v587, %v585
  %v1080 = vpack.c.b16 %v588, %v586
  %v1081 = vpack.c.b16 %v591, %v589
  %v1082 = vpack.c.b16 %v592, %v590
  %v1083 = vpack.c.b16 %v595, %v593
  %v1084 = vpack.c.b16 %v596, %v594
  %v1085 = vpack.c.b16 %v599, %v597
  %v1086 = vpack.c.b16 %v600, %v598
  %v1087 = vpack.c.b16 %v603, %v601
  %v1088 = vpack.c.b16 %v604, %v602
  %v1089 = vpack.c.b16 %v607, %v605
  %v1090 = vpack.c.b16 %v608, %v606
  %v1091 = vpack.c.b16 %v611, %v609
  %v1092 = vpack.c.b16 %v612, %v610
  %v1093 = vpack.c.b16 %v615, %v613
  %v1094 = vpack.c.b16 %v616, %v614
  %v1095 = vpack.c.b16 %v619, %v617
  %v1096 = vpack.c.b16 %v620, %v618
  %v1097 = vpack.c.b16 %v623, %v621
  %v1098 = vpack.c.b16 %v624, %v622
  %v1099 = vpack.c.b16 %v627, %v625
  %v1100 = vpack.c.b16 %v628, %v626
  %v1101 = vpack.c.b16 %v631, %v629
  %v1102 = vpack.c.b16 %v632, %v630
  %v1103 = vpack.c.b16 %v635, %v633
  %v1104 = vpack.c.b16 %v636, %v634
  %v1105 = vpack.c.b16 %v639, %v637
  %v1106 = vpack.c.b16 %v640, %v638
  %v1107 = vpack.c.b16 %v643, %v641
  %v1108 = vpack.c.b16 %v644, %v642
  %v1109 = vpack.c.b16 %v647, %v645
  %v1110 = vpack.c.b16 %v648, %v646
  %v1111 = vpack.c.b16 %v651, %v649
  %v1112 = vpack.c.b16 %v652, %v650
  %v1113 = vpack.c.b16 %v655, %v653
  %v1114 = vpack.c.b16 %v656, %v654
  %v1115 = vpack.c.b16 %v659, %v657
  %v1116 = vpack.c.b16 %v660, %v658
  %v1117 = vpack.c.b16 %v663, %v661
  %v1118 = vpack.c.b16 %v664, %v662
  %v1119 = vpack.c.b16 %v667, %v665
  %v1120 = vpack.c.b16 %v668, %v666
  %v1121 = vpack.c.b16 %v671, %v669
  %v1122 = vpack.c.b16 %v672, %v670
  %v1123 = vpack.c.b16 %v675, %v673
  %v1124 = vpack.c.b16 %v676, %v674
  %v1125 = vpack.c.b16 %v679, %v677
  %v1126 = vpack.c.b16 %v680, %v678
  %v1127 = vpack.c.b16 %v683, %v681
  %v1128 = vpack.c.b16 %v684, %v682
  %v1129 = vpack.c.b16 %v687, %v685
  %v1130 = vpack.c.b16 %v688, %v686
  %v1131 = vpack.c.b16 %v691, %v689
  %v1132 = vpack.c.b16 %v692, %v690
  %v1133 = vpack.c.b16 %v695, %v693
  %v1134 = vpack.c.b16 %v696, %v694
  %v1135 = vpack.c.b16 %v699, %v697
  %v1136 = vpack.c.b16 %v700, %v698
  %v1137 = vpack.c.b16 %v703, %v701
  %v1138 = vpack.c.b16 %v704, %v702
  %v1139 = vpack.c.b16 %v707, %v705
  %v1140 = vpack.c.b16 %v708, %v706
  %v1141 = vpack.c.b16 %v711, %v709
  %v1142 = vpack.c.b16 %v712, %v710
  %v1143 = vpack.c.b16 %v715, %v713
  %v1144 = vpack.c.b16 %v716, %v714
  %v1145 = vpack.c.b16 %v719, %v717
  %v1146 = vpack.c.b16 %v720, %v718
  %v1147 = vpack.c.b16 %v723, %v721
  %v1148 = vpack.c.b16 %v724, %v722
  %v1149 = vpack.c.b16 %v727, %v725
  %v1150 = vpack.c.b16 %v728, %v726
  %v1151 = vpack.c.b16 %v731, %v729
  %v1152 = vpack.c.b16 %v732, %v730
  %v1153 = vpack.c.b16 %v735, %v733
  %v1154 = vpack.c.b16 %v736, %v734
  %v1155 = vpack.c.b16 %v739, %v737
  %v1156 = vpack.c.b16 %v740, %v738
  %v1157 = vpack.c.b16 %v743, %v741
  %v1158 = vpack.c.b16 %v744, %v742
  %v1159 = vpack.c.b16 %v747, %v745
  %v1160 = vpack.c.b16 %v748, %v746
  %v1161 = vpack.c.b16 %v751, %v749
  %v1162 = vpack.c.b16 %v752, %v750
  %v1163 = vpack.c.b16 %v755, %v753
  %v1164 = vpack.c.b16 %v756, %v754
  %v1165 = vpack.c.b16 %v759, %v757
  %v1166 = vpack.c.b16 %v760, %v758
  %v1167 = vpack.c.b16 %v763, %v761
  %v1168 = vpack.c.b16 %v764, %v762
  %v1169 = vpack.c.b16 %v767, %v765
  %v1170 = vpack.c.b16 %v768, %v766
  %v1171 = vpack.c.b16 %v771, %v769
  %v1172 = vpack.c.b16 %v772, %v770
  %v1173 = vpack.c.b16 %v775, %v773
  %v1174 = vpack.c.b16 %v776, %v774
  %v1175 = vpack.c.b16 %v779, %v777
  %v1176 = vpack.c.b16 %v780, %v778
  %v1177 = vpack.c.b16 %v783, %v781
  %v1178 = vpack.c.b16 %v784, %v782
  %v1179 = vpack.c.b16 %v787, %v785
  %v1180 = vpack.c.b16 %v788, %v786
  %v1181 = vpack.c.b16 %v791, %v789
  %v1182 = vpack.c.b16 %v792, %v790
  %v1183 = vpack.c.b16 %v795, %v793
  %v1184 = vpack.c.b16 %v796, %v794
  %v1185 = vpack.c.b16 %v799, %v797
  %v1186 = vpack.c.b16 %v800, %v798
  %v1187 = vpack.c.b16 %v803, %v801
  %v1188 = vpack.c.b16 %v804, %v802
  %v1189 = vpack.c.b16 %v807, %v805
  %v1190 = vpack.c.b16 %v808, %v806
  %v1191 = vpack.c.b16 %v811, %v809
  %v1192 = vpack.c.b16 %v812, %v810
  %v1193 = vpack.c.b16 %v815, %v813
  %v1194 = vpack.c.b16 %v816, %v814
  %v1195 = vpack.c.b16 %v819, %v817
  %v1196 = vpack.c.b16 %v820, %v818
  %v1197 = vpack.c.b16 %v823, %v821
  %v1198 = vpack.c.b16 %v824, %v822
  %v1199 = vpack.c.b16 %v827, %v825
  %v1200 = vpack.c.b16 %v828, %v826
  %v1201 = vpack.c.b16 %v831, %v829
  %v1202 = vpack.c.b16 %v832, %v830
  %v1203 = vpack.c.b16 %v835, %v833
  %v1204 = vpack.c.b16 %v836, %v834
  %v1205 = vpack.c.b16 %v839, %v837
  %v1206 = vpack.c.b16 %v840, %v838
  %v1207 = vpack.c.b16 %v843, %v841
  %v1208 = vpack.c.b16 %v844, %v842
  %v1209 = vpack.c.b16 %v847, %v845
  %v1210 = vpack.c.b16 %v848, %v846
  %v1211 = vpack.c.b16 %v851, %v849
  %v1212 = vpack.c.b16 %v852, %v850
  %v1213 = vpack.c.b16 %v855, %v853
  %v1214 = vpack.c.b16 %v856, %v854
  %v1215 = vpack.c.b16 %v859, %v857
  %v1216 = vpack.c.b16 %v860, %v858
  %v1217 = vpack.c.b16 %v863, %v861
  %v1218 = vpack.c.b16 %v864, %v862
  %v1219 = vpack.c.b16 %v867, %v865
  %v1220 = vpack.c.b16 %v868, %v866
  %v1221 = vpack.c.b16 %v871, %v869
  %v1222 = vpack.c.b16 %v872, %v870
  %v1223 = vpack.c.b16 %v875, %v873
  %v1224 = vpack.c.b16 %v876, %v874
  %v1225 = vpack.c.b16 %v879, %v877
  %v1226 = vpack.c.b16 %v880, %v878
  %v1227 = vpack.c.b16 %v883, %v881
  %v1228 = vpack.c.b16 %v884, %v882
  %v1229 = vpack.c.b16 %v887, %v885
  %v1230 = vpack.c.b16 %v888, %v886
  %v1231 = vpack.c.b16 %v891, %v889
  %v1232 = vpack.c.b16 %v892, %v890
  %v1233 = vpack.c.b16 %v895, %v893
  %v1234 = vpack.c.b16 %v896, %v894
  %v1235 = vpack.c.b16 %v899, %v897
  %v1236 = vpack.c.b16 %v900, %v898
  %v1237 = vpack.c.b16 %v903, %v901
  %v1238 = vpack.c.b16 %v904, %v902
  %v1239 = vpack.c.b16 %v907, %v905
  %v1240 = vpack.c.b16 %v908, %v906
  %v1241 = vpack.c.b16 %v911, %v909
  %v1242 = vpack.c.b16 %v912, %v910
  %v1243 = vpack.c.b16 %v915, %v913
  %v1244 = vpack.c.b16 %v916, %v914
  %v1245 = vpack.c.b16 %v919, %v917
  %v1246 = vpack.c.b16 %v920, %v918
  %v1247 = vpack.c.b16 %v923, %v921
  %v1248 = vpack.c.b16 %v924, %v922
  %v1249 = vpack.c.b16 %v927, %v925
  %v1250 = vpack.c.b16 %v928, %v926
  %v1251 = vpack.c.b16 %v931, %v929
  %v1252 = vpack.c.b16 %v932, %v930
  %v1253 = vpack.c.b16 %v935, %v933
  %v1254 = vpack.c.b16 %v936, %v934
  %v1255 = vpack.c.b16 %v939, %v937
  %v1256 = vpack.c.b16 %v940, %v938
  %v1257 = vpack.c.b16 %v943, %v941
  %v1258 = vpack.c.b16 %v944, %v942
  %v1259 = vpack.c.b16 %v947, %v945
  %v1260 = vpack.c.b16 %v948, %v946
  %v1261 = vpack.c.b16 %v951, %v949
  %v1262 = vpack.c.b16 %v952, %v950
  %v1263 = vpack.c.b16 %v955, %v953
  %v1264 = vpack.c.b16 %v956, %v954
  %v1265 = vpack.c.b16 %v959, %v957
  %v1266 = vpack.c.b16 %v960, %v958
  %v1267 = vpack.c.b16 %v963, %v961
  %v1268 = vpack.c.b16 %v964, %v962
  %v1269 = vpack.c.b16 %v967, %v965
  %v1270 = vpack.c.b16 %v968, %v966
  %v1271 = vpack.c.b16 %v971, %v969
  %v1272 = vpack.c.b16 %v972, %v970
  %v1273 = vpack.c.b16 %v975, %v973
  %v1274 = vpack.c.b16 %v976, %v974
  %v1275 = vpack.c.b16 %v979, %v977
  %v1276 = vpack.c.b16 %v980, %v978
  %v1277 = vpack.c.b16 %v983, %v981
  %v1278 = vpack.c.b16 %v984, %v982
  %v1279 = vpack.c.b16 %v987, %v985
  %v1280 = vpack.c.b16 %v988, %v986
  %v1281 = vpack.c.b16 %v991, %v989
  %v1282 = vpack.c.b16 %v992, %v990
  %v1283 = vpack.c.b16 %v995, %v993
  %v1284 = vpack.c.b16 %v996, %v994
  %v1285 = vpack.c.b16 %v999, %v997
  %v1286 = vpack.c.b16 %v1000, %v998
  %v1287 = vpack.c.b16 %v1003, %v1001
  %v1288 = vpack.c.b16 %v1004, %v1002
  %v1289 = vpack.c.b16 %v1007, %v1005
  %v1290 = vpack.c.b16 %v1008, %v1006
  %v1291 = vpack.c.b16 %v1011, %v1009
  %v1292 = vpack.c.b16 %v1012, %v1010
  %v1293 = vpack.c.b16 %v1015, %v1013
  %v1294 = vpack.c.b16 %v1016, %v1014
  %v1295 = vpack.c.b16 %v1019, %v1017
  %v1296 = vpack.c.b16 %v1020, %v1018
  %v1297 = vpack.c.b16 %v1023, %v1021
  %v1298 = vpack.c.b16 %v1024, %v1022
  %v1299 = vpack.c.b16 %v1027, %v1025
  %v1300 = vpack.c.b16 %v1028, %v1026
  %v1301 = vpack.c.b16 %v1031, %v1029
  %v1302 = vpack.c.b16 %v1032, %v1030
  %v1303 = vpack.c.b16 %v1035, %v1033
  %v1304 = vpack.c.b16 %v1036, %v1034
  %v1305 = vpack.c.b16 %v1039, %v1037
  %v1306 = vpack.c.b16 %v1040, %v1038
  %v1307 = vpack.c.b16 %v1043, %v1041
  %v1308 = vpack.c.b16 %v1044, %v1042
  %v1309 = vpack.c.b16 %v1047, %v1045
  %v1310 = vpack.c.b16 %v1048, %v1046
  %v1311 = vpack.c.b16 %v1051, %v1049
  %v1312 = vpack.c.b16 %v1052, %v1050
  %v1313 = vpack.c.b16 %v1055, %v1053
  %v1314 = vpack.c.b16 %v1056, %v1054
  %v1315 = vpack.c.b16 %v1059, %v1057
  %v1316 = vpack.c.b16 %v1060, %v1058
  %v1464 = vunpack.c.l.b16 %v274
  %v1465 = vunpack.c.l.b16 %v275
  %v1466 = vunpack.c.l.b16 %v276
  %v1467 = vunpack.c.l.b16 %v277
  %v1468 = vunpack.c.l.b16 %v278
  %v1469 = vunpack.c.l.b16 %v279
  %v1470 = vunpack.c.l.b16 %v280
  %v1471 = vunpack.c.l.b16 %v281
  %v1472 = vunpack.c.l.b16 %v282
  %v1473 = vunpack.c.l.b16 %v283
  %v1474 = vunpack.c.l.b16 %v284
  %v1475 = vunpack.c.l.b16 %v285
  %v1476 = vunpack.c.l.b16 %v286
  %v1477 = vunpack.c.l.b16 %v287
  %v1478 = vunpack.c.l.b16 %v288
  %v1479 = vunpack.c.l.b16 %v289
  %v1480 = vunpack.c.l.b16 %v290
  %v1481 = vunpack.c.l.b16 %v291
  %v1482 = vunpack.c.l.b16 %v292
  %v1483 = vpack.c.b16 %v1465, %v1464
  %v1484 = vpack.c.b16 %v1467, %v1466
  %v1485 = vpack.c.b16 %v1469, %v1468
  %v1486 = vpack.c.b16 %v1471, %v1470
  %v1487 = vpack.c.b16 %v1473, %v1472
  %v1488 = vpack.c.b16 %v1475, %v1474
  %v1489 = vpack.c.b16 %v1477, %v1476
  %v1490 = vpack.c.b16 %v1479, %v1478
  %v1491 = vpack.c.b16 %v1481, %v1480
  %v1492 = vpack.c.b16 %v1482, %v1482
  %vm1502 = vcmask 154624
  %v1504 = vsel %vm1502, %v1062, 0
  %v1507 = vsel %vm1502, %v1064, 0
  %v1510 = vsel %vm1502, %v1066, 0
  %v1513 = vsel %vm1502, %v1068, 0
  %v1516 = vsel %vm1502, %v1070, 0
  %v1519 = vsel %vm1502, %v1072, 0
  %v1522 = vsel %vm1502, %v1074, 0
  %v1525 = vsel %vm1502, %v1076, 0
  %v1528 = vsel %vm1502, %v1078, 0
  %v1531 = vsel %vm1502, %v1080, 0
  %v1534 = vsel %vm1502, %v1082, 0
  %v1537 = vsel %vm1502, %v1084, 0
  %v1540 = vsel %vm1502, %v1086, 0
  %v1543 = vsel %vm1502, %v1088, 0
  %v1546 = vsel %vm1502, %v1090, 0
  %v1549 = vsel %vm1502, %v1092, 0
  %v1552 = vsel %vm1502, %v1094, 0
  %v1555 = vsel %vm1502, %v1096, 0
  %v1558 = vsel %vm1502, %v1098, 0
  %v1561 = vsel %vm1502, %v1100, 0
  %v1564 = vsel %vm1502, %v1102, 0
  %v1567 = vsel %vm1502, %v1104, 0
  %v1570 = vsel %vm1502, %v1106, 0
  %v1573 = vsel %vm1502, %v1108, 0
  %v1576 = vsel %vm1502, %v1110, 0
  %v1579 = vsel %vm1502, %v1112, 0
  %v1582 = vsel %vm1502, %v1114, 0
  %v1585 = vsel %vm1502, %v1116, 0
  %v1588 = vsel %vm1502, %v1118, 0
  %v1591 = vsel %vm1502, %v1120, 0
  %v1594 = vsel %vm1502, %v1122, 0
  %v1597 = vsel %vm1502, %v1124, 0
  %v1600 = vsel %vm1502, %v1126, 0
  %v1603 = vsel %vm1502, %v1128, 0
  %v1606 = vsel %vm1502, %v1130, 0
  %v1609 = vsel %vm1502, %v1132, 0
  %v1612 = vsel %vm1502, %v1134, 0
  %v1615 = vsel %vm1502, %v1136, 0
  %v1618 = vsel %vm1502, %v1138, 0
  %v1621 = vsel %vm1502, %v1140, 0
  %v1624 = vsel %vm1502, %v1142, 0
  %v1627 = vsel %vm1502, %v1144, 0
  %v1630 = vsel %vm1502, %v1146, 0
  %v1633 = vsel %vm1502, %v1148, 0
  %v1636 = vsel %vm1502, %v1150, 0
  %v1639 = vsel %vm1502, %v1152, 0
  %v1642 = vsel %vm1502, %v1154, 0
  %v1645 = vsel %vm1502, %v1156, 0
  %v1648 = vsel %vm1502, %v1158, 0
  %v1651 = vsel %vm1502, %v1160, 0
  %v1654 = vsel %vm1502, %v1162, 0
  %v1657 = vsel %vm1502, %v1164, 0
  %v1660 = vsel %vm1502, %v1166, 0
  %v1663 = vsel %vm1502, %v1168, 0
  %v1666 = vsel %vm1502, %v1170, 0
  %v1669 = vsel %vm1502, %v1172, 0
  %v1672 = vsel %vm1502, %v1174, 0
  %v1675 = vsel %vm1502, %v1176, 0
  %v1678 = vsel %vm1502, %v1178, 0
  %v1681 = vsel %vm1502, %v1180, 0
  %v1684 = vsel %vm1502, %v1182, 0
  %v1687 = vsel %vm1502, %v1184, 0
  %v1690 = vsel %vm1502, %v1186, 0
  %v1693 = vsel %vm1502, %v1188, 0
  %v1696 = vsel %vm1502, %v1190, 0
  %v1699 = vsel %vm1502, %v1192, 0
  %v1702 = vsel %vm1502, %v1194, 0
  %v1705 = vsel %vm1502, %v1196, 0
  %v1708 = vsel %vm1502, %v1198, 0
  %v1711 = vsel %vm1502, %v1200, 0
  %v1714 = vsel %vm1502, %v1202, 0
  %v1717 = vsel %vm1502, %v1204, 0
  %v1720 = vsel %vm1502, %v1206, 0
  %v1723 = vsel %vm1502, %v1208, 0
  %v1726 = vsel %vm1502, %v1210, 0
  %v1729 = vsel %vm1502, %v1212, 0
  %v1732 = vsel %vm1502, %v1214, 0
  %v1735 = vsel %vm1502, %v1216, 0
  %v1738 = vsel %vm1502, %v1218, 0
  %v1741 = vsel %vm1502, %v1220, 0
  %v1744 = vsel %vm1502, %v1222, 0
  %v1747 = vsel %vm1502, %v1224, 0
  %v1750 = vsel %vm1502, %v1226, 0
  %v1753 = vsel %vm1502, %v1228, 0
  %v1756 = vsel %vm1502, %v1230, 0
  %v1759 = vsel %vm1502, %v1232, 0
  %v1762 = vsel %vm1502, %v1234, 0
  %v1765 = vsel %vm1502, %v1236, 0
  %v1768 = vsel %vm1502, %v1238, 0
  %v1771 = vsel %vm1502, %v1240, 0
  %v1774 = vsel %vm1502, %v1242, 0
  %v1777 = vsel %vm1502, %v1244, 0
  %v1780 = vsel %vm1502, %v1246, 0
  %v1783 = vsel %vm1502, %v1248, 0
  %v1786 = vsel %vm1502, %v1250, 0
  %v1789 = vsel %vm1502, %v1252, 0
  %v1792 = vsel %vm1502, %v1254, 0
  %v1795 = vsel %vm1502, %v1256, 0
  %v1798 = vsel %vm1502, %v1258, 0
  %v1801 = vsel %vm1502, %v1260, 0
  %v1804 = vsel %vm1502, %v1262, 0
  %v1807 = vsel %vm1502, %v1264, 0
  %v1810 = vsel %vm1502, %v1266, 0
  %v1813 = vsel %vm1502, %v1268, 0
  %v1816 = vsel %vm1502, %v1270, 0
  %v1819 = vsel %vm1502, %v1272, 0
  %v1822 = vsel %vm1502, %v1274, 0
  %v1825 = vsel %vm1502, %v1276, 0
  %v1828 = vsel %vm1502, %v1278, 0
  %v1831 = vsel %vm1502, %v1280, 0
  %v1834 = vsel %vm1502, %v1282, 0
  %v1837 = vsel %vm1502, %v1284, 0
  %v1840 = vsel %vm1502, %v1286, 0
  %v1843 = vsel %vm1502, %v1288, 0
  %v1846 = vsel %vm1502, %v1290, 0
  %v1849 = vsel %vm1502, %v1292, 0
  %v1852 = vsel %vm1502, %v1294, 0
  %v1855 = vsel %vm1502, %v1296, 0
  %v1858 = vsel %vm1502, %v1298, 0
  %v1861 = vsel %vm1502, %v1300, 0
  %v1864 = vsel %vm1502, %v1302, 0
  %v1867 = vsel %vm1502, %v1304, 0
  %v1870 = vsel %vm1502, %v1306, 0
  %v1873 = vsel %vm1502, %v1308, 0
  %v1876 = vsel %vm1502, %v1310, 0
  %v1879 = vsel %vm1502, %v1312, 0
  %v1882 = vsel %vm1502, %v1314, 0
  %v1885 = vsel %vm1502, %v1316, 0
  %vm1887 = vcmask 1040384
  %vm1888 = vcmask 1041408
  %v1889 = vsel %vm1887, 4294967295, 65535
  %v1890 = vsel %vm1888, %v1889, 0
  %v1892 = vand.u32 %v1492, %v1890
  %1894 = vmatprep.subr.bf16.mxu0 0
  %1895 = vmatpush1.bf16.msra.mxu0 %v1490
  %1896 = vmatprep.subr.bf16.mxu0 0
  %1897 = vmatpush1.bf16.msra.mxu0 %v1489
  %1898 = vmatprep.subr.bf16.mxu0 0
  %1899 = vmatpush1.bf16.msra.mxu0 %v1488
  %1900 = vmatprep.subr.bf16.mxu0 0
  %1901 = vmatpush1.bf16.msra.mxu0 %v1487
  %1902 = vmatprep.subr.bf16.mxu0 0
  %1903 = vmatpush1.bf16.msra.mxu0 %v1486
  %1904 = vmatprep.subr.bf16.mxu0 0
  %1905 = vmatpush1.bf16.msra.mxu0 %v1485
  %1906 = vmatprep.subr.bf16.mxu0 0
  %1907 = vmatpush1.bf16.msra.mxu0 %v1484
  %1908 = vmatprep.subr.bf16.mxu0 0
  %1909 = vmatpush1.bf16.msra.mxu0 %v1483
  %1910 = vmatprep.subr.bf16.mxu0 0
  %1911 = vmatpush2.bf16.msra.mxu0 0
  %1912 = vmatprep.subr.bf16.mxu0 0
  %1913 = vmatpush2.bf16.msra.mxu0 0
  %1914 = vmatprep.subr.bf16.mxu0 0
  %1915 = vmatpush2.bf16.msra.mxu0 0
  %1916 = vmatprep.subr.bf16.mxu0 0
  %1917 = vmatpush2.bf16.msra.mxu0 0
  %1918 = vmatprep.subr.bf16.mxu0 0
  %1919 = vmatpush2.bf16.msra.mxu0 0
  %1920 = vmatprep.subr.bf16.mxu0 0
  %1921 = vmatpush2.bf16.msra.mxu0 0
  %1922 = vmatprep.subr.bf16.mxu0 0
  %1923 = vmatpush2.bf16.msra.mxu0 %v1892
  %1924 = vmatprep.subr.bf16.mxu0 0
  %1925 = vmatpush2.bf16.msra.mxu0 %v1491
  %1926 = vmatprep.mubr.bf16.mxu0 %v1504
  %1927 = vmatmul.mubr.bf16.gmra.mxu0 %v1061
  %v1928 = vpop.f32.mrf.mxu0
  %v1929 = vadd.f32 0.0, %v1928
  %v1930 = vpop.f32.mrf.mxu0
  %v1931 = vpop.f32.mrf.mxu0
  %v1932 = vadd.f32 0.0, %v1931
  %v1933 = vpop.f32.mrf.mxu0
  %1934 = vmatprep.mubr.bf16.mxu0 %v1507
  %1935 = vmatmul.mubr.bf16.gmra.mxu0 %v1063
  %v1936 = vpop.f32.mrf.mxu0
  %v1937 = vadd.f32 0.0, %v1936
  %v1938 = vpop.f32.mrf.mxu0
  %v1939 = vpop.f32.mrf.mxu0
  %v1940 = vadd.f32 0.0, %v1939
  %v1941 = vpop.f32.mrf.mxu0
  %1942 = vmatprep.mubr.bf16.mxu0 %v1510
  %1943 = vmatmul.mubr.bf16.gmra.mxu0 %v1065
  %v1944 = vpop.f32.mrf.mxu0
  %v1945 = vadd.f32 0.0, %v1944
  %v1946 = vpop.f32.mrf.mxu0
  %v1947 = vpop.f32.mrf.mxu0
  %v1948 = vadd.f32 0.0, %v1947
  %v1949 = vpop.f32.mrf.mxu0
  %1950 = vmatprep.mubr.bf16.mxu0 %v1513
  %1951 = vmatmul.mubr.bf16.gmra.mxu0 %v1067
  %v1952 = vpop.f32.mrf.mxu0
  %v1953 = vadd.f32 0.0, %v1952
  %v1954 = vpop.f32.mrf.mxu0
  %v1955 = vpop.f32.mrf.mxu0
  %v1956 = vadd.f32 0.0, %v1955
  %v1957 = vpop.f32.mrf.mxu0
  %1958 = vmatprep.mubr.bf16.mxu0 %v1516
  %1959 = vmatmul.mubr.bf16.gmra.mxu0 %v1069
  %v1960 = vpop.f32.mrf.mxu0
  %v1961 = vadd.f32 0.0, %v1960
  %v1962 = vpop.f32.mrf.mxu0
  %v1963 = vpop.f32.mrf.mxu0
  %v1964 = vadd.f32 0.0, %v1963
  %v1965 = vpop.f32.mrf.mxu0
  %1966 = vmatprep.mubr.bf16.mxu0 %v1519
  %1967 = vmatmul.mubr.bf16.gmra.mxu0 %v1071
  %v1968 = vpop.f32.mrf.mxu0
  %v1969 = vadd.f32 0.0, %v1968
  %v1970 = vpop.f32.mrf.mxu0
  %v1971 = vpop.f32.mrf.mxu0
  %v1972 = vadd.f32 0.0, %v1971
  %v1973 = vpop.f32.mrf.mxu0
  %1974 = vmatprep.mubr.bf16.mxu0 %v1522
  %1975 = vmatmul.mubr.bf16.gmra.mxu0 %v1073
  %v1976 = vpop.f32.mrf.mxu0
  %v1977 = vadd.f32 0.0, %v1976
  %v1978 = vpop.f32.mrf.mxu0
  %v1979 = vpop.f32.mrf.mxu0
  %v1980 = vadd.f32 0.0, %v1979
  %v1981 = vpop.f32.mrf.mxu0
  %1982 = vmatprep.mubr.bf16.mxu0 %v1525
  %1983 = vmatmul.mubr.bf16.gmra.mxu0 %v1075
  %v1984 = vpop.f32.mrf.mxu0
  %v1985 = vadd.f32 0.0, %v1984
  %v1986 = vpop.f32.mrf.mxu0
  %v1987 = vpop.f32.mrf.mxu0
  %v1988 = vadd.f32 0.0, %v1987
  %v1989 = vpop.f32.mrf.mxu0
  %1990 = vmatprep.mubr.bf16.mxu0 %v1528
  %1991 = vmatmul.mubr.bf16.gmra.mxu0 %v1077
  %v1992 = vpop.f32.mrf.mxu0
  %v1993 = vadd.f32 0.0, %v1992
  %v1994 = vpop.f32.mrf.mxu0
  %v1995 = vpop.f32.mrf.mxu0
  %v1996 = vadd.f32 0.0, %v1995
  %v1997 = vpop.f32.mrf.mxu0
  %1998 = vmatprep.mubr.bf16.mxu0 %v1531
  %1999 = vmatmul.mubr.bf16.gmra.mxu0 %v1079
  %v2000 = vpop.f32.mrf.mxu0
  %v2001 = vadd.f32 0.0, %v2000
  %v2002 = vpop.f32.mrf.mxu0
  %v2003 = vpop.f32.mrf.mxu0
  %v2004 = vadd.f32 0.0, %v2003
  %v2005 = vpop.f32.mrf.mxu0
  %2006 = vmatprep.mubr.bf16.mxu0 %v1534
  %2007 = vmatmul.mubr.bf16.gmra.mxu0 %v1081
  %v2008 = vpop.f32.mrf.mxu0
  %v2009 = vadd.f32 0.0, %v2008
  %v2010 = vpop.f32.mrf.mxu0
  %v2011 = vpop.f32.mrf.mxu0
  %v2012 = vadd.f32 0.0, %v2011
  %v2013 = vpop.f32.mrf.mxu0
  %2014 = vmatprep.mubr.bf16.mxu0 %v1537
  %2015 = vmatmul.mubr.bf16.gmra.mxu0 %v1083
  %v2016 = vpop.f32.mrf.mxu0
  %v2017 = vadd.f32 0.0, %v2016
  %v2018 = vpop.f32.mrf.mxu0
  %v2019 = vpop.f32.mrf.mxu0
  %v2020 = vadd.f32 0.0, %v2019
  %v2021 = vpop.f32.mrf.mxu0
  %2022 = vmatprep.mubr.bf16.mxu0 %v1540
  %2023 = vmatmul.mubr.bf16.gmra.mxu0 %v1085
  %v2024 = vpop.f32.mrf.mxu0
  %v2025 = vadd.f32 0.0, %v2024
  %v2026 = vpop.f32.mrf.mxu0
  %v2027 = vpop.f32.mrf.mxu0
  %v2028 = vadd.f32 0.0, %v2027
  %v2029 = vpop.f32.mrf.mxu0
  %2030 = vmatprep.mubr.bf16.mxu0 %v1543
  %2031 = vmatmul.mubr.bf16.gmra.mxu0 %v1087
  %v2032 = vpop.f32.mrf.mxu0
  %v2033 = vadd.f32 0.0, %v2032
  %v2034 = vpop.f32.mrf.mxu0
  %v2035 = vpop.f32.mrf.mxu0
  %v2036 = vadd.f32 0.0, %v2035
  %v2037 = vpop.f32.mrf.mxu0
  %2038 = vmatprep.mubr.bf16.mxu0 %v1546
  %2039 = vmatmul.mubr.bf16.gmra.mxu0 %v1089
  %v2040 = vpop.f32.mrf.mxu0
  %v2041 = vadd.f32 0.0, %v2040
  %v2042 = vpop.f32.mrf.mxu0
  %v2043 = vpop.f32.mrf.mxu0
  %v2044 = vadd.f32 0.0, %v2043
  %v2045 = vpop.f32.mrf.mxu0
  %2046 = vmatprep.mubr.bf16.mxu0 %v1549
  %2047 = vmatmul.mubr.bf16.gmra.mxu0 %v1091
  %v2048 = vpop.f32.mrf.mxu0
  %v2049 = vadd.f32 0.0, %v2048
  %v2050 = vpop.f32.mrf.mxu0
  %v2051 = vpop.f32.mrf.mxu0
  %v2052 = vadd.f32 0.0, %v2051
  %v2053 = vpop.f32.mrf.mxu0
  %2054 = vmatprep.mubr.bf16.mxu0 %v1552
  %2055 = vmatmul.mubr.bf16.gmra.mxu0 %v1093
  %v2056 = vpop.f32.mrf.mxu0
  %v2057 = vadd.f32 0.0, %v2056
  %v2058 = vpop.f32.mrf.mxu0
  %v2059 = vpop.f32.mrf.mxu0
  %v2060 = vadd.f32 0.0, %v2059
  %v2061 = vpop.f32.mrf.mxu0
  %2062 = vmatprep.mubr.bf16.mxu0 %v1555
  %2063 = vmatmul.mubr.bf16.gmra.mxu0 %v1095
  %v2064 = vpop.f32.mrf.mxu0
  %v2065 = vadd.f32 0.0, %v2064
  %v2066 = vpop.f32.mrf.mxu0
  %v2067 = vpop.f32.mrf.mxu0
  %v2068 = vadd.f32 0.0, %v2067
  %v2069 = vpop.f32.mrf.mxu0
  %2070 = vmatprep.mubr.bf16.mxu0 %v1558
  %2071 = vmatmul.mubr.bf16.gmra.mxu0 %v1097
  %v2072 = vpop.f32.mrf.mxu0
  %v2073 = vadd.f32 0.0, %v2072
  %v2074 = vpop.f32.mrf.mxu0
  %v2075 = vpop.f32.mrf.mxu0
  %v2076 = vadd.f32 0.0, %v2075
  %v2077 = vpop.f32.mrf.mxu0
  %2078 = vmatprep.mubr.bf16.mxu0 %v1561
  %2079 = vmatmul.mubr.bf16.gmra.mxu0 %v1099
  %v2080 = vpop.f32.mrf.mxu0
  %v2081 = vadd.f32 0.0, %v2080
  %v2082 = vpop.f32.mrf.mxu0
  %v2083 = vpop.f32.mrf.mxu0
  %v2084 = vadd.f32 0.0, %v2083
  %v2085 = vpop.f32.mrf.mxu0
  %2086 = vmatprep.mubr.bf16.mxu0 %v1564
  %2087 = vmatmul.mubr.bf16.gmra.mxu0 %v1101
  %v2088 = vpop.f32.mrf.mxu0
  %v2089 = vadd.f32 0.0, %v2088
  %v2090 = vpop.f32.mrf.mxu0
  %v2091 = vpop.f32.mrf.mxu0
  %v2092 = vadd.f32 0.0, %v2091
  %v2093 = vpop.f32.mrf.mxu0
  %2094 = vmatprep.mubr.bf16.mxu0 %v1567
  %2095 = vmatmul.mubr.bf16.gmra.mxu0 %v1103
  %v2096 = vpop.f32.mrf.mxu0
  %v2097 = vadd.f32 0.0, %v2096
  %v2098 = vpop.f32.mrf.mxu0
  %v2099 = vpop.f32.mrf.mxu0
  %v2100 = vadd.f32 0.0, %v2099
  %v2101 = vpop.f32.mrf.mxu0
  %2102 = vmatprep.mubr.bf16.mxu0 %v1570
  %2103 = vmatmul.mubr.bf16.gmra.mxu0 %v1105
  %v2104 = vpop.f32.mrf.mxu0
  %v2105 = vadd.f32 0.0, %v2104
  %v2106 = vpop.f32.mrf.mxu0
  %v2107 = vpop.f32.mrf.mxu0
  %v2108 = vadd.f32 0.0, %v2107
  %v2109 = vpop.f32.mrf.mxu0
  %2110 = vmatprep.mubr.bf16.mxu0 %v1573
  %2111 = vmatmul.mubr.bf16.gmra.mxu0 %v1107
  %v2112 = vpop.f32.mrf.mxu0
  %v2113 = vadd.f32 0.0, %v2112
  %v2114 = vpop.f32.mrf.mxu0
  %v2115 = vpop.f32.mrf.mxu0
  %v2116 = vadd.f32 0.0, %v2115
  %v2117 = vpop.f32.mrf.mxu0
  %2118 = vmatprep.mubr.bf16.mxu0 %v1576
  %2119 = vmatmul.mubr.bf16.gmra.mxu0 %v1109
  %v2120 = vpop.f32.mrf.mxu0
  %v2121 = vadd.f32 0.0, %v2120
  %v2122 = vpop.f32.mrf.mxu0
  %v2123 = vpop.f32.mrf.mxu0
  %v2124 = vadd.f32 0.0, %v2123
  %v2125 = vpop.f32.mrf.mxu0
  %2126 = vmatprep.mubr.bf16.mxu0 %v1579
  %2127 = vmatmul.mubr.bf16.gmra.mxu0 %v1111
  %v2128 = vpop.f32.mrf.mxu0
  %v2129 = vadd.f32 0.0, %v2128
  %v2130 = vpop.f32.mrf.mxu0
  %v2131 = vpop.f32.mrf.mxu0
  %v2132 = vadd.f32 0.0, %v2131
  %v2133 = vpop.f32.mrf.mxu0
  %2134 = vmatprep.mubr.bf16.mxu0 %v1582
  %2135 = vmatmul.mubr.bf16.gmra.mxu0 %v1113
  %v2136 = vpop.f32.mrf.mxu0
  %v2137 = vadd.f32 0.0, %v2136
  %v2138 = vpop.f32.mrf.mxu0
  %v2139 = vpop.f32.mrf.mxu0
  %v2140 = vadd.f32 0.0, %v2139
  %v2141 = vpop.f32.mrf.mxu0
  %2142 = vmatprep.mubr.bf16.mxu0 %v1585
  %2143 = vmatmul.mubr.bf16.gmra.mxu0 %v1115
  %v2144 = vpop.f32.mrf.mxu0
  %v2145 = vadd.f32 0.0, %v2144
  %v2146 = vpop.f32.mrf.mxu0
  %v2147 = vpop.f32.mrf.mxu0
  %v2148 = vadd.f32 0.0, %v2147
  %v2149 = vpop.f32.mrf.mxu0
  %2150 = vmatprep.mubr.bf16.mxu0 %v1588
  %2151 = vmatmul.mubr.bf16.gmra.mxu0 %v1117
  %v2152 = vpop.f32.mrf.mxu0
  %v2153 = vadd.f32 0.0, %v2152
  %v2154 = vpop.f32.mrf.mxu0
  %v2155 = vpop.f32.mrf.mxu0
  %v2156 = vadd.f32 0.0, %v2155
  %v2157 = vpop.f32.mrf.mxu0
  %2158 = vmatprep.mubr.bf16.mxu0 %v1591
  %2159 = vmatmul.mubr.bf16.gmra.mxu0 %v1119
  %v2160 = vpop.f32.mrf.mxu0
  %v2161 = vadd.f32 0.0, %v2160
  %v2162 = vpop.f32.mrf.mxu0
  %v2163 = vpop.f32.mrf.mxu0
  %v2164 = vadd.f32 0.0, %v2163
  %v2165 = vpop.f32.mrf.mxu0
  %2166 = vmatprep.mubr.bf16.mxu0 %v1594
  %2167 = vmatmul.mubr.bf16.gmra.mxu0 %v1121
  %v2168 = vpop.f32.mrf.mxu0
  %v2169 = vadd.f32 0.0, %v2168
  %v2170 = vpop.f32.mrf.mxu0
  %v2171 = vpop.f32.mrf.mxu0
  %v2172 = vadd.f32 0.0, %v2171
  %v2173 = vpop.f32.mrf.mxu0
  %2174 = vmatprep.mubr.bf16.mxu0 %v1597
  %2175 = vmatmul.mubr.bf16.gmra.mxu0 %v1123
  %v2176 = vpop.f32.mrf.mxu0
  %v2177 = vadd.f32 0.0, %v2176
  %v2178 = vpop.f32.mrf.mxu0
  %v2179 = vpop.f32.mrf.mxu0
  %v2180 = vadd.f32 0.0, %v2179
  %v2181 = vpop.f32.mrf.mxu0
  %2182 = vmatprep.mubr.bf16.mxu0 %v1600
  %2183 = vmatmul.mubr.bf16.gmra.mxu0 %v1125
  %v2184 = vpop.f32.mrf.mxu0
  %v2185 = vadd.f32 0.0, %v2184
  %v2186 = vpop.f32.mrf.mxu0
  %v2187 = vpop.f32.mrf.mxu0
  %v2188 = vadd.f32 0.0, %v2187
  %v2189 = vpop.f32.mrf.mxu0
  %2190 = vmatprep.mubr.bf16.mxu0 %v1603
  %2191 = vmatmul.mubr.bf16.gmra.mxu0 %v1127
  %v2192 = vpop.f32.mrf.mxu0
  %v2193 = vadd.f32 0.0, %v2192
  %v2194 = vpop.f32.mrf.mxu0
  %v2195 = vpop.f32.mrf.mxu0
  %v2196 = vadd.f32 0.0, %v2195
  %v2197 = vpop.f32.mrf.mxu0
  %2198 = vmatprep.mubr.bf16.mxu0 %v1606
  %2199 = vmatmul.mubr.bf16.gmra.mxu0 %v1129
  %v2200 = vpop.f32.mrf.mxu0
  %v2201 = vadd.f32 0.0, %v2200
  %v2202 = vpop.f32.mrf.mxu0
  %v2203 = vpop.f32.mrf.mxu0
  %v2204 = vadd.f32 0.0, %v2203
  %v2205 = vpop.f32.mrf.mxu0
  %2206 = vmatprep.mubr.bf16.mxu0 %v1609
  %2207 = vmatmul.mubr.bf16.gmra.mxu0 %v1131
  %v2208 = vpop.f32.mrf.mxu0
  %v2209 = vadd.f32 0.0, %v2208
  %v2210 = vpop.f32.mrf.mxu0
  %v2211 = vpop.f32.mrf.mxu0
  %v2212 = vadd.f32 0.0, %v2211
  %v2213 = vpop.f32.mrf.mxu0
  %2214 = vmatprep.mubr.bf16.mxu0 %v1612
  %2215 = vmatmul.mubr.bf16.gmra.mxu0 %v1133
  %v2216 = vpop.f32.mrf.mxu0
  %v2217 = vadd.f32 0.0, %v2216
  %v2218 = vpop.f32.mrf.mxu0
  %v2219 = vpop.f32.mrf.mxu0
  %v2220 = vadd.f32 0.0, %v2219
  %v2221 = vpop.f32.mrf.mxu0
  %2222 = vmatprep.mubr.bf16.mxu0 %v1615
  %2223 = vmatmul.mubr.bf16.gmra.mxu0 %v1135
  %v2224 = vpop.f32.mrf.mxu0
  %v2225 = vadd.f32 0.0, %v2224
  %v2226 = vpop.f32.mrf.mxu0
  %v2227 = vpop.f32.mrf.mxu0
  %v2228 = vadd.f32 0.0, %v2227
  %v2229 = vpop.f32.mrf.mxu0
  %2230 = vmatprep.mubr.bf16.mxu0 %v1618
  %2231 = vmatmul.mubr.bf16.gmra.mxu0 %v1137
  %v2232 = vpop.f32.mrf.mxu0
  %v2233 = vadd.f32 0.0, %v2232
  %v2234 = vpop.f32.mrf.mxu0
  %v2235 = vpop.f32.mrf.mxu0
  %v2236 = vadd.f32 0.0, %v2235
  %v2237 = vpop.f32.mrf.mxu0
  %2238 = vmatprep.mubr.bf16.mxu0 %v1621
  %2239 = vmatmul.mubr.bf16.gmra.mxu0 %v1139
  %v2240 = vpop.f32.mrf.mxu0
  %v2241 = vadd.f32 0.0, %v2240
  %v2242 = vpop.f32.mrf.mxu0
  %v2243 = vpop.f32.mrf.mxu0
  %v2244 = vadd.f32 0.0, %v2243
  %v2245 = vpop.f32.mrf.mxu0
  %2246 = vmatprep.mubr.bf16.mxu0 %v1624
  %2247 = vmatmul.mubr.bf16.gmra.mxu0 %v1141
  %v2248 = vpop.f32.mrf.mxu0
  %v2249 = vadd.f32 0.0, %v2248
  %v2250 = vpop.f32.mrf.mxu0
  %v2251 = vpop.f32.mrf.mxu0
  %v2252 = vadd.f32 0.0, %v2251
  %v2253 = vpop.f32.mrf.mxu0
  %2254 = vmatprep.mubr.bf16.mxu0 %v1627
  %2255 = vmatmul.mubr.bf16.gmra.mxu0 %v1143
  %v2256 = vpop.f32.mrf.mxu0
  %v2257 = vadd.f32 0.0, %v2256
  %v2258 = vpop.f32.mrf.mxu0
  %v2259 = vpop.f32.mrf.mxu0
  %v2260 = vadd.f32 0.0, %v2259
  %v2261 = vpop.f32.mrf.mxu0
  %2262 = vmatprep.mubr.bf16.mxu0 %v1630
  %2263 = vmatmul.mubr.bf16.gmra.mxu0 %v1145
  %v2264 = vpop.f32.mrf.mxu0
  %v2265 = vadd.f32 0.0, %v2264
  %v2266 = vpop.f32.mrf.mxu0
  %v2267 = vpop.f32.mrf.mxu0
  %v2268 = vadd.f32 0.0, %v2267
  %v2269 = vpop.f32.mrf.mxu0
  %2270 = vmatprep.mubr.bf16.mxu0 %v1633
  %2271 = vmatmul.mubr.bf16.gmra.mxu0 %v1147
  %v2272 = vpop.f32.mrf.mxu0
  %v2273 = vadd.f32 0.0, %v2272
  %v2274 = vpop.f32.mrf.mxu0
  %v2275 = vpop.f32.mrf.mxu0
  %v2276 = vadd.f32 0.0, %v2275
  %v2277 = vpop.f32.mrf.mxu0
  %2278 = vmatprep.mubr.bf16.mxu0 %v1636
  %2279 = vmatmul.mubr.bf16.gmra.mxu0 %v1149
  %v2280 = vpop.f32.mrf.mxu0
  %v2281 = vadd.f32 0.0, %v2280
  %v2282 = vpop.f32.mrf.mxu0
  %v2283 = vpop.f32.mrf.mxu0
  %v2284 = vadd.f32 0.0, %v2283
  %v2285 = vpop.f32.mrf.mxu0
  %2286 = vmatprep.mubr.bf16.mxu0 %v1639
  %2287 = vmatmul.mubr.bf16.gmra.mxu0 %v1151
  %v2288 = vpop.f32.mrf.mxu0
  %v2289 = vadd.f32 0.0, %v2288
  %v2290 = vpop.f32.mrf.mxu0
  %v2291 = vpop.f32.mrf.mxu0
  %v2292 = vadd.f32 0.0, %v2291
  %v2293 = vpop.f32.mrf.mxu0
  %2294 = vmatprep.mubr.bf16.mxu0 %v1642
  %2295 = vmatmul.mubr.bf16.gmra.mxu0 %v1153
  %v2296 = vpop.f32.mrf.mxu0
  %v2297 = vadd.f32 0.0, %v2296
  %v2298 = vpop.f32.mrf.mxu0
  %v2299 = vpop.f32.mrf.mxu0
  %v2300 = vadd.f32 0.0, %v2299
  %v2301 = vpop.f32.mrf.mxu0
  %2302 = vmatprep.mubr.bf16.mxu0 %v1645
  %2303 = vmatmul.mubr.bf16.gmra.mxu0 %v1155
  %v2304 = vpop.f32.mrf.mxu0
  %v2305 = vadd.f32 0.0, %v2304
  %v2306 = vpop.f32.mrf.mxu0
  %v2307 = vpop.f32.mrf.mxu0
  %v2308 = vadd.f32 0.0, %v2307
  %v2309 = vpop.f32.mrf.mxu0
  %2310 = vmatprep.mubr.bf16.mxu0 %v1648
  %2311 = vmatmul.mubr.bf16.gmra.mxu0 %v1157
  %v2312 = vpop.f32.mrf.mxu0
  %v2313 = vadd.f32 0.0, %v2312
  %v2314 = vpop.f32.mrf.mxu0
  %v2315 = vpop.f32.mrf.mxu0
  %v2316 = vadd.f32 0.0, %v2315
  %v2317 = vpop.f32.mrf.mxu0
  %2318 = vmatprep.mubr.bf16.mxu0 %v1651
  %2319 = vmatmul.mubr.bf16.gmra.mxu0 %v1159
  %v2320 = vpop.f32.mrf.mxu0
  %v2321 = vadd.f32 0.0, %v2320
  %v2322 = vpop.f32.mrf.mxu0
  %v2323 = vpop.f32.mrf.mxu0
  %v2324 = vadd.f32 0.0, %v2323
  %v2325 = vpop.f32.mrf.mxu0
  %2326 = vmatprep.mubr.bf16.mxu0 %v1654
  %2327 = vmatmul.mubr.bf16.gmra.mxu0 %v1161
  %v2328 = vpop.f32.mrf.mxu0
  %v2329 = vadd.f32 0.0, %v2328
  %v2330 = vpop.f32.mrf.mxu0
  %v2331 = vpop.f32.mrf.mxu0
  %v2332 = vadd.f32 0.0, %v2331
  %v2333 = vpop.f32.mrf.mxu0
  %2334 = vmatprep.mubr.bf16.mxu0 %v1657
  %2335 = vmatmul.mubr.bf16.gmra.mxu0 %v1163
  %v2336 = vpop.f32.mrf.mxu0
  %v2337 = vadd.f32 0.0, %v2336
  %v2338 = vpop.f32.mrf.mxu0
  %v2339 = vpop.f32.mrf.mxu0
  %v2340 = vadd.f32 0.0, %v2339
  %v2341 = vpop.f32.mrf.mxu0
  %2342 = vmatprep.mubr.bf16.mxu0 %v1660
  %2343 = vmatmul.mubr.bf16.gmra.mxu0 %v1165
  %v2344 = vpop.f32.mrf.mxu0
  %v2345 = vadd.f32 0.0, %v2344
  %v2346 = vpop.f32.mrf.mxu0
  %v2347 = vpop.f32.mrf.mxu0
  %v2348 = vadd.f32 0.0, %v2347
  %v2349 = vpop.f32.mrf.mxu0
  %2350 = vmatprep.mubr.bf16.mxu0 %v1663
  %2351 = vmatmul.mubr.bf16.gmra.mxu0 %v1167
  %v2352 = vpop.f32.mrf.mxu0
  %v2353 = vadd.f32 0.0, %v2352
  %v2354 = vpop.f32.mrf.mxu0
  %v2355 = vpop.f32.mrf.mxu0
  %v2356 = vadd.f32 0.0, %v2355
  %v2357 = vpop.f32.mrf.mxu0
  %2358 = vmatprep.mubr.bf16.mxu0 %v1666
  %2359 = vmatmul.mubr.bf16.gmra.mxu0 %v1169
  %v2360 = vpop.f32.mrf.mxu0
  %v2361 = vadd.f32 0.0, %v2360
  %v2362 = vpop.f32.mrf.mxu0
  %v2363 = vpop.f32.mrf.mxu0
  %v2364 = vadd.f32 0.0, %v2363
  %v2365 = vpop.f32.mrf.mxu0
  %2366 = vmatprep.mubr.bf16.mxu0 %v1669
  %2367 = vmatmul.mubr.bf16.gmra.mxu0 %v1171
  %v2368 = vpop.f32.mrf.mxu0
  %v2369 = vadd.f32 0.0, %v2368
  %v2370 = vpop.f32.mrf.mxu0
  %v2371 = vpop.f32.mrf.mxu0
  %v2372 = vadd.f32 0.0, %v2371
  %v2373 = vpop.f32.mrf.mxu0
  %2374 = vmatprep.mubr.bf16.mxu0 %v1672
  %2375 = vmatmul.mubr.bf16.gmra.mxu0 %v1173
  %v2376 = vpop.f32.mrf.mxu0
  %v2377 = vadd.f32 0.0, %v2376
  %v2378 = vpop.f32.mrf.mxu0
  %v2379 = vpop.f32.mrf.mxu0
  %v2380 = vadd.f32 0.0, %v2379
  %v2381 = vpop.f32.mrf.mxu0
  %2382 = vmatprep.mubr.bf16.mxu0 %v1675
  %2383 = vmatmul.mubr.bf16.gmra.mxu0 %v1175
  %v2384 = vpop.f32.mrf.mxu0
  %v2385 = vadd.f32 0.0, %v2384
  %v2386 = vpop.f32.mrf.mxu0
  %v2387 = vpop.f32.mrf.mxu0
  %v2388 = vadd.f32 0.0, %v2387
  %v2389 = vpop.f32.mrf.mxu0
  %2390 = vmatprep.mubr.bf16.mxu0 %v1678
  %2391 = vmatmul.mubr.bf16.gmra.mxu0 %v1177
  %v2392 = vpop.f32.mrf.mxu0
  %v2393 = vadd.f32 0.0, %v2392
  %v2394 = vpop.f32.mrf.mxu0
  %v2395 = vpop.f32.mrf.mxu0
  %v2396 = vadd.f32 0.0, %v2395
  %v2397 = vpop.f32.mrf.mxu0
  %2398 = vmatprep.mubr.bf16.mxu0 %v1681
  %2399 = vmatmul.mubr.bf16.gmra.mxu0 %v1179
  %v2400 = vpop.f32.mrf.mxu0
  %v2401 = vadd.f32 0.0, %v2400
  %v2402 = vpop.f32.mrf.mxu0
  %v2403 = vpop.f32.mrf.mxu0
  %v2404 = vadd.f32 0.0, %v2403
  %v2405 = vpop.f32.mrf.mxu0
  %2406 = vmatprep.mubr.bf16.mxu0 %v1684
  %2407 = vmatmul.mubr.bf16.gmra.mxu0 %v1181
  %v2408 = vpop.f32.mrf.mxu0
  %v2409 = vadd.f32 0.0, %v2408
  %v2410 = vpop.f32.mrf.mxu0
  %v2411 = vpop.f32.mrf.mxu0
  %v2412 = vadd.f32 0.0, %v2411
  %v2413 = vpop.f32.mrf.mxu0
  %2414 = vmatprep.mubr.bf16.mxu0 %v1687
  %2415 = vmatmul.mubr.bf16.gmra.mxu0 %v1183
  %v2416 = vpop.f32.mrf.mxu0
  %v2417 = vadd.f32 0.0, %v2416
  %v2418 = vpop.f32.mrf.mxu0
  %v2419 = vpop.f32.mrf.mxu0
  %v2420 = vadd.f32 0.0, %v2419
  %v2421 = vpop.f32.mrf.mxu0
  %2422 = vmatprep.mubr.bf16.mxu0 %v1690
  %2423 = vmatmul.mubr.bf16.gmra.mxu0 %v1185
  %v2424 = vpop.f32.mrf.mxu0
  %v2425 = vadd.f32 0.0, %v2424
  %v2426 = vpop.f32.mrf.mxu0
  %v2427 = vpop.f32.mrf.mxu0
  %v2428 = vadd.f32 0.0, %v2427
  %v2429 = vpop.f32.mrf.mxu0
  %2430 = vmatprep.mubr.bf16.mxu0 %v1693
  %2431 = vmatmul.mubr.bf16.gmra.mxu0 %v1187
  %v2432 = vpop.f32.mrf.mxu0
  %v2433 = vadd.f32 0.0, %v2432
  %v2434 = vpop.f32.mrf.mxu0
  %v2435 = vpop.f32.mrf.mxu0
  %v2436 = vadd.f32 0.0, %v2435
  %v2437 = vpop.f32.mrf.mxu0
  %2438 = vmatprep.mubr.bf16.mxu0 %v1696
  %2439 = vmatmul.mubr.bf16.gmra.mxu0 %v1189
  %v2440 = vpop.f32.mrf.mxu0
  %v2441 = vadd.f32 0.0, %v2440
  %v2442 = vpop.f32.mrf.mxu0
  %v2443 = vpop.f32.mrf.mxu0
  %v2444 = vadd.f32 0.0, %v2443
  %v2445 = vpop.f32.mrf.mxu0
  %2446 = vmatprep.mubr.bf16.mxu0 %v1699
  %2447 = vmatmul.mubr.bf16.gmra.mxu0 %v1191
  %v2448 = vpop.f32.mrf.mxu0
  %v2449 = vadd.f32 0.0, %v2448
  %v2450 = vpop.f32.mrf.mxu0
  %v2451 = vpop.f32.mrf.mxu0
  %v2452 = vadd.f32 0.0, %v2451
  %v2453 = vpop.f32.mrf.mxu0
  %2454 = vmatprep.mubr.bf16.mxu0 %v1702
  %2455 = vmatmul.mubr.bf16.gmra.mxu0 %v1193
  %v2456 = vpop.f32.mrf.mxu0
  %v2457 = vadd.f32 0.0, %v2456
  %v2458 = vpop.f32.mrf.mxu0
  %v2459 = vpop.f32.mrf.mxu0
  %v2460 = vadd.f32 0.0, %v2459
  %v2461 = vpop.f32.mrf.mxu0
  %2462 = vmatprep.mubr.bf16.mxu0 %v1705
  %2463 = vmatmul.mubr.bf16.gmra.mxu0 %v1195
  %v2464 = vpop.f32.mrf.mxu0
  %v2465 = vadd.f32 0.0, %v2464
  %v2466 = vpop.f32.mrf.mxu0
  %v2467 = vpop.f32.mrf.mxu0
  %v2468 = vadd.f32 0.0, %v2467
  %v2469 = vpop.f32.mrf.mxu0
  %2470 = vmatprep.mubr.bf16.mxu0 %v1708
  %2471 = vmatmul.mubr.bf16.gmra.mxu0 %v1197
  %v2472 = vpop.f32.mrf.mxu0
  %v2473 = vadd.f32 0.0, %v2472
  %v2474 = vpop.f32.mrf.mxu0
  %v2475 = vpop.f32.mrf.mxu0
  %v2476 = vadd.f32 0.0, %v2475
  %v2477 = vpop.f32.mrf.mxu0
  %2478 = vmatprep.mubr.bf16.mxu0 %v1711
  %2479 = vmatmul.mubr.bf16.gmra.mxu0 %v1199
  %v2480 = vpop.f32.mrf.mxu0
  %v2481 = vadd.f32 0.0, %v2480
  %v2482 = vpop.f32.mrf.mxu0
  %v2483 = vpop.f32.mrf.mxu0
  %v2484 = vadd.f32 0.0, %v2483
  %v2485 = vpop.f32.mrf.mxu0
  %2486 = vmatprep.mubr.bf16.mxu0 %v1714
  %2487 = vmatmul.mubr.bf16.gmra.mxu0 %v1201
  %v2488 = vpop.f32.mrf.mxu0
  %v2489 = vadd.f32 0.0, %v2488
  %v2490 = vpop.f32.mrf.mxu0
  %v2491 = vpop.f32.mrf.mxu0
  %v2492 = vadd.f32 0.0, %v2491
  %v2493 = vpop.f32.mrf.mxu0
  %2494 = vmatprep.mubr.bf16.mxu0 %v1717
  %2495 = vmatmul.mubr.bf16.gmra.mxu0 %v1203
  %v2496 = vpop.f32.mrf.mxu0
  %v2497 = vadd.f32 0.0, %v2496
  %v2498 = vpop.f32.mrf.mxu0
  %v2499 = vpop.f32.mrf.mxu0
  %v2500 = vadd.f32 0.0, %v2499
  %v2501 = vpop.f32.mrf.mxu0
  %2502 = vmatprep.mubr.bf16.mxu0 %v1720
  %2503 = vmatmul.mubr.bf16.gmra.mxu0 %v1205
  %v2504 = vpop.f32.mrf.mxu0
  %v2505 = vadd.f32 0.0, %v2504
  %v2506 = vpop.f32.mrf.mxu0
  %v2507 = vpop.f32.mrf.mxu0
  %v2508 = vadd.f32 0.0, %v2507
  %v2509 = vpop.f32.mrf.mxu0
  %2510 = vmatprep.mubr.bf16.mxu0 %v1723
  %2511 = vmatmul.mubr.bf16.gmra.mxu0 %v1207
  %v2512 = vpop.f32.mrf.mxu0
  %v2513 = vadd.f32 0.0, %v2512
  %v2514 = vpop.f32.mrf.mxu0
  %v2515 = vpop.f32.mrf.mxu0
  %v2516 = vadd.f32 0.0, %v2515
  %v2517 = vpop.f32.mrf.mxu0
  %2518 = vmatprep.mubr.bf16.mxu0 %v1726
  %2519 = vmatmul.mubr.bf16.gmra.mxu0 %v1209
  %v2520 = vpop.f32.mrf.mxu0
  %v2521 = vadd.f32 0.0, %v2520
  %v2522 = vpop.f32.mrf.mxu0
  %v2523 = vpop.f32.mrf.mxu0
  %v2524 = vadd.f32 0.0, %v2523
  %v2525 = vpop.f32.mrf.mxu0
  %2526 = vmatprep.mubr.bf16.mxu0 %v1729
  %2527 = vmatmul.mubr.bf16.gmra.mxu0 %v1211
  %v2528 = vpop.f32.mrf.mxu0
  %v2529 = vadd.f32 0.0, %v2528
  %v2530 = vpop.f32.mrf.mxu0
  %v2531 = vpop.f32.mrf.mxu0
  %v2532 = vadd.f32 0.0, %v2531
  %v2533 = vpop.f32.mrf.mxu0
  %2534 = vmatprep.mubr.bf16.mxu0 %v1732
  %2535 = vmatmul.mubr.bf16.gmra.mxu0 %v1213
  %v2536 = vpop.f32.mrf.mxu0
  %v2537 = vadd.f32 0.0, %v2536
  %v2538 = vpop.f32.mrf.mxu0
  %v2539 = vpop.f32.mrf.mxu0
  %v2540 = vadd.f32 0.0, %v2539
  %v2541 = vpop.f32.mrf.mxu0
  %2542 = vmatprep.mubr.bf16.mxu0 %v1735
  %2543 = vmatmul.mubr.bf16.gmra.mxu0 %v1215
  %v2544 = vpop.f32.mrf.mxu0
  %v2545 = vadd.f32 0.0, %v2544
  %v2546 = vpop.f32.mrf.mxu0
  %v2547 = vpop.f32.mrf.mxu0
  %v2548 = vadd.f32 0.0, %v2547
  %v2549 = vpop.f32.mrf.mxu0
  %2550 = vmatprep.mubr.bf16.mxu0 %v1738
  %2551 = vmatmul.mubr.bf16.gmra.mxu0 %v1217
  %v2552 = vpop.f32.mrf.mxu0
  %v2553 = vadd.f32 0.0, %v2552
  %v2554 = vpop.f32.mrf.mxu0
  %v2555 = vpop.f32.mrf.mxu0
  %v2556 = vadd.f32 0.0, %v2555
  %v2557 = vpop.f32.mrf.mxu0
  %2558 = vmatprep.mubr.bf16.mxu0 %v1741
  %2559 = vmatmul.mubr.bf16.gmra.mxu0 %v1219
  %v2560 = vpop.f32.mrf.mxu0
  %v2561 = vadd.f32 0.0, %v2560
  %v2562 = vpop.f32.mrf.mxu0
  %v2563 = vpop.f32.mrf.mxu0
  %v2564 = vadd.f32 0.0, %v2563
  %v2565 = vpop.f32.mrf.mxu0
  %2566 = vmatprep.mubr.bf16.mxu0 %v1744
  %2567 = vmatmul.mubr.bf16.gmra.mxu0 %v1221
  %v2568 = vpop.f32.mrf.mxu0
  %v2569 = vadd.f32 0.0, %v2568
  %v2570 = vpop.f32.mrf.mxu0
  %v2571 = vpop.f32.mrf.mxu0
  %v2572 = vadd.f32 0.0, %v2571
  %v2573 = vpop.f32.mrf.mxu0
  %2574 = vmatprep.mubr.bf16.mxu0 %v1747
  %2575 = vmatmul.mubr.bf16.gmra.mxu0 %v1223
  %v2576 = vpop.f32.mrf.mxu0
  %v2577 = vadd.f32 0.0, %v2576
  %v2578 = vpop.f32.mrf.mxu0
  %v2579 = vpop.f32.mrf.mxu0
  %v2580 = vadd.f32 0.0, %v2579
  %v2581 = vpop.f32.mrf.mxu0
  %2582 = vmatprep.mubr.bf16.mxu0 %v1750
  %2583 = vmatmul.mubr.bf16.gmra.mxu0 %v1225
  %v2584 = vpop.f32.mrf.mxu0
  %v2585 = vadd.f32 0.0, %v2584
  %v2586 = vpop.f32.mrf.mxu0
  %v2587 = vpop.f32.mrf.mxu0
  %v2588 = vadd.f32 0.0, %v2587
  %v2589 = vpop.f32.mrf.mxu0
  %2590 = vmatprep.mubr.bf16.mxu0 %v1753
  %2591 = vmatmul.mubr.bf16.gmra.mxu0 %v1227
  %v2592 = vpop.f32.mrf.mxu0
  %v2593 = vadd.f32 0.0, %v2592
  %v2594 = vpop.f32.mrf.mxu0
  %v2595 = vpop.f32.mrf.mxu0
  %v2596 = vadd.f32 0.0, %v2595
  %v2597 = vpop.f32.mrf.mxu0
  %2598 = vmatprep.mubr.bf16.mxu0 %v1756
  %2599 = vmatmul.mubr.bf16.gmra.mxu0 %v1229
  %v2600 = vpop.f32.mrf.mxu0
  %v2601 = vadd.f32 0.0, %v2600
  %v2602 = vpop.f32.mrf.mxu0
  %v2603 = vpop.f32.mrf.mxu0
  %v2604 = vadd.f32 0.0, %v2603
  %v2605 = vpop.f32.mrf.mxu0
  %2606 = vmatprep.mubr.bf16.mxu0 %v1759
  %2607 = vmatmul.mubr.bf16.gmra.mxu0 %v1231
  %v2608 = vpop.f32.mrf.mxu0
  %v2609 = vadd.f32 0.0, %v2608
  %v2610 = vpop.f32.mrf.mxu0
  %v2611 = vpop.f32.mrf.mxu0
  %v2612 = vadd.f32 0.0, %v2611
  %v2613 = vpop.f32.mrf.mxu0
  %2614 = vmatprep.mubr.bf16.mxu0 %v1762
  %2615 = vmatmul.mubr.bf16.gmra.mxu0 %v1233
  %v2616 = vpop.f32.mrf.mxu0
  %v2617 = vadd.f32 0.0, %v2616
  %v2618 = vpop.f32.mrf.mxu0
  %v2619 = vpop.f32.mrf.mxu0
  %v2620 = vadd.f32 0.0, %v2619
  %v2621 = vpop.f32.mrf.mxu0
  %2622 = vmatprep.mubr.bf16.mxu0 %v1765
  %2623 = vmatmul.mubr.bf16.gmra.mxu0 %v1235
  %v2624 = vpop.f32.mrf.mxu0
  %v2625 = vadd.f32 0.0, %v2624
  %v2626 = vpop.f32.mrf.mxu0
  %v2627 = vpop.f32.mrf.mxu0
  %v2628 = vadd.f32 0.0, %v2627
  %v2629 = vpop.f32.mrf.mxu0
  %2630 = vmatprep.mubr.bf16.mxu0 %v1768
  %2631 = vmatmul.mubr.bf16.gmra.mxu0 %v1237
  %v2632 = vpop.f32.mrf.mxu0
  %v2633 = vadd.f32 0.0, %v2632
  %v2634 = vpop.f32.mrf.mxu0
  %v2635 = vpop.f32.mrf.mxu0
  %v2636 = vadd.f32 0.0, %v2635
  %v2637 = vpop.f32.mrf.mxu0
  %2638 = vmatprep.mubr.bf16.mxu0 %v1771
  %2639 = vmatmul.mubr.bf16.gmra.mxu0 %v1239
  %v2640 = vpop.f32.mrf.mxu0
  %v2641 = vadd.f32 0.0, %v2640
  %v2642 = vpop.f32.mrf.mxu0
  %v2643 = vpop.f32.mrf.mxu0
  %v2644 = vadd.f32 0.0, %v2643
  %v2645 = vpop.f32.mrf.mxu0
  %2646 = vmatprep.mubr.bf16.mxu0 %v1774
  %2647 = vmatmul.mubr.bf16.gmra.mxu0 %v1241
  %v2648 = vpop.f32.mrf.mxu0
  %v2649 = vadd.f32 0.0, %v2648
  %v2650 = vpop.f32.mrf.mxu0
  %v2651 = vpop.f32.mrf.mxu0
  %v2652 = vadd.f32 0.0, %v2651
  %v2653 = vpop.f32.mrf.mxu0
  %2654 = vmatprep.mubr.bf16.mxu0 %v1777
  %2655 = vmatmul.mubr.bf16.gmra.mxu0 %v1243
  %v2656 = vpop.f32.mrf.mxu0
  %v2657 = vadd.f32 0.0, %v2656
  %v2658 = vpop.f32.mrf.mxu0
  %v2659 = vpop.f32.mrf.mxu0
  %v2660 = vadd.f32 0.0, %v2659
  %v2661 = vpop.f32.mrf.mxu0
  %2662 = vmatprep.mubr.bf16.mxu0 %v1780
  %2663 = vmatmul.mubr.bf16.gmra.mxu0 %v1245
  %v2664 = vpop.f32.mrf.mxu0
  %v2665 = vadd.f32 0.0, %v2664
  %v2666 = vpop.f32.mrf.mxu0
  %v2667 = vpop.f32.mrf.mxu0
  %v2668 = vadd.f32 0.0, %v2667
  %v2669 = vpop.f32.mrf.mxu0
  %2670 = vmatprep.mubr.bf16.mxu0 %v1783
  %2671 = vmatmul.mubr.bf16.gmra.mxu0 %v1247
  %v2672 = vpop.f32.mrf.mxu0
  %v2673 = vadd.f32 0.0, %v2672
  %v2674 = vpop.f32.mrf.mxu0
  %v2675 = vpop.f32.mrf.mxu0
  %v2676 = vadd.f32 0.0, %v2675
  %v2677 = vpop.f32.mrf.mxu0
  %2678 = vmatprep.mubr.bf16.mxu0 %v1786
  %2679 = vmatmul.mubr.bf16.gmra.mxu0 %v1249
  %v2680 = vpop.f32.mrf.mxu0
  %v2681 = vadd.f32 0.0, %v2680
  %v2682 = vpop.f32.mrf.mxu0
  %v2683 = vpop.f32.mrf.mxu0
  %v2684 = vadd.f32 0.0, %v2683
  %v2685 = vpop.f32.mrf.mxu0
  %2686 = vmatprep.mubr.bf16.mxu0 %v1789
  %2687 = vmatmul.mubr.bf16.gmra.mxu0 %v1251
  %v2688 = vpop.f32.mrf.mxu0
  %v2689 = vadd.f32 0.0, %v2688
  %v2690 = vpop.f32.mrf.mxu0
  %v2691 = vpop.f32.mrf.mxu0
  %v2692 = vadd.f32 0.0, %v2691
  %v2693 = vpop.f32.mrf.mxu0
  %2694 = vmatprep.mubr.bf16.mxu0 %v1792
  %2695 = vmatmul.mubr.bf16.gmra.mxu0 %v1253
  %v2696 = vpop.f32.mrf.mxu0
  %v2697 = vadd.f32 0.0, %v2696
  %v2698 = vpop.f32.mrf.mxu0
  %v2699 = vpop.f32.mrf.mxu0
  %v2700 = vadd.f32 0.0, %v2699
  %v2701 = vpop.f32.mrf.mxu0
  %2702 = vmatprep.mubr.bf16.mxu0 %v1795
  %2703 = vmatmul.mubr.bf16.gmra.mxu0 %v1255
  %v2704 = vpop.f32.mrf.mxu0
  %v2705 = vadd.f32 0.0, %v2704
  %v2706 = vpop.f32.mrf.mxu0
  %v2707 = vpop.f32.mrf.mxu0
  %v2708 = vadd.f32 0.0, %v2707
  %v2709 = vpop.f32.mrf.mxu0
  %2710 = vmatprep.mubr.bf16.mxu0 %v1798
  %2711 = vmatmul.mubr.bf16.gmra.mxu0 %v1257
  %v2712 = vpop.f32.mrf.mxu0
  %v2713 = vadd.f32 0.0, %v2712
  %v2714 = vpop.f32.mrf.mxu0
  %v2715 = vpop.f32.mrf.mxu0
  %v2716 = vadd.f32 0.0, %v2715
  %v2717 = vpop.f32.mrf.mxu0
  %2718 = vmatprep.mubr.bf16.mxu0 %v1801
  %2719 = vmatmul.mubr.bf16.gmra.mxu0 %v1259
  %v2720 = vpop.f32.mrf.mxu0
  %v2721 = vadd.f32 0.0, %v2720
  %v2722 = vpop.f32.mrf.mxu0
  %v2723 = vpop.f32.mrf.mxu0
  %v2724 = vadd.f32 0.0, %v2723
  %v2725 = vpop.f32.mrf.mxu0
  %2726 = vmatprep.mubr.bf16.mxu0 %v1804
  %2727 = vmatmul.mubr.bf16.gmra.mxu0 %v1261
  %v2728 = vpop.f32.mrf.mxu0
  %v2729 = vadd.f32 0.0, %v2728
  %v2730 = vpop.f32.mrf.mxu0
  %v2731 = vpop.f32.mrf.mxu0
  %v2732 = vadd.f32 0.0, %v2731
  %v2733 = vpop.f32.mrf.mxu0
  %2734 = vmatprep.mubr.bf16.mxu0 %v1807
  %2735 = vmatmul.mubr.bf16.gmra.mxu0 %v1263
  %v2736 = vpop.f32.mrf.mxu0
  %v2737 = vadd.f32 0.0, %v2736
  %v2738 = vpop.f32.mrf.mxu0
  %v2739 = vpop.f32.mrf.mxu0
  %v2740 = vadd.f32 0.0, %v2739
  %v2741 = vpop.f32.mrf.mxu0
  %2742 = vmatprep.mubr.bf16.mxu0 %v1810
  %2743 = vmatmul.mubr.bf16.gmra.mxu0 %v1265
  %v2744 = vpop.f32.mrf.mxu0
  %v2745 = vadd.f32 0.0, %v2744
  %v2746 = vpop.f32.mrf.mxu0
  %v2747 = vpop.f32.mrf.mxu0
  %v2748 = vadd.f32 0.0, %v2747
  %v2749 = vpop.f32.mrf.mxu0
  %2750 = vmatprep.mubr.bf16.mxu0 %v1813
  %2751 = vmatmul.mubr.bf16.gmra.mxu0 %v1267
  %v2752 = vpop.f32.mrf.mxu0
  %v2753 = vadd.f32 0.0, %v2752
  %v2754 = vpop.f32.mrf.mxu0
  %v2755 = vpop.f32.mrf.mxu0
  %v2756 = vadd.f32 0.0, %v2755
  %v2757 = vpop.f32.mrf.mxu0
  %2758 = vmatprep.mubr.bf16.mxu0 %v1816
  %2759 = vmatmul.mubr.bf16.gmra.mxu0 %v1269
  %v2760 = vpop.f32.mrf.mxu0
  %v2761 = vadd.f32 0.0, %v2760
  %v2762 = vpop.f32.mrf.mxu0
  %v2763 = vpop.f32.mrf.mxu0
  %v2764 = vadd.f32 0.0, %v2763
  %v2765 = vpop.f32.mrf.mxu0
  %2766 = vmatprep.mubr.bf16.mxu0 %v1819
  %2767 = vmatmul.mubr.bf16.gmra.mxu0 %v1271
  %v2768 = vpop.f32.mrf.mxu0
  %v2769 = vadd.f32 0.0, %v2768
  %v2770 = vpop.f32.mrf.mxu0
  %v2771 = vpop.f32.mrf.mxu0
  %v2772 = vadd.f32 0.0, %v2771
  %v2773 = vpop.f32.mrf.mxu0
  %2774 = vmatprep.mubr.bf16.mxu0 %v1822
  %2775 = vmatmul.mubr.bf16.gmra.mxu0 %v1273
  %v2776 = vpop.f32.mrf.mxu0
  %v2777 = vadd.f32 0.0, %v2776
  %v2778 = vpop.f32.mrf.mxu0
  %v2779 = vpop.f32.mrf.mxu0
  %v2780 = vadd.f32 0.0, %v2779
  %v2781 = vpop.f32.mrf.mxu0
  %2782 = vmatprep.mubr.bf16.mxu0 %v1825
  %2783 = vmatmul.mubr.bf16.gmra.mxu0 %v1275
  %v2784 = vpop.f32.mrf.mxu0
  %v2785 = vadd.f32 0.0, %v2784
  %v2786 = vpop.f32.mrf.mxu0
  %v2787 = vpop.f32.mrf.mxu0
  %v2788 = vadd.f32 0.0, %v2787
  %v2789 = vpop.f32.mrf.mxu0
  %2790 = vmatprep.mubr.bf16.mxu0 %v1828
  %2791 = vmatmul.mubr.bf16.gmra.mxu0 %v1277
  %v2792 = vpop.f32.mrf.mxu0
  %v2793 = vadd.f32 0.0, %v2792
  %v2794 = vpop.f32.mrf.mxu0
  %v2795 = vpop.f32.mrf.mxu0
  %v2796 = vadd.f32 0.0, %v2795
  %v2797 = vpop.f32.mrf.mxu0
  %2798 = vmatprep.mubr.bf16.mxu0 %v1831
  %2799 = vmatmul.mubr.bf16.gmra.mxu0 %v1279
  %v2800 = vpop.f32.mrf.mxu0
  %v2801 = vadd.f32 0.0, %v2800
  %v2802 = vpop.f32.mrf.mxu0
  %v2803 = vpop.f32.mrf.mxu0
  %v2804 = vadd.f32 0.0, %v2803
  %v2805 = vpop.f32.mrf.mxu0
  %2806 = vmatprep.mubr.bf16.mxu0 %v1834
  %2807 = vmatmul.mubr.bf16.gmra.mxu0 %v1281
  %v2808 = vpop.f32.mrf.mxu0
  %v2809 = vadd.f32 0.0, %v2808
  %v2810 = vpop.f32.mrf.mxu0
  %v2811 = vpop.f32.mrf.mxu0
  %v2812 = vadd.f32 0.0, %v2811
  %v2813 = vpop.f32.mrf.mxu0
  %2814 = vmatprep.mubr.bf16.mxu0 %v1837
  %2815 = vmatmul.mubr.bf16.gmra.mxu0 %v1283
  %v2816 = vpop.f32.mrf.mxu0
  %v2817 = vadd.f32 0.0, %v2816
  %v2818 = vpop.f32.mrf.mxu0
  %v2819 = vpop.f32.mrf.mxu0
  %v2820 = vadd.f32 0.0, %v2819
  %v2821 = vpop.f32.mrf.mxu0
  %2822 = vmatprep.mubr.bf16.mxu0 %v1840
  %2823 = vmatmul.mubr.bf16.gmra.mxu0 %v1285
  %v2824 = vpop.f32.mrf.mxu0
  %v2825 = vadd.f32 0.0, %v2824
  %v2826 = vpop.f32.mrf.mxu0
  %v2827 = vpop.f32.mrf.mxu0
  %v2828 = vadd.f32 0.0, %v2827
  %v2829 = vpop.f32.mrf.mxu0
  %2830 = vmatprep.mubr.bf16.mxu0 %v1843
  %2831 = vmatmul.mubr.bf16.gmra.mxu0 %v1287
  %v2832 = vpop.f32.mrf.mxu0
  %v2833 = vadd.f32 0.0, %v2832
  %v2834 = vpop.f32.mrf.mxu0
  %v2835 = vpop.f32.mrf.mxu0
  %v2836 = vadd.f32 0.0, %v2835
  %v2837 = vpop.f32.mrf.mxu0
  %2838 = vmatprep.mubr.bf16.mxu0 %v1846
  %2839 = vmatmul.mubr.bf16.gmra.mxu0 %v1289
  %v2840 = vpop.f32.mrf.mxu0
  %v2841 = vadd.f32 0.0, %v2840
  %v2842 = vpop.f32.mrf.mxu0
  %v2843 = vpop.f32.mrf.mxu0
  %v2844 = vadd.f32 0.0, %v2843
  %v2845 = vpop.f32.mrf.mxu0
  %2846 = vmatprep.mubr.bf16.mxu0 %v1849
  %2847 = vmatmul.mubr.bf16.gmra.mxu0 %v1291
  %v2848 = vpop.f32.mrf.mxu0
  %v2849 = vadd.f32 0.0, %v2848
  %v2850 = vpop.f32.mrf.mxu0
  %v2851 = vpop.f32.mrf.mxu0
  %v2852 = vadd.f32 0.0, %v2851
  %v2853 = vpop.f32.mrf.mxu0
  %2854 = vmatprep.mubr.bf16.mxu0 %v1852
  %2855 = vmatmul.mubr.bf16.gmra.mxu0 %v1293
  %v2856 = vpop.f32.mrf.mxu0
  %v2857 = vadd.f32 0.0, %v2856
  %v2858 = vpop.f32.mrf.mxu0
  %v2859 = vpop.f32.mrf.mxu0
  %v2860 = vadd.f32 0.0, %v2859
  %v2861 = vpop.f32.mrf.mxu0
  %2862 = vmatprep.mubr.bf16.mxu0 %v1855
  %2863 = vmatmul.mubr.bf16.gmra.mxu0 %v1295
  %v2864 = vpop.f32.mrf.mxu0
  %v2865 = vadd.f32 0.0, %v2864
  %v2866 = vpop.f32.mrf.mxu0
  %v2867 = vpop.f32.mrf.mxu0
  %v2868 = vadd.f32 0.0, %v2867
  %v2869 = vpop.f32.mrf.mxu0
  %2870 = vmatprep.mubr.bf16.mxu0 %v1858
  %2871 = vmatmul.mubr.bf16.gmra.mxu0 %v1297
  %v2872 = vpop.f32.mrf.mxu0
  %v2873 = vadd.f32 0.0, %v2872
  %v2874 = vpop.f32.mrf.mxu0
  %v2875 = vpop.f32.mrf.mxu0
  %v2876 = vadd.f32 0.0, %v2875
  %v2877 = vpop.f32.mrf.mxu0
  %2878 = vmatprep.mubr.bf16.mxu0 %v1861
  %2879 = vmatmul.mubr.bf16.gmra.mxu0 %v1299
  %v2880 = vpop.f32.mrf.mxu0
  %v2881 = vadd.f32 0.0, %v2880
  %v2882 = vpop.f32.mrf.mxu0
  %v2883 = vpop.f32.mrf.mxu0
  %v2884 = vadd.f32 0.0, %v2883
  %v2885 = vpop.f32.mrf.mxu0
  %2886 = vmatprep.mubr.bf16.mxu0 %v1864
  %2887 = vmatmul.mubr.bf16.gmra.mxu0 %v1301
  %v2888 = vpop.f32.mrf.mxu0
  %v2889 = vadd.f32 0.0, %v2888
  %v2890 = vpop.f32.mrf.mxu0
  %v2891 = vpop.f32.mrf.mxu0
  %v2892 = vadd.f32 0.0, %v2891
  %v2893 = vpop.f32.mrf.mxu0
  %2894 = vmatprep.mubr.bf16.mxu0 %v1867
  %2895 = vmatmul.mubr.bf16.gmra.mxu0 %v1303
  %v2896 = vpop.f32.mrf.mxu0
  %v2897 = vadd.f32 0.0, %v2896
  %v2898 = vpop.f32.mrf.mxu0
  %v2899 = vpop.f32.mrf.mxu0
  %v2900 = vadd.f32 0.0, %v2899
  %v2901 = vpop.f32.mrf.mxu0
  %2902 = vmatprep.mubr.bf16.mxu0 %v1870
  %2903 = vmatmul.mubr.bf16.gmra.mxu0 %v1305
  %v2904 = vpop.f32.mrf.mxu0
  %v2905 = vadd.f32 0.0, %v2904
  %v2906 = vpop.f32.mrf.mxu0
  %v2907 = vpop.f32.mrf.mxu0
  %v2908 = vadd.f32 0.0, %v2907
  %v2909 = vpop.f32.mrf.mxu0
  %2910 = vmatprep.mubr.bf16.mxu0 %v1873
  %2911 = vmatmul.mubr.bf16.gmra.mxu0 %v1307
  %v2912 = vpop.f32.mrf.mxu0
  %v2913 = vadd.f32 0.0, %v2912
  %v2914 = vpop.f32.mrf.mxu0
  %v2915 = vpop.f32.mrf.mxu0
  %v2916 = vadd.f32 0.0, %v2915
  %v2917 = vpop.f32.mrf.mxu0
  %2918 = vmatprep.mubr.bf16.mxu0 %v1876
  %2919 = vmatmul.mubr.bf16.gmra.mxu0 %v1309
  %v2920 = vpop.f32.mrf.mxu0
  %v2921 = vadd.f32 0.0, %v2920
  %v2922 = vpop.f32.mrf.mxu0
  %v2923 = vpop.f32.mrf.mxu0
  %v2924 = vadd.f32 0.0, %v2923
  %v2925 = vpop.f32.mrf.mxu0
  %2926 = vmatprep.mubr.bf16.mxu0 %v1879
  %2927 = vmatmul.mubr.bf16.gmra.mxu0 %v1311
  %v2928 = vpop.f32.mrf.mxu0
  %v2929 = vadd.f32 0.0, %v2928
  %v2930 = vpop.f32.mrf.mxu0
  %v2931 = vpop.f32.mrf.mxu0
  %v2932 = vadd.f32 0.0, %v2931
  %v2933 = vpop.f32.mrf.mxu0
  %2934 = vmatprep.mubr.bf16.mxu0 %v1882
  %2935 = vmatmul.mubr.bf16.gmra.mxu0 %v1313
  %v2936 = vpop.f32.mrf.mxu0
  %v2937 = vadd.f32 0.0, %v2936
  %v2938 = vpop.f32.mrf.mxu0
  %v2939 = vpop.f32.mrf.mxu0
  %v2940 = vadd.f32 0.0, %v2939
  %v2941 = vpop.f32.mrf.mxu0
  %2942 = vmatprep.mubr.bf16.mxu0 %v1885
  %2943 = vmatmul.mubr.bf16.gmra.mxu0 %v1315
  %v2944 = vpop.f32.mrf.mxu0
  %v2945 = vadd.f32 0.0, %v2944
  %v2946 = vpop.f32.mrf.mxu0
  %v2947 = vpop.f32.mrf.mxu0
  %v2948 = vadd.f32 0.0, %v2947
  %v2949 = vpop.f32.mrf.mxu0
  %2950 = vdwg.mxu0
  %v2951 = vadd.f32 %v1929, %v1932
  %v2952 = vadd.f32 %v2951, %v1937
  %v2953 = vadd.f32 %v2952, %v1940
  %v2954 = vadd.f32 %v2953, %v1945
  %v2955 = vadd.f32 %v2954, %v1948
  %v2956 = vadd.f32 %v2955, %v1953
  %v2957 = vadd.f32 %v2956, %v1956
  %v2958 = vadd.f32 %v2957, %v1961
  %v2959 = vadd.f32 %v2958, %v1964
  %v2960 = vadd.f32 %v2959, %v1969
  %v2961 = vadd.f32 %v2960, %v1972
  %v2962 = vadd.f32 %v2961, %v1977
  %v2963 = vadd.f32 %v2962, %v1980
  %v2964 = vadd.f32 %v2963, %v1985
  %v2965 = vadd.f32 %v2964, %v1988
  %v2966 = vadd.f32 %v2965, %v1993
  %v2967 = vadd.f32 %v2966, %v1996
  %v2968 = vadd.f32 %v2967, %v2001
  %v2969 = vadd.f32 %v2968, %v2004
  %v2970 = vadd.f32 %v2969, %v2009
  %v2971 = vadd.f32 %v2970, %v2012
  %v2972 = vadd.f32 %v2971, %v2017
  %v2973 = vadd.f32 %v2972, %v2020
  %v2974 = vadd.f32 %v2973, %v2025
  %v2975 = vadd.f32 %v2974, %v2028
  %v2976 = vadd.f32 %v2975, %v2033
  %v2977 = vadd.f32 %v2976, %v2036
  %v2978 = vadd.f32 %v2977, %v2041
  %v2979 = vadd.f32 %v2978, %v2044
  %v2980 = vadd.f32 %v2979, %v2049
  %v2981 = vadd.f32 %v2980, %v2052
  %v2982 = vadd.f32 %v2981, %v2057
  %v2983 = vadd.f32 %v2982, %v2060
  %v2984 = vadd.f32 %v2983, %v2065
  %v2985 = vadd.f32 %v2984, %v2068
  %v2986 = vadd.f32 %v2985, %v2073
  %v2987 = vadd.f32 %v2986, %v2076
  %v2988 = vadd.f32 %v2987, %v2081
  %v2989 = vadd.f32 %v2988, %v2084
  %v2990 = vadd.f32 %v2989, %v2089
  %v2991 = vadd.f32 %v2990, %v2092
  %v2992 = vadd.f32 %v2991, %v2097
  %v2993 = vadd.f32 %v2992, %v2100
  %v2994 = vadd.f32 %v2993, %v2105
  %v2995 = vadd.f32 %v2994, %v2108
  %v2996 = vadd.f32 %v2995, %v2113
  %v2997 = vadd.f32 %v2996, %v2116
  %v2998 = vadd.f32 %v2997, %v2121
  %v2999 = vadd.f32 %v2998, %v2124
  %v3000 = vadd.f32 %v2999, %v2129
  %v3001 = vadd.f32 %v3000, %v2132
  %v3002 = vadd.f32 %v3001, %v2137
  %v3003 = vadd.f32 %v3002, %v2140
  %v3004 = vadd.f32 %v3003, %v2145
  %v3005 = vadd.f32 %v3004, %v2148
  %v3006 = vadd.f32 %v3005, %v2153
  %v3007 = vadd.f32 %v3006, %v2156
  %v3008 = vadd.f32 %v3007, %v2161
  %v3009 = vadd.f32 %v3008, %v2164
  %v3010 = vadd.f32 %v3009, %v2169
  %v3011 = vadd.f32 %v3010, %v2172
  %v3012 = vadd.f32 %v3011, %v2177
  %v3013 = vadd.f32 %v3012, %v2180
  %v3014 = vadd.f32 %v3013, %v2185
  %v3015 = vadd.f32 %v3014, %v2188
  %v3016 = vadd.f32 %v3015, %v2193
  %v3017 = vadd.f32 %v3016, %v2196
  %v3018 = vadd.f32 %v3017, %v2201
  %v3019 = vadd.f32 %v3018, %v2204
  %v3020 = vadd.f32 %v3019, %v2209
  %v3021 = vadd.f32 %v3020, %v2212
  %v3022 = vadd.f32 %v3021, %v2217
  %v3023 = vadd.f32 %v3022, %v2220
  %v3024 = vadd.f32 %v3023, %v2225
  %v3025 = vadd.f32 %v3024, %v2228
  %v3026 = vadd.f32 %v3025, %v2233
  %v3027 = vadd.f32 %v3026, %v2236
  %v3028 = vadd.f32 %v3027, %v2241
  %v3029 = vadd.f32 %v3028, %v2244
  %v3030 = vadd.f32 %v3029, %v2249
  %v3031 = vadd.f32 %v3030, %v2252
  %v3032 = vadd.f32 %v3031, %v2257
  %v3033 = vadd.f32 %v3032, %v2260
  %v3034 = vadd.f32 %v3033, %v2265
  %v3035 = vadd.f32 %v3034, %v2268
  %v3036 = vadd.f32 %v3035, %v2273
  %v3037 = vadd.f32 %v3036, %v2276
  %v3038 = vadd.f32 %v3037, %v2281
  %v3039 = vadd.f32 %v3038, %v2284
  %v3040 = vadd.f32 %v3039, %v2289
  %v3041 = vadd.f32 %v3040, %v2292
  %v3042 = vadd.f32 %v3041, %v2297
  %v3043 = vadd.f32 %v3042, %v2300
  %v3044 = vadd.f32 %v3043, %v2305
  %v3045 = vadd.f32 %v3044, %v2308
  %v3046 = vadd.f32 %v3045, %v2313
  %v3047 = vadd.f32 %v3046, %v2316
  %v3048 = vadd.f32 %v3047, %v2321
  %v3049 = vadd.f32 %v3048, %v2324
  %v3050 = vadd.f32 %v3049, %v2329
  %v3051 = vadd.f32 %v3050, %v2332
  %v3052 = vadd.f32 %v3051, %v2337
  %v3053 = vadd.f32 %v3052, %v2340
  %v3054 = vadd.f32 %v3053, %v2345
  %v3055 = vadd.f32 %v3054, %v2348
  %v3056 = vadd.f32 %v3055, %v2353
  %v3057 = vadd.f32 %v3056, %v2356
  %v3058 = vadd.f32 %v3057, %v2361
  %v3059 = vadd.f32 %v3058, %v2364
  %v3060 = vadd.f32 %v3059, %v2369
  %v3061 = vadd.f32 %v3060, %v2372
  %v3062 = vadd.f32 %v3061, %v2377
  %v3063 = vadd.f32 %v3062, %v2380
  %v3064 = vadd.f32 %v3063, %v2385
  %v3065 = vadd.f32 %v3064, %v2388
  %v3066 = vadd.f32 %v3065, %v2393
  %v3067 = vadd.f32 %v3066, %v2396
  %v3068 = vadd.f32 %v3067, %v2401
  %v3069 = vadd.f32 %v3068, %v2404
  %v3070 = vadd.f32 %v3069, %v2409
  %v3071 = vadd.f32 %v3070, %v2412
  %v3072 = vadd.f32 %v3071, %v2417
  %v3073 = vadd.f32 %v3072, %v2420
  %v3074 = vadd.f32 %v3073, %v2425
  %v3075 = vadd.f32 %v3074, %v2428
  %v3076 = vadd.f32 %v3075, %v2433
  %v3077 = vadd.f32 %v3076, %v2436
  %v3078 = vadd.f32 %v3077, %v2441
  %v3079 = vadd.f32 %v3078, %v2444
  %v3080 = vadd.f32 %v3079, %v2449
  %v3081 = vadd.f32 %v3080, %v2452
  %v3082 = vadd.f32 %v3081, %v2457
  %v3083 = vadd.f32 %v3082, %v2460
  %v3084 = vadd.f32 %v3083, %v2465
  %v3085 = vadd.f32 %v3084, %v2468
  %v3086 = vadd.f32 %v3085, %v2473
  %v3087 = vadd.f32 %v3086, %v2476
  %v3088 = vadd.f32 %v3087, %v2481
  %v3089 = vadd.f32 %v3088, %v2484
  %v3090 = vadd.f32 %v3089, %v2489
  %v3091 = vadd.f32 %v3090, %v2492
  %v3092 = vadd.f32 %v3091, %v2497
  %v3093 = vadd.f32 %v3092, %v2500
  %v3094 = vadd.f32 %v3093, %v2505
  %v3095 = vadd.f32 %v3094, %v2508
  %v3096 = vadd.f32 %v3095, %v2513
  %v3097 = vadd.f32 %v3096, %v2516
  %v3098 = vadd.f32 %v3097, %v2521
  %v3099 = vadd.f32 %v3098, %v2524
  %v3100 = vadd.f32 %v3099, %v2529
  %v3101 = vadd.f32 %v3100, %v2532
  %v3102 = vadd.f32 %v3101, %v2537
  %v3103 = vadd.f32 %v3102, %v2540
  %v3104 = vadd.f32 %v3103, %v2545
  %v3105 = vadd.f32 %v3104, %v2548
  %v3106 = vadd.f32 %v3105, %v2553
  %v3107 = vadd.f32 %v3106, %v2556
  %v3108 = vadd.f32 %v3107, %v2561
  %v3109 = vadd.f32 %v3108, %v2564
  %v3110 = vadd.f32 %v3109, %v2569
  %v3111 = vadd.f32 %v3110, %v2572
  %v3112 = vadd.f32 %v3111, %v2577
  %v3113 = vadd.f32 %v3112, %v2580
  %v3114 = vadd.f32 %v3113, %v2585
  %v3115 = vadd.f32 %v3114, %v2588
  %v3116 = vadd.f32 %v3115, %v2593
  %v3117 = vadd.f32 %v3116, %v2596
  %v3118 = vadd.f32 %v3117, %v2601
  %v3119 = vadd.f32 %v3118, %v2604
  %v3120 = vadd.f32 %v3119, %v2609
  %v3121 = vadd.f32 %v3120, %v2612
  %v3122 = vadd.f32 %v3121, %v2617
  %v3123 = vadd.f32 %v3122, %v2620
  %v3124 = vadd.f32 %v3123, %v2625
  %v3125 = vadd.f32 %v3124, %v2628
  %v3126 = vadd.f32 %v3125, %v2633
  %v3127 = vadd.f32 %v3126, %v2636
  %v3128 = vadd.f32 %v3127, %v2641
  %v3129 = vadd.f32 %v3128, %v2644
  %v3130 = vadd.f32 %v3129, %v2649
  %v3131 = vadd.f32 %v3130, %v2652
  %v3132 = vadd.f32 %v3131, %v2657
  %v3133 = vadd.f32 %v3132, %v2660
  %v3134 = vadd.f32 %v3133, %v2665
  %v3135 = vadd.f32 %v3134, %v2668
  %v3136 = vadd.f32 %v3135, %v2673
  %v3137 = vadd.f32 %v3136, %v2676
  %v3138 = vadd.f32 %v3137, %v2681
  %v3139 = vadd.f32 %v3138, %v2684
  %v3140 = vadd.f32 %v3139, %v2689
  %v3141 = vadd.f32 %v3140, %v2692
  %v3142 = vadd.f32 %v3141, %v2697
  %v3143 = vadd.f32 %v3142, %v2700
  %v3144 = vadd.f32 %v3143, %v2705
  %v3145 = vadd.f32 %v3144, %v2708
  %v3146 = vadd.f32 %v3145, %v2713
  %v3147 = vadd.f32 %v3146, %v2716
  %v3148 = vadd.f32 %v3147, %v2721
  %v3149 = vadd.f32 %v3148, %v2724
  %v3150 = vadd.f32 %v3149, %v2729
  %v3151 = vadd.f32 %v3150, %v2732
  %v3152 = vadd.f32 %v3151, %v2737
  %v3153 = vadd.f32 %v3152, %v2740
  %v3154 = vadd.f32 %v3153, %v2745
  %v3155 = vadd.f32 %v3154, %v2748
  %v3156 = vadd.f32 %v3155, %v2753
  %v3157 = vadd.f32 %v3156, %v2756
  %v3158 = vadd.f32 %v3157, %v2761
  %v3159 = vadd.f32 %v3158, %v2764
  %v3160 = vadd.f32 %v3159, %v2769
  %v3161 = vadd.f32 %v3160, %v2772
  %v3162 = vadd.f32 %v3161, %v2777
  %v3163 = vadd.f32 %v3162, %v2780
  %v3164 = vadd.f32 %v3163, %v2785
  %v3165 = vadd.f32 %v3164, %v2788
  %v3166 = vadd.f32 %v3165, %v2793
  %v3167 = vadd.f32 %v3166, %v2796
  %v3168 = vadd.f32 %v3167, %v2801
  %v3169 = vadd.f32 %v3168, %v2804
  %v3170 = vadd.f32 %v3169, %v2809
  %v3171 = vadd.f32 %v3170, %v2812
  %v3172 = vadd.f32 %v3171, %v2817
  %v3173 = vadd.f32 %v3172, %v2820
  %v3174 = vadd.f32 %v3173, %v2825
  %v3175 = vadd.f32 %v3174, %v2828
  %v3176 = vadd.f32 %v3175, %v2833
  %v3177 = vadd.f32 %v3176, %v2836
  %v3178 = vadd.f32 %v3177, %v2841
  %v3179 = vadd.f32 %v3178, %v2844
  %v3180 = vadd.f32 %v3179, %v2849
  %v3181 = vadd.f32 %v3180, %v2852
  %v3182 = vadd.f32 %v3181, %v2857
  %v3183 = vadd.f32 %v3182, %v2860
  %v3184 = vadd.f32 %v3183, %v2865
  %v3185 = vadd.f32 %v3184, %v2868
  %v3186 = vadd.f32 %v3185, %v2873
  %v3187 = vadd.f32 %v3186, %v2876
  %v3188 = vadd.f32 %v3187, %v2881
  %v3189 = vadd.f32 %v3188, %v2884
  %v3190 = vadd.f32 %v3189, %v2889
  %v3191 = vadd.f32 %v3190, %v2892
  %v3192 = vadd.f32 %v3191, %v2897
  %v3193 = vadd.f32 %v3192, %v2900
  %v3194 = vadd.f32 %v3193, %v2905
  %v3195 = vadd.f32 %v3194, %v2908
  %v3196 = vadd.f32 %v3195, %v2913
  %v3197 = vadd.f32 %v3196, %v2916
  %v3198 = vadd.f32 %v3197, %v2921
  %v3199 = vadd.f32 %v3198, %v2924
  %v3200 = vadd.f32 %v3199, %v2929
  %v3201 = vadd.f32 %v3200, %v2932
  %v3202 = vadd.f32 %v3201, %v2937
  %v3203 = vadd.f32 %v3202, %v2940
  %v3204 = vadd.f32 %v3203, %v2945
  %v3205 = vadd.f32 %v3204, %v2948
  %v3206 = vrot.slane %v3205, 4
  %v3207 = vadd.f32 %v3205, %v3206
  %v3208 = vrot.slane %v3207, 2
  %v3209 = vadd.f32 %v3207, %v3208
  %v3210 = vrot.slane %v3209, 1
  %v3211 = vadd.f32 %v3209, %v3210
  %v3212 = vrcp.pop 2048.0
  %v3213 = vmul.f32 %v3211, %v3212
  %v3214 = vsub.f32 %v1929, %v3213
  %v3215 = vsub.f32 %v1932, %v3213
  %v3216 = vsub.f32 %v1937, %v3213
  %v3217 = vsub.f32 %v1940, %v3213
  %v3218 = vsub.f32 %v1945, %v3213
  %v3219 = vsub.f32 %v1948, %v3213
  %v3220 = vsub.f32 %v1953, %v3213
  %v3221 = vsub.f32 %v1956, %v3213
  %v3222 = vsub.f32 %v1961, %v3213
  %v3223 = vsub.f32 %v1964, %v3213
  %v3224 = vsub.f32 %v1969, %v3213
  %v3225 = vsub.f32 %v1972, %v3213
  %v3226 = vsub.f32 %v1977, %v3213
  %v3227 = vsub.f32 %v1980, %v3213
  %v3228 = vsub.f32 %v1985, %v3213
  %v3229 = vsub.f32 %v1988, %v3213
  %v3230 = vsub.f32 %v1993, %v3213
  %v3231 = vsub.f32 %v1996, %v3213
  %v3232 = vsub.f32 %v2001, %v3213
  %v3233 = vsub.f32 %v2004, %v3213
  %v3234 = vsub.f32 %v2009, %v3213
  %v3235 = vsub.f32 %v2012, %v3213
  %v3236 = vsub.f32 %v2017, %v3213
  %v3237 = vsub.f32 %v2020, %v3213
  %v3238 = vsub.f32 %v2025, %v3213
  %v3239 = vsub.f32 %v2028, %v3213
  %v3240 = vsub.f32 %v2033, %v3213
  %v3241 = vsub.f32 %v2036, %v3213
  %v3242 = vsub.f32 %v2041, %v3213
  %v3243 = vsub.f32 %v2044, %v3213
  %v3244 = vsub.f32 %v2049, %v3213
  %v3245 = vsub.f32 %v2052, %v3213
  %v3246 = vsub.f32 %v2057, %v3213
  %v3247 = vsub.f32 %v2060, %v3213
  %v3248 = vsub.f32 %v2065, %v3213
  %v3249 = vsub.f32 %v2068, %v3213
  %v3250 = vsub.f32 %v2073, %v3213
  %v3251 = vsub.f32 %v2076, %v3213
  %v3252 = vsub.f32 %v2081, %v3213
  %v3253 = vsub.f32 %v2084, %v3213
  %v3254 = vsub.f32 %v2089, %v3213
  %v3255 = vsub.f32 %v2092, %v3213
  %v3256 = vsub.f32 %v2097, %v3213
  %v3257 = vsub.f32 %v2100, %v3213
  %v3258 = vsub.f32 %v2105, %v3213
  %v3259 = vsub.f32 %v2108, %v3213
  %v3260 = vsub.f32 %v2113, %v3213
  %v3261 = vsub.f32 %v2116, %v3213
  %v3262 = vsub.f32 %v2121, %v3213
  %v3263 = vsub.f32 %v2124, %v3213
  %v3264 = vsub.f32 %v2129, %v3213
  %v3265 = vsub.f32 %v2132, %v3213
  %v3266 = vsub.f32 %v2137, %v3213
  %v3267 = vsub.f32 %v2140, %v3213
  %v3268 = vsub.f32 %v2145, %v3213
  %v3269 = vsub.f32 %v2148, %v3213
  %v3270 = vsub.f32 %v2153, %v3213
  %v3271 = vsub.f32 %v2156, %v3213
  %v3272 = vsub.f32 %v2161, %v3213
  %v3273 = vsub.f32 %v2164, %v3213
  %v3274 = vsub.f32 %v2169, %v3213
  %v3275 = vsub.f32 %v2172, %v3213
  %v3276 = vsub.f32 %v2177, %v3213
  %v3277 = vsub.f32 %v2180, %v3213
  %v3278 = vsub.f32 %v2185, %v3213
  %v3279 = vsub.f32 %v2188, %v3213
  %v3280 = vsub.f32 %v2193, %v3213
  %v3281 = vsub.f32 %v2196, %v3213
  %v3282 = vsub.f32 %v2201, %v3213
  %v3283 = vsub.f32 %v2204, %v3213
  %v3284 = vsub.f32 %v2209, %v3213
  %v3285 = vsub.f32 %v2212, %v3213
  %v3286 = vsub.f32 %v2217, %v3213
  %v3287 = vsub.f32 %v2220, %v3213
  %v3288 = vsub.f32 %v2225, %v3213
  %v3289 = vsub.f32 %v2228, %v3213
  %v3290 = vsub.f32 %v2233, %v3213
  %v3291 = vsub.f32 %v2236, %v3213
  %v3292 = vsub.f32 %v2241, %v3213
  %v3293 = vsub.f32 %v2244, %v3213
  %v3294 = vsub.f32 %v2249, %v3213
  %v3295 = vsub.f32 %v2252, %v3213
  %v3296 = vsub.f32 %v2257, %v3213
  %v3297 = vsub.f32 %v2260, %v3213
  %v3298 = vsub.f32 %v2265, %v3213
  %v3299 = vsub.f32 %v2268, %v3213
  %v3300 = vsub.f32 %v2273, %v3213
  %v3301 = vsub.f32 %v2276, %v3213
  %v3302 = vsub.f32 %v2281, %v3213
  %v3303 = vsub.f32 %v2284, %v3213
  %v3304 = vsub.f32 %v2289, %v3213
  %v3305 = vsub.f32 %v2292, %v3213
  %v3306 = vsub.f32 %v2297, %v3213
  %v3307 = vsub.f32 %v2300, %v3213
  %v3308 = vsub.f32 %v2305, %v3213
  %v3309 = vsub.f32 %v2308, %v3213
  %v3310 = vsub.f32 %v2313, %v3213
  %v3311 = vsub.f32 %v2316, %v3213
  %v3312 = vsub.f32 %v2321, %v3213
  %v3313 = vsub.f32 %v2324, %v3213
  %v3314 = vsub.f32 %v2329, %v3213
  %v3315 = vsub.f32 %v2332, %v3213
  %v3316 = vsub.f32 %v2337, %v3213
  %v3317 = vsub.f32 %v2340, %v3213
  %v3318 = vsub.f32 %v2345, %v3213
  %v3319 = vsub.f32 %v2348, %v3213
  %v3320 = vsub.f32 %v2353, %v3213
  %v3321 = vsub.f32 %v2356, %v3213
  %v3322 = vsub.f32 %v2361, %v3213
  %v3323 = vsub.f32 %v2364, %v3213
  %v3324 = vsub.f32 %v2369, %v3213
  %v3325 = vsub.f32 %v2372, %v3213
  %v3326 = vsub.f32 %v2377, %v3213
  %v3327 = vsub.f32 %v2380, %v3213
  %v3328 = vsub.f32 %v2385, %v3213
  %v3329 = vsub.f32 %v2388, %v3213
  %v3330 = vsub.f32 %v2393, %v3213
  %v3331 = vsub.f32 %v2396, %v3213
  %v3332 = vsub.f32 %v2401, %v3213
  %v3333 = vsub.f32 %v2404, %v3213
  %v3334 = vsub.f32 %v2409, %v3213
  %v3335 = vsub.f32 %v2412, %v3213
  %v3336 = vsub.f32 %v2417, %v3213
  %v3337 = vsub.f32 %v2420, %v3213
  %v3338 = vsub.f32 %v2425, %v3213
  %v3339 = vsub.f32 %v2428, %v3213
  %v3340 = vsub.f32 %v2433, %v3213
  %v3341 = vsub.f32 %v2436, %v3213
  %v3342 = vsub.f32 %v2441, %v3213
  %v3343 = vsub.f32 %v2444, %v3213
  %v3344 = vsub.f32 %v2449, %v3213
  %v3345 = vsub.f32 %v2452, %v3213
  %v3346 = vsub.f32 %v2457, %v3213
  %v3347 = vsub.f32 %v2460, %v3213
  %v3348 = vsub.f32 %v2465, %v3213
  %v3349 = vsub.f32 %v2468, %v3213
  %v3350 = vsub.f32 %v2473, %v3213
  %v3351 = vsub.f32 %v2476, %v3213
  %v3352 = vsub.f32 %v2481, %v3213
  %v3353 = vsub.f32 %v2484, %v3213
  %v3354 = vsub.f32 %v2489, %v3213
  %v3355 = vsub.f32 %v2492, %v3213
  %v3356 = vsub.f32 %v2497, %v3213
  %v3357 = vsub.f32 %v2500, %v3213
  %v3358 = vsub.f32 %v2505, %v3213
  %v3359 = vsub.f32 %v2508, %v3213
  %v3360 = vsub.f32 %v2513, %v3213
  %v3361 = vsub.f32 %v2516, %v3213
  %v3362 = vsub.f32 %v2521, %v3213
  %v3363 = vsub.f32 %v2524, %v3213
  %v3364 = vsub.f32 %v2529, %v3213
  %v3365 = vsub.f32 %v2532, %v3213
  %v3366 = vsub.f32 %v2537, %v3213
  %v3367 = vsub.f32 %v2540, %v3213
  %v3368 = vsub.f32 %v2545, %v3213
  %v3369 = vsub.f32 %v2548, %v3213
  %v3370 = vsub.f32 %v2553, %v3213
  %v3371 = vsub.f32 %v2556, %v3213
  %v3372 = vsub.f32 %v2561, %v3213
  %v3373 = vsub.f32 %v2564, %v3213
  %v3374 = vsub.f32 %v2569, %v3213
  %v3375 = vsub.f32 %v2572, %v3213
  %v3376 = vsub.f32 %v2577, %v3213
  %v3377 = vsub.f32 %v2580, %v3213
  %v3378 = vsub.f32 %v2585, %v3213
  %v3379 = vsub.f32 %v2588, %v3213
  %v3380 = vsub.f32 %v2593, %v3213
  %v3381 = vsub.f32 %v2596, %v3213
  %v3382 = vsub.f32 %v2601, %v3213
  %v3383 = vsub.f32 %v2604, %v3213
  %v3384 = vsub.f32 %v2609, %v3213
  %v3385 = vsub.f32 %v2612, %v3213
  %v3386 = vsub.f32 %v2617, %v3213
  %v3387 = vsub.f32 %v2620, %v3213
  %v3388 = vsub.f32 %v2625, %v3213
  %v3389 = vsub.f32 %v2628, %v3213
  %v3390 = vsub.f32 %v2633, %v3213
  %v3391 = vsub.f32 %v2636, %v3213
  %v3392 = vsub.f32 %v2641, %v3213
  %v3393 = vsub.f32 %v2644, %v3213
  %v3394 = vsub.f32 %v2649, %v3213
  %v3395 = vsub.f32 %v2652, %v3213
  %v3396 = vsub.f32 %v2657, %v3213
  %v3397 = vsub.f32 %v2660, %v3213
  %v3398 = vsub.f32 %v2665, %v3213
  %v3399 = vsub.f32 %v2668, %v3213
  %v3400 = vsub.f32 %v2673, %v3213
  %v3401 = vsub.f32 %v2676, %v3213
  %v3402 = vsub.f32 %v2681, %v3213
  %v3403 = vsub.f32 %v2684, %v3213
  %v3404 = vsub.f32 %v2689, %v3213
  %v3405 = vsub.f32 %v2692, %v3213
  %v3406 = vsub.f32 %v2697, %v3213
  %v3407 = vsub.f32 %v2700, %v3213
  %v3408 = vsub.f32 %v2705, %v3213
  %v3409 = vsub.f32 %v2708, %v3213
  %v3410 = vsub.f32 %v2713, %v3213
  %v3411 = vsub.f32 %v2716, %v3213
  %v3412 = vsub.f32 %v2721, %v3213
  %v3413 = vsub.f32 %v2724, %v3213
  %v3414 = vsub.f32 %v2729, %v3213
  %v3415 = vsub.f32 %v2732, %v3213
  %v3416 = vsub.f32 %v2737, %v3213
  %v3417 = vsub.f32 %v2740, %v3213
  %v3418 = vsub.f32 %v2745, %v3213
  %v3419 = vsub.f32 %v2748, %v3213
  %v3420 = vsub.f32 %v2753, %v3213
  %v3421 = vsub.f32 %v2756, %v3213
  %v3422 = vsub.f32 %v2761, %v3213
  %v3423 = vsub.f32 %v2764, %v3213
  %v3424 = vsub.f32 %v2769, %v3213
  %v3425 = vsub.f32 %v2772, %v3213
  %v3426 = vsub.f32 %v2777, %v3213
  %v3427 = vsub.f32 %v2780, %v3213
  %v3428 = vsub.f32 %v2785, %v3213
  %v3429 = vsub.f32 %v2788, %v3213
  %v3430 = vsub.f32 %v2793, %v3213
  %v3431 = vsub.f32 %v2796, %v3213
  %v3432 = vsub.f32 %v2801, %v3213
  %v3433 = vsub.f32 %v2804, %v3213
  %v3434 = vsub.f32 %v2809, %v3213
  %v3435 = vsub.f32 %v2812, %v3213
  %v3436 = vsub.f32 %v2817, %v3213
  %v3437 = vsub.f32 %v2820, %v3213
  %v3438 = vsub.f32 %v2825, %v3213
  %v3439 = vsub.f32 %v2828, %v3213
  %v3440 = vsub.f32 %v2833, %v3213
  %v3441 = vsub.f32 %v2836, %v3213
  %v3442 = vsub.f32 %v2841, %v3213
  %v3443 = vsub.f32 %v2844, %v3213
  %v3444 = vsub.f32 %v2849, %v3213
  %v3445 = vsub.f32 %v2852, %v3213
  %v3446 = vsub.f32 %v2857, %v3213
  %v3447 = vsub.f32 %v2860, %v3213
  %v3448 = vsub.f32 %v2865, %v3213
  %v3449 = vsub.f32 %v2868, %v3213
  %v3450 = vsub.f32 %v2873, %v3213
  %v3451 = vsub.f32 %v2876, %v3213
  %v3452 = vsub.f32 %v2881, %v3213
  %v3453 = vsub.f32 %v2884, %v3213
  %v3454 = vsub.f32 %v2889, %v3213
  %v3455 = vsub.f32 %v2892, %v3213
  %v3456 = vsub.f32 %v2897, %v3213
  %v3457 = vsub.f32 %v2900, %v3213
  %v3458 = vsub.f32 %v2905, %v3213
  %v3459 = vsub.f32 %v2908, %v3213
  %v3460 = vsub.f32 %v2913, %v3213
  %v3461 = vsub.f32 %v2916, %v3213
  %v3462 = vsub.f32 %v2921, %v3213
  %v3463 = vsub.f32 %v2924, %v3213
  %v3464 = vsub.f32 %v2929, %v3213
  %v3465 = vsub.f32 %v2932, %v3213
  %v3466 = vsub.f32 %v2937, %v3213
  %v3467 = vsub.f32 %v2940, %v3213
  %v3468 = vsub.f32 %v2945, %v3213
  %v3469 = vsub.f32 %v2948, %v3213
  %v3470 = vmul.f32 %v3214, %v3214
  %v3471 = vmul.f32 %v3215, %v3215
  %v3472 = vmul.f32 %v3216, %v3216
  %v3473 = vmul.f32 %v3217, %v3217
  %v3474 = vmul.f32 %v3218, %v3218
  %v3475 = vmul.f32 %v3219, %v3219
  %v3476 = vmul.f32 %v3220, %v3220
  %v3477 = vmul.f32 %v3221, %v3221
  %v3478 = vmul.f32 %v3222, %v3222
  %v3479 = vmul.f32 %v3223, %v3223
  %v3480 = vmul.f32 %v3224, %v3224
  %v3481 = vmul.f32 %v3225, %v3225
  %v3482 = vmul.f32 %v3226, %v3226
  %v3483 = vmul.f32 %v3227, %v3227
  %v3484 = vmul.f32 %v3228, %v3228
  %v3485 = vmul.f32 %v3229, %v3229
  %v3486 = vmul.f32 %v3230, %v3230
  %v3487 = vmul.f32 %v3231, %v3231
  %v3488 = vmul.f32 %v3232, %v3232
  %v3489 = vmul.f32 %v3233, %v3233
  %v3490 = vmul.f32 %v3234, %v3234
  %v3491 = vmul.f32 %v3235, %v3235
  %v3492 = vmul.f32 %v3236, %v3236
  %v3493 = vmul.f32 %v3237, %v3237
  %v3494 = vmul.f32 %v3238, %v3238
  %v3495 = vmul.f32 %v3239, %v3239
  %v3496 = vmul.f32 %v3240, %v3240
  %v3497 = vmul.f32 %v3241, %v3241
  %v3498 = vmul.f32 %v3242, %v3242
  %v3499 = vmul.f32 %v3243, %v3243
  %v3500 = vmul.f32 %v3244, %v3244
  %v3501 = vmul.f32 %v3245, %v3245
  %v3502 = vmul.f32 %v3246, %v3246
  %v3503 = vmul.f32 %v3247, %v3247
  %v3504 = vmul.f32 %v3248, %v3248
  %v3505 = vmul.f32 %v3249, %v3249
  %v3506 = vmul.f32 %v3250, %v3250
  %v3507 = vmul.f32 %v3251, %v3251
  %v3508 = vmul.f32 %v3252, %v3252
  %v3509 = vmul.f32 %v3253, %v3253
  %v3510 = vmul.f32 %v3254, %v3254
  %v3511 = vmul.f32 %v3255, %v3255
  %v3512 = vmul.f32 %v3256, %v3256
  %v3513 = vmul.f32 %v3257, %v3257
  %v3514 = vmul.f32 %v3258, %v3258
  %v3515 = vmul.f32 %v3259, %v3259
  %v3516 = vmul.f32 %v3260, %v3260
  %v3517 = vmul.f32 %v3261, %v3261
  %v3518 = vmul.f32 %v3262, %v3262
  %v3519 = vmul.f32 %v3263, %v3263
  %v3520 = vmul.f32 %v3264, %v3264
  %v3521 = vmul.f32 %v3265, %v3265
  %v3522 = vmul.f32 %v3266, %v3266
  %v3523 = vmul.f32 %v3267, %v3267
  %v3524 = vmul.f32 %v3268, %v3268
  %v3525 = vmul.f32 %v3269, %v3269
  %v3526 = vmul.f32 %v3270, %v3270
  %v3527 = vmul.f32 %v3271, %v3271
  %v3528 = vmul.f32 %v3272, %v3272
  %v3529 = vmul.f32 %v3273, %v3273
  %v3530 = vmul.f32 %v3274, %v3274
  %v3531 = vmul.f32 %v3275, %v3275
  %v3532 = vmul.f32 %v3276, %v3276
  %v3533 = vmul.f32 %v3277, %v3277
  %v3534 = vmul.f32 %v3278, %v3278
  %v3535 = vmul.f32 %v3279, %v3279
  %v3536 = vmul.f32 %v3280, %v3280
  %v3537 = vmul.f32 %v3281, %v3281
  %v3538 = vmul.f32 %v3282, %v3282
  %v3539 = vmul.f32 %v3283, %v3283
  %v3540 = vmul.f32 %v3284, %v3284
  %v3541 = vmul.f32 %v3285, %v3285
  %v3542 = vmul.f32 %v3286, %v3286
  %v3543 = vmul.f32 %v3287, %v3287
  %v3544 = vmul.f32 %v3288, %v3288
  %v3545 = vmul.f32 %v3289, %v3289
  %v3546 = vmul.f32 %v3290, %v3290
  %v3547 = vmul.f32 %v3291, %v3291
  %v3548 = vmul.f32 %v3292, %v3292
  %v3549 = vmul.f32 %v3293, %v3293
  %v3550 = vmul.f32 %v3294, %v3294
  %v3551 = vmul.f32 %v3295, %v3295
  %v3552 = vmul.f32 %v3296, %v3296
  %v3553 = vmul.f32 %v3297, %v3297
  %v3554 = vmul.f32 %v3298, %v3298
  %v3555 = vmul.f32 %v3299, %v3299
  %v3556 = vmul.f32 %v3300, %v3300
  %v3557 = vmul.f32 %v3301, %v3301
  %v3558 = vmul.f32 %v3302, %v3302
  %v3559 = vmul.f32 %v3303, %v3303
  %v3560 = vmul.f32 %v3304, %v3304
  %v3561 = vmul.f32 %v3305, %v3305
  %v3562 = vmul.f32 %v3306, %v3306
  %v3563 = vmul.f32 %v3307, %v3307
  %v3564 = vmul.f32 %v3308, %v3308
  %v3565 = vmul.f32 %v3309, %v3309
  %v3566 = vmul.f32 %v3310, %v3310
  %v3567 = vmul.f32 %v3311, %v3311
  %v3568 = vmul.f32 %v3312, %v3312
  %v3569 = vmul.f32 %v3313, %v3313
  %v3570 = vmul.f32 %v3314, %v3314
  %v3571 = vmul.f32 %v3315, %v3315
  %v3572 = vmul.f32 %v3316, %v3316
  %v3573 = vmul.f32 %v3317, %v3317
  %v3574 = vmul.f32 %v3318, %v3318
  %v3575 = vmul.f32 %v3319, %v3319
  %v3576 = vmul.f32 %v3320, %v3320
  %v3577 = vmul.f32 %v3321, %v3321
  %v3578 = vmul.f32 %v3322, %v3322
  %v3579 = vmul.f32 %v3323, %v3323
  %v3580 = vmul.f32 %v3324, %v3324
  %v3581 = vmul.f32 %v3325, %v3325
  %v3582 = vmul.f32 %v3326, %v3326
  %v3583 = vmul.f32 %v3327, %v3327
  %v3584 = vmul.f32 %v3328, %v3328
  %v3585 = vmul.f32 %v3329, %v3329
  %v3586 = vmul.f32 %v3330, %v3330
  %v3587 = vmul.f32 %v3331, %v3331
  %v3588 = vmul.f32 %v3332, %v3332
  %v3589 = vmul.f32 %v3333, %v3333
  %v3590 = vmul.f32 %v3334, %v3334
  %v3591 = vmul.f32 %v3335, %v3335
  %v3592 = vmul.f32 %v3336, %v3336
  %v3593 = vmul.f32 %v3337, %v3337
  %v3594 = vmul.f32 %v3338, %v3338
  %v3595 = vmul.f32 %v3339, %v3339
  %v3596 = vmul.f32 %v3340, %v3340
  %v3597 = vmul.f32 %v3341, %v3341
  %v3598 = vmul.f32 %v3342, %v3342
  %v3599 = vmul.f32 %v3343, %v3343
  %v3600 = vmul.f32 %v3344, %v3344
  %v3601 = vmul.f32 %v3345, %v3345
  %v3602 = vmul.f32 %v3346, %v3346
  %v3603 = vmul.f32 %v3347, %v3347
  %v3604 = vmul.f32 %v3348, %v3348
  %v3605 = vmul.f32 %v3349, %v3349
  %v3606 = vmul.f32 %v3350, %v3350
  %v3607 = vmul.f32 %v3351, %v3351
  %v3608 = vmul.f32 %v3352, %v3352
  %v3609 = vmul.f32 %v3353, %v3353
  %v3610 = vmul.f32 %v3354, %v3354
  %v3611 = vmul.f32 %v3355, %v3355
  %v3612 = vmul.f32 %v3356, %v3356
  %v3613 = vmul.f32 %v3357, %v3357
  %v3614 = vmul.f32 %v3358, %v3358
  %v3615 = vmul.f32 %v3359, %v3359
  %v3616 = vmul.f32 %v3360, %v3360
  %v3617 = vmul.f32 %v3361, %v3361
  %v3618 = vmul.f32 %v3362, %v3362
  %v3619 = vmul.f32 %v3363, %v3363
  %v3620 = vmul.f32 %v3364, %v3364
  %v3621 = vmul.f32 %v3365, %v3365
  %v3622 = vmul.f32 %v3366, %v3366
  %v3623 = vmul.f32 %v3367, %v3367
  %v3624 = vmul.f32 %v3368, %v3368
  %v3625 = vmul.f32 %v3369, %v3369
  %v3626 = vmul.f32 %v3370, %v3370
  %v3627 = vmul.f32 %v3371, %v3371
  %v3628 = vmul.f32 %v3372, %v3372
  %v3629 = vmul.f32 %v3373, %v3373
  %v3630 = vmul.f32 %v3374, %v3374
  %v3631 = vmul.f32 %v3375, %v3375
  %v3632 = vmul.f32 %v3376, %v3376
  %v3633 = vmul.f32 %v3377, %v3377
  %v3634 = vmul.f32 %v3378, %v3378
  %v3635 = vmul.f32 %v3379, %v3379
  %v3636 = vmul.f32 %v3380, %v3380
  %v3637 = vmul.f32 %v3381, %v3381
  %v3638 = vmul.f32 %v3382, %v3382
  %v3639 = vmul.f32 %v3383, %v3383
  %v3640 = vmul.f32 %v3384, %v3384
  %v3641 = vmul.f32 %v3385, %v3385
  %v3642 = vmul.f32 %v3386, %v3386
  %v3643 = vmul.f32 %v3387, %v3387
  %v3644 = vmul.f32 %v3388, %v3388
  %v3645 = vmul.f32 %v3389, %v3389
  %v3646 = vmul.f32 %v3390, %v3390
  %v3647 = vmul.f32 %v3391, %v3391
  %v3648 = vmul.f32 %v3392, %v3392
  %v3649 = vmul.f32 %v3393, %v3393
  %v3650 = vmul.f32 %v3394, %v3394
  %v3651 = vmul.f32 %v3395, %v3395
  %v3652 = vmul.f32 %v3396, %v3396
  %v3653 = vmul.f32 %v3397, %v3397
  %v3654 = vmul.f32 %v3398, %v3398
  %v3655 = vmul.f32 %v3399, %v3399
  %v3656 = vmul.f32 %v3400, %v3400
  %v3657 = vmul.f32 %v3401, %v3401
  %v3658 = vmul.f32 %v3402, %v3402
  %v3659 = vmul.f32 %v3403, %v3403
  %v3660 = vmul.f32 %v3404, %v3404
  %v3661 = vmul.f32 %v3405, %v3405
  %v3662 = vmul.f32 %v3406, %v3406
  %v3663 = vmul.f32 %v3407, %v3407
  %v3664 = vmul.f32 %v3408, %v3408
  %v3665 = vmul.f32 %v3409, %v3409
  %v3666 = vmul.f32 %v3410, %v3410
  %v3667 = vmul.f32 %v3411, %v3411
  %v3668 = vmul.f32 %v3412, %v3412
  %v3669 = vmul.f32 %v3413, %v3413
  %v3670 = vmul.f32 %v3414, %v3414
  %v3671 = vmul.f32 %v3415, %v3415
  %v3672 = vmul.f32 %v3416, %v3416
  %v3673 = vmul.f32 %v3417, %v3417
  %v3674 = vmul.f32 %v3418, %v3418
  %v3675 = vmul.f32 %v3419, %v3419
  %v3676 = vmul.f32 %v3420, %v3420
  %v3677 = vmul.f32 %v3421, %v3421
  %v3678 = vmul.f32 %v3422, %v3422
  %v3679 = vmul.f32 %v3423, %v3423
  %v3680 = vmul.f32 %v3424, %v3424
  %v3681 = vmul.f32 %v3425, %v3425
  %v3682 = vmul.f32 %v3426, %v3426
  %v3683 = vmul.f32 %v3427, %v3427
  %v3684 = vmul.f32 %v3428, %v3428
  %v3685 = vmul.f32 %v3429, %v3429
  %v3686 = vmul.f32 %v3430, %v3430
  %v3687 = vmul.f32 %v3431, %v3431
  %v3688 = vmul.f32 %v3432, %v3432
  %v3689 = vmul.f32 %v3433, %v3433
  %v3690 = vmul.f32 %v3434, %v3434
  %v3691 = vmul.f32 %v3435, %v3435
  %v3692 = vmul.f32 %v3436, %v3436
  %v3693 = vmul.f32 %v3437, %v3437
  %v3694 = vmul.f32 %v3438, %v3438
  %v3695 = vmul.f32 %v3439, %v3439
  %v3696 = vmul.f32 %v3440, %v3440
  %v3697 = vmul.f32 %v3441, %v3441
  %v3698 = vmul.f32 %v3442, %v3442
  %v3699 = vmul.f32 %v3443, %v3443
  %v3700 = vmul.f32 %v3444, %v3444
  %v3701 = vmul.f32 %v3445, %v3445
  %v3702 = vmul.f32 %v3446, %v3446
  %v3703 = vmul.f32 %v3447, %v3447
  %v3704 = vmul.f32 %v3448, %v3448
  %v3705 = vmul.f32 %v3449, %v3449
  %v3706 = vmul.f32 %v3450, %v3450
  %v3707 = vmul.f32 %v3451, %v3451
  %v3708 = vmul.f32 %v3452, %v3452
  %v3709 = vmul.f32 %v3453, %v3453
  %v3710 = vmul.f32 %v3454, %v3454
  %v3711 = vmul.f32 %v3455, %v3455
  %v3712 = vmul.f32 %v3456, %v3456
  %v3713 = vmul.f32 %v3457, %v3457
  %v3714 = vmul.f32 %v3458, %v3458
  %v3715 = vmul.f32 %v3459, %v3459
  %v3716 = vmul.f32 %v3460, %v3460
  %v3717 = vmul.f32 %v3461, %v3461
  %v3718 = vmul.f32 %v3462, %v3462
  %v3719 = vmul.f32 %v3463, %v3463
  %v3720 = vmul.f32 %v3464, %v3464
  %v3721 = vmul.f32 %v3465, %v3465
  %v3722 = vmul.f32 %v3466, %v3466
  %v3723 = vmul.f32 %v3467, %v3467
  %v3724 = vmul.f32 %v3468, %v3468
  %v3725 = vmul.f32 %v3469, %v3469
  %v3726 = vadd.f32 %v3470, %v3471
  %v3727 = vadd.f32 %v3726, %v3472
  %v3728 = vadd.f32 %v3727, %v3473
  %v3729 = vadd.f32 %v3728, %v3474
  %v3730 = vadd.f32 %v3729, %v3475
  %v3731 = vadd.f32 %v3730, %v3476
  %v3732 = vadd.f32 %v3731, %v3477
  %v3733 = vadd.f32 %v3732, %v3478
  %v3734 = vadd.f32 %v3733, %v3479
  %v3735 = vadd.f32 %v3734, %v3480
  %v3736 = vadd.f32 %v3735, %v3481
  %v3737 = vadd.f32 %v3736, %v3482
  %v3738 = vadd.f32 %v3737, %v3483
  %v3739 = vadd.f32 %v3738, %v3484
  %v3740 = vadd.f32 %v3739, %v3485
  %v3741 = vadd.f32 %v3740, %v3486
  %v3742 = vadd.f32 %v3741, %v3487
  %v3743 = vadd.f32 %v3742, %v3488
  %v3744 = vadd.f32 %v3743, %v3489
  %v3745 = vadd.f32 %v3744, %v3490
  %v3746 = vadd.f32 %v3745, %v3491
  %v3747 = vadd.f32 %v3746, %v3492
  %v3748 = vadd.f32 %v3747, %v3493
  %v3749 = vadd.f32 %v3748, %v3494
  %v3750 = vadd.f32 %v3749, %v3495
  %v3751 = vadd.f32 %v3750, %v3496
  %v3752 = vadd.f32 %v3751, %v3497
  %v3753 = vadd.f32 %v3752, %v3498
  %v3754 = vadd.f32 %v3753, %v3499
  %v3755 = vadd.f32 %v3754, %v3500
  %v3756 = vadd.f32 %v3755, %v3501
  %v3757 = vadd.f32 %v3756, %v3502
  %v3758 = vadd.f32 %v3757, %v3503
  %v3759 = vadd.f32 %v3758, %v3504
  %v3760 = vadd.f32 %v3759, %v3505
  %v3761 = vadd.f32 %v3760, %v3506
  %v3762 = vadd.f32 %v3761, %v3507
  %v3763 = vadd.f32 %v3762, %v3508
  %v3764 = vadd.f32 %v3763, %v3509
  %v3765 = vadd.f32 %v3764, %v3510
  %v3766 = vadd.f32 %v3765, %v3511
  %v3767 = vadd.f32 %v3766, %v3512
  %v3768 = vadd.f32 %v3767, %v3513
  %v3769 = vadd.f32 %v3768, %v3514
  %v3770 = vadd.f32 %v3769, %v3515
  %v3771 = vadd.f32 %v3770, %v3516
  %v3772 = vadd.f32 %v3771, %v3517
  %v3773 = vadd.f32 %v3772, %v3518
  %v3774 = vadd.f32 %v3773, %v3519
  %v3775 = vadd.f32 %v3774, %v3520
  %v3776 = vadd.f32 %v3775, %v3521
  %v3777 = vadd.f32 %v3776, %v3522
  %v3778 = vadd.f32 %v3777, %v3523
  %v3779 = vadd.f32 %v3778, %v3524
  %v3780 = vadd.f32 %v3779, %v3525
  %v3781 = vadd.f32 %v3780, %v3526
  %v3782 = vadd.f32 %v3781, %v3527
  %v3783 = vadd.f32 %v3782, %v3528
  %v3784 = vadd.f32 %v3783, %v3529
  %v3785 = vadd.f32 %v3784, %v3530
  %v3786 = vadd.f32 %v3785, %v3531
  %v3787 = vadd.f32 %v3786, %v3532
  %v3788 = vadd.f32 %v3787, %v3533
  %v3789 = vadd.f32 %v3788, %v3534
  %v3790 = vadd.f32 %v3789, %v3535
  %v3791 = vadd.f32 %v3790, %v3536
  %v3792 = vadd.f32 %v3791, %v3537
  %v3793 = vadd.f32 %v3792, %v3538
  %v3794 = vadd.f32 %v3793, %v3539
  %v3795 = vadd.f32 %v3794, %v3540
  %v3796 = vadd.f32 %v3795, %v3541
  %v3797 = vadd.f32 %v3796, %v3542
  %v3798 = vadd.f32 %v3797, %v3543
  %v3799 = vadd.f32 %v3798, %v3544
  %v3800 = vadd.f32 %v3799, %v3545
  %v3801 = vadd.f32 %v3800, %v3546
  %v3802 = vadd.f32 %v3801, %v3547
  %v3803 = vadd.f32 %v3802, %v3548
  %v3804 = vadd.f32 %v3803, %v3549
  %v3805 = vadd.f32 %v3804, %v3550
  %v3806 = vadd.f32 %v3805, %v3551
  %v3807 = vadd.f32 %v3806, %v3552
  %v3808 = vadd.f32 %v3807, %v3553
  %v3809 = vadd.f32 %v3808, %v3554
  %v3810 = vadd.f32 %v3809, %v3555
  %v3811 = vadd.f32 %v3810, %v3556
  %v3812 = vadd.f32 %v3811, %v3557
  %v3813 = vadd.f32 %v3812, %v3558
  %v3814 = vadd.f32 %v3813, %v3559
  %v3815 = vadd.f32 %v3814, %v3560
  %v3816 = vadd.f32 %v3815, %v3561
  %v3817 = vadd.f32 %v3816, %v3562
  %v3818 = vadd.f32 %v3817, %v3563
  %v3819 = vadd.f32 %v3818, %v3564
  %v3820 = vadd.f32 %v3819, %v3565
  %v3821 = vadd.f32 %v3820, %v3566
  %v3822 = vadd.f32 %v3821, %v3567
  %v3823 = vadd.f32 %v3822, %v3568
  %v3824 = vadd.f32 %v3823, %v3569
  %v3825 = vadd.f32 %v3824, %v3570
  %v3826 = vadd.f32 %v3825, %v3571
  %v3827 = vadd.f32 %v3826, %v3572
  %v3828 = vadd.f32 %v3827, %v3573
  %v3829 = vadd.f32 %v3828, %v3574
  %v3830 = vadd.f32 %v3829, %v3575
  %v3831 = vadd.f32 %v3830, %v3576
  %v3832 = vadd.f32 %v3831, %v3577
  %v3833 = vadd.f32 %v3832, %v3578
  %v3834 = vadd.f32 %v3833, %v3579
  %v3835 = vadd.f32 %v3834, %v3580
  %v3836 = vadd.f32 %v3835, %v3581
  %v3837 = vadd.f32 %v3836, %v3582
  %v3838 = vadd.f32 %v3837, %v3583
  %v3839 = vadd.f32 %v3838, %v3584
  %v3840 = vadd.f32 %v3839, %v3585
  %v3841 = vadd.f32 %v3840, %v3586
  %v3842 = vadd.f32 %v3841, %v3587
  %v3843 = vadd.f32 %v3842, %v3588
  %v3844 = vadd.f32 %v3843, %v3589
  %v3845 = vadd.f32 %v3844, %v3590
  %v3846 = vadd.f32 %v3845, %v3591
  %v3847 = vadd.f32 %v3846, %v3592
  %v3848 = vadd.f32 %v3847, %v3593
  %v3849 = vadd.f32 %v3848, %v3594
  %v3850 = vadd.f32 %v3849, %v3595
  %v3851 = vadd.f32 %v3850, %v3596
  %v3852 = vadd.f32 %v3851, %v3597
  %v3853 = vadd.f32 %v3852, %v3598
  %v3854 = vadd.f32 %v3853, %v3599
  %v3855 = vadd.f32 %v3854, %v3600
  %v3856 = vadd.f32 %v3855, %v3601
  %v3857 = vadd.f32 %v3856, %v3602
  %v3858 = vadd.f32 %v3857, %v3603
  %v3859 = vadd.f32 %v3858, %v3604
  %v3860 = vadd.f32 %v3859, %v3605
  %v3861 = vadd.f32 %v3860, %v3606
  %v3862 = vadd.f32 %v3861, %v3607
  %v3863 = vadd.f32 %v3862, %v3608
  %v3864 = vadd.f32 %v3863, %v3609
  %v3865 = vadd.f32 %v3864, %v3610
  %v3866 = vadd.f32 %v3865, %v3611
  %v3867 = vadd.f32 %v3866, %v3612
  %v3868 = vadd.f32 %v3867, %v3613
  %v3869 = vadd.f32 %v3868, %v3614
  %v3870 = vadd.f32 %v3869, %v3615
  %v3871 = vadd.f32 %v3870, %v3616
  %v3872 = vadd.f32 %v3871, %v3617
  %v3873 = vadd.f32 %v3872, %v3618
  %v3874 = vadd.f32 %v3873, %v3619
  %v3875 = vadd.f32 %v3874, %v3620
  %v3876 = vadd.f32 %v3875, %v3621
  %v3877 = vadd.f32 %v3876, %v3622
  %v3878 = vadd.f32 %v3877, %v3623
  %v3879 = vadd.f32 %v3878, %v3624
  %v3880 = vadd.f32 %v3879, %v3625
  %v3881 = vadd.f32 %v3880, %v3626
  %v3882 = vadd.f32 %v3881, %v3627
  %v3883 = vadd.f32 %v3882, %v3628
  %v3884 = vadd.f32 %v3883, %v3629
  %v3885 = vadd.f32 %v3884, %v3630
  %v3886 = vadd.f32 %v3885, %v3631
  %v3887 = vadd.f32 %v3886, %v3632
  %v3888 = vadd.f32 %v3887, %v3633
  %v3889 = vadd.f32 %v3888, %v3634
  %v3890 = vadd.f32 %v3889, %v3635
  %v3891 = vadd.f32 %v3890, %v3636
  %v3892 = vadd.f32 %v3891, %v3637
  %v3893 = vadd.f32 %v3892, %v3638
  %v3894 = vadd.f32 %v3893, %v3639
  %v3895 = vadd.f32 %v3894, %v3640
  %v3896 = vadd.f32 %v3895, %v3641
  %v3897 = vadd.f32 %v3896, %v3642
  %v3898 = vadd.f32 %v3897, %v3643
  %v3899 = vadd.f32 %v3898, %v3644
  %v3900 = vadd.f32 %v3899, %v3645
  %v3901 = vadd.f32 %v3900, %v3646
  %v3902 = vadd.f32 %v3901, %v3647
  %v3903 = vadd.f32 %v3902, %v3648
  %v3904 = vadd.f32 %v3903, %v3649
  %v3905 = vadd.f32 %v3904, %v3650
  %v3906 = vadd.f32 %v3905, %v3651
  %v3907 = vadd.f32 %v3906, %v3652
  %v3908 = vadd.f32 %v3907, %v3653
  %v3909 = vadd.f32 %v3908, %v3654
  %v3910 = vadd.f32 %v3909, %v3655
  %v3911 = vadd.f32 %v3910, %v3656
  %v3912 = vadd.f32 %v3911, %v3657
  %v3913 = vadd.f32 %v3912, %v3658
  %v3914 = vadd.f32 %v3913, %v3659
  %v3915 = vadd.f32 %v3914, %v3660
  %v3916 = vadd.f32 %v3915, %v3661
  %v3917 = vadd.f32 %v3916, %v3662
  %v3918 = vadd.f32 %v3917, %v3663
  %v3919 = vadd.f32 %v3918, %v3664
  %v3920 = vadd.f32 %v3919, %v3665
  %v3921 = vadd.f32 %v3920, %v3666
  %v3922 = vadd.f32 %v3921, %v3667
  %v3923 = vadd.f32 %v3922, %v3668
  %v3924 = vadd.f32 %v3923, %v3669
  %v3925 = vadd.f32 %v3924, %v3670
  %v3926 = vadd.f32 %v3925, %v3671
  %v3927 = vadd.f32 %v3926, %v3672
  %v3928 = vadd.f32 %v3927, %v3673
  %v3929 = vadd.f32 %v3928, %v3674
  %v3930 = vadd.f32 %v3929, %v3675
  %v3931 = vadd.f32 %v3930, %v3676
  %v3932 = vadd.f32 %v3931, %v3677
  %v3933 = vadd.f32 %v3932, %v3678
  %v3934 = vadd.f32 %v3933, %v3679
  %v3935 = vadd.f32 %v3934, %v3680
  %v3936 = vadd.f32 %v3935, %v3681
  %v3937 = vadd.f32 %v3936, %v3682
  %v3938 = vadd.f32 %v3937, %v3683
  %v3939 = vadd.f32 %v3938, %v3684
  %v3940 = vadd.f32 %v3939, %v3685
  %v3941 = vadd.f32 %v3940, %v3686
  %v3942 = vadd.f32 %v3941, %v3687
  %v3943 = vadd.f32 %v3942, %v3688
  %v3944 = vadd.f32 %v3943, %v3689
  %v3945 = vadd.f32 %v3944, %v3690
  %v3946 = vadd.f32 %v3945, %v3691
  %v3947 = vadd.f32 %v3946, %v3692
  %v3948 = vadd.f32 %v3947, %v3693
  %v3949 = vadd.f32 %v3948, %v3694
  %v3950 = vadd.f32 %v3949, %v3695
  %v3951 = vadd.f32 %v3950, %v3696
  %v3952 = vadd.f32 %v3951, %v3697
  %v3953 = vadd.f32 %v3952, %v3698
  %v3954 = vadd.f32 %v3953, %v3699
  %v3955 = vadd.f32 %v3954, %v3700
  %v3956 = vadd.f32 %v3955, %v3701
  %v3957 = vadd.f32 %v3956, %v3702
  %v3958 = vadd.f32 %v3957, %v3703
  %v3959 = vadd.f32 %v3958, %v3704
  %v3960 = vadd.f32 %v3959, %v3705
  %v3961 = vadd.f32 %v3960, %v3706
  %v3962 = vadd.f32 %v3961, %v3707
  %v3963 = vadd.f32 %v3962, %v3708
  %v3964 = vadd.f32 %v3963, %v3709
  %v3965 = vadd.f32 %v3964, %v3710
  %v3966 = vadd.f32 %v3965, %v3711
  %v3967 = vadd.f32 %v3966, %v3712
  %v3968 = vadd.f32 %v3967, %v3713
  %v3969 = vadd.f32 %v3968, %v3714
  %v3970 = vadd.f32 %v3969, %v3715
  %v3971 = vadd.f32 %v3970, %v3716
  %v3972 = vadd.f32 %v3971, %v3717
  %v3973 = vadd.f32 %v3972, %v3718
  %v3974 = vadd.f32 %v3973, %v3719
  %v3975 = vadd.f32 %v3974, %v3720
  %v3976 = vadd.f32 %v3975, %v3721
  %v3977 = vadd.f32 %v3976, %v3722
  %v3978 = vadd.f32 %v3977, %v3723
  %v3979 = vadd.f32 %v3978, %v3724
  %v3980 = vadd.f32 %v3979, %v3725
  %v3981 = vrot.slane %v3980, 4
  %v3982 = vadd.f32 %v3980, %v3981
  %v3983 = vrot.slane %v3982, 2
  %v3984 = vadd.f32 %v3982, %v3983
  %v3985 = vrot.slane %v3984, 1
  %v3986 = vadd.f32 %v3984, %v3985
  %v3987 = vmul.f32 %v3986, %v3212
  %v3988 = vadd.f32 %v3987, 1e-05
  %v3989 = vrsqrt.pop %v3988
  %v3990 = vmul.f32 %v3214, %v3989
  %v3991 = vmul.f32 %v3215, %v3989
  %v3992 = vmul.f32 %v3216, %v3989
  %v3993 = vmul.f32 %v3217, %v3989
  %v3994 = vmul.f32 %v3218, %v3989
  %v3995 = vmul.f32 %v3219, %v3989
  %v3996 = vmul.f32 %v3220, %v3989
  %v3997 = vmul.f32 %v3221, %v3989
  %v3998 = vmul.f32 %v3222, %v3989
  %v3999 = vmul.f32 %v3223, %v3989
  %v4000 = vmul.f32 %v3224, %v3989
  %v4001 = vmul.f32 %v3225, %v3989
  %v4002 = vmul.f32 %v3226, %v3989
  %v4003 = vmul.f32 %v3227, %v3989
  %v4004 = vmul.f32 %v3228, %v3989
  %v4005 = vmul.f32 %v3229, %v3989
  %v4006 = vmul.f32 %v3230, %v3989
  %v4007 = vmul.f32 %v3231, %v3989
  %v4008 = vmul.f32 %v3232, %v3989
  %v4009 = vmul.f32 %v3233, %v3989
  %v4010 = vmul.f32 %v3234, %v3989
  %v4011 = vmul.f32 %v3235, %v3989
  %v4012 = vmul.f32 %v3236, %v3989
  %v4013 = vmul.f32 %v3237, %v3989
  %v4014 = vmul.f32 %v3238, %v3989
  %v4015 = vmul.f32 %v3239, %v3989
  %v4016 = vmul.f32 %v3240, %v3989
  %v4017 = vmul.f32 %v3241, %v3989
  %v4018 = vmul.f32 %v3242, %v3989
  %v4019 = vmul.f32 %v3243, %v3989
  %v4020 = vmul.f32 %v3244, %v3989
  %v4021 = vmul.f32 %v3245, %v3989
  %v4022 = vmul.f32 %v3246, %v3989
  %v4023 = vmul.f32 %v3247, %v3989
  %v4024 = vmul.f32 %v3248, %v3989
  %v4025 = vmul.f32 %v3249, %v3989
  %v4026 = vmul.f32 %v3250, %v3989
  %v4027 = vmul.f32 %v3251, %v3989
  %v4028 = vmul.f32 %v3252, %v3989
  %v4029 = vmul.f32 %v3253, %v3989
  %v4030 = vmul.f32 %v3254, %v3989
  %v4031 = vmul.f32 %v3255, %v3989
  %v4032 = vmul.f32 %v3256, %v3989
  %v4033 = vmul.f32 %v3257, %v3989
  %v4034 = vmul.f32 %v3258, %v3989
  %v4035 = vmul.f32 %v3259, %v3989
  %v4036 = vmul.f32 %v3260, %v3989
  %v4037 = vmul.f32 %v3261, %v3989
  %v4038 = vmul.f32 %v3262, %v3989
  %v4039 = vmul.f32 %v3263, %v3989
  %v4040 = vmul.f32 %v3264, %v3989
  %v4041 = vmul.f32 %v3265, %v3989
  %v4042 = vmul.f32 %v3266, %v3989
  %v4043 = vmul.f32 %v3267, %v3989
  %v4044 = vmul.f32 %v3268, %v3989
  %v4045 = vmul.f32 %v3269, %v3989
  %v4046 = vmul.f32 %v3270, %v3989
  %v4047 = vmul.f32 %v3271, %v3989
  %v4048 = vmul.f32 %v3272, %v3989
  %v4049 = vmul.f32 %v3273, %v3989
  %v4050 = vmul.f32 %v3274, %v3989
  %v4051 = vmul.f32 %v3275, %v3989
  %v4052 = vmul.f32 %v3276, %v3989
  %v4053 = vmul.f32 %v3277, %v3989
  %v4054 = vmul.f32 %v3278, %v3989
  %v4055 = vmul.f32 %v3279, %v3989
  %v4056 = vmul.f32 %v3280, %v3989
  %v4057 = vmul.f32 %v3281, %v3989
  %v4058 = vmul.f32 %v3282, %v3989
  %v4059 = vmul.f32 %v3283, %v3989
  %v4060 = vmul.f32 %v3284, %v3989
  %v4061 = vmul.f32 %v3285, %v3989
  %v4062 = vmul.f32 %v3286, %v3989
  %v4063 = vmul.f32 %v3287, %v3989
  %v4064 = vmul.f32 %v3288, %v3989
  %v4065 = vmul.f32 %v3289, %v3989
  %v4066 = vmul.f32 %v3290, %v3989
  %v4067 = vmul.f32 %v3291, %v3989
  %v4068 = vmul.f32 %v3292, %v3989
  %v4069 = vmul.f32 %v3293, %v3989
  %v4070 = vmul.f32 %v3294, %v3989
  %v4071 = vmul.f32 %v3295, %v3989
  %v4072 = vmul.f32 %v3296, %v3989
  %v4073 = vmul.f32 %v3297, %v3989
  %v4074 = vmul.f32 %v3298, %v3989
  %v4075 = vmul.f32 %v3299, %v3989
  %v4076 = vmul.f32 %v3300, %v3989
  %v4077 = vmul.f32 %v3301, %v3989
  %v4078 = vmul.f32 %v3302, %v3989
  %v4079 = vmul.f32 %v3303, %v3989
  %v4080 = vmul.f32 %v3304, %v3989
  %v4081 = vmul.f32 %v3305, %v3989
  %v4082 = vmul.f32 %v3306, %v3989
  %v4083 = vmul.f32 %v3307, %v3989
  %v4084 = vmul.f32 %v3308, %v3989
  %v4085 = vmul.f32 %v3309, %v3989
  %v4086 = vmul.f32 %v3310, %v3989
  %v4087 = vmul.f32 %v3311, %v3989
  %v4088 = vmul.f32 %v3312, %v3989
  %v4089 = vmul.f32 %v3313, %v3989
  %v4090 = vmul.f32 %v3314, %v3989
  %v4091 = vmul.f32 %v3315, %v3989
  %v4092 = vmul.f32 %v3316, %v3989
  %v4093 = vmul.f32 %v3317, %v3989
  %v4094 = vmul.f32 %v3318, %v3989
  %v4095 = vmul.f32 %v3319, %v3989
  %v4096 = vmul.f32 %v3320, %v3989
  %v4097 = vmul.f32 %v3321, %v3989
  %v4098 = vmul.f32 %v3322, %v3989
  %v4099 = vmul.f32 %v3323, %v3989
  %v4100 = vmul.f32 %v3324, %v3989
  %v4101 = vmul.f32 %v3325, %v3989
  %v4102 = vmul.f32 %v3326, %v3989
  %v4103 = vmul.f32 %v3327, %v3989
  %v4104 = vmul.f32 %v3328, %v3989
  %v4105 = vmul.f32 %v3329, %v3989
  %v4106 = vmul.f32 %v3330, %v3989
  %v4107 = vmul.f32 %v3331, %v3989
  %v4108 = vmul.f32 %v3332, %v3989
  %v4109 = vmul.f32 %v3333, %v3989
  %v4110 = vmul.f32 %v3334, %v3989
  %v4111 = vmul.f32 %v3335, %v3989
  %v4112 = vmul.f32 %v3336, %v3989
  %v4113 = vmul.f32 %v3337, %v3989
  %v4114 = vmul.f32 %v3338, %v3989
  %v4115 = vmul.f32 %v3339, %v3989
  %v4116 = vmul.f32 %v3340, %v3989
  %v4117 = vmul.f32 %v3341, %v3989
  %v4118 = vmul.f32 %v3342, %v3989
  %v4119 = vmul.f32 %v3343, %v3989
  %v4120 = vmul.f32 %v3344, %v3989
  %v4121 = vmul.f32 %v3345, %v3989
  %v4122 = vmul.f32 %v3346, %v3989
  %v4123 = vmul.f32 %v3347, %v3989
  %v4124 = vmul.f32 %v3348, %v3989
  %v4125 = vmul.f32 %v3349, %v3989
  %v4126 = vmul.f32 %v3350, %v3989
  %v4127 = vmul.f32 %v3351, %v3989
  %v4128 = vmul.f32 %v3352, %v3989
  %v4129 = vmul.f32 %v3353, %v3989
  %v4130 = vmul.f32 %v3354, %v3989
  %v4131 = vmul.f32 %v3355, %v3989
  %v4132 = vmul.f32 %v3356, %v3989
  %v4133 = vmul.f32 %v3357, %v3989
  %v4134 = vmul.f32 %v3358, %v3989
  %v4135 = vmul.f32 %v3359, %v3989
  %v4136 = vmul.f32 %v3360, %v3989
  %v4137 = vmul.f32 %v3361, %v3989
  %v4138 = vmul.f32 %v3362, %v3989
  %v4139 = vmul.f32 %v3363, %v3989
  %v4140 = vmul.f32 %v3364, %v3989
  %v4141 = vmul.f32 %v3365, %v3989
  %v4142 = vmul.f32 %v3366, %v3989
  %v4143 = vmul.f32 %v3367, %v3989
  %v4144 = vmul.f32 %v3368, %v3989
  %v4145 = vmul.f32 %v3369, %v3989
  %v4146 = vmul.f32 %v3370, %v3989
  %v4147 = vmul.f32 %v3371, %v3989
  %v4148 = vmul.f32 %v3372, %v3989
  %v4149 = vmul.f32 %v3373, %v3989
  %v4150 = vmul.f32 %v3374, %v3989
  %v4151 = vmul.f32 %v3375, %v3989
  %v4152 = vmul.f32 %v3376, %v3989
  %v4153 = vmul.f32 %v3377, %v3989
  %v4154 = vmul.f32 %v3378, %v3989
  %v4155 = vmul.f32 %v3379, %v3989
  %v4156 = vmul.f32 %v3380, %v3989
  %v4157 = vmul.f32 %v3381, %v3989
  %v4158 = vmul.f32 %v3382, %v3989
  %v4159 = vmul.f32 %v3383, %v3989
  %v4160 = vmul.f32 %v3384, %v3989
  %v4161 = vmul.f32 %v3385, %v3989
  %v4162 = vmul.f32 %v3386, %v3989
  %v4163 = vmul.f32 %v3387, %v3989
  %v4164 = vmul.f32 %v3388, %v3989
  %v4165 = vmul.f32 %v3389, %v3989
  %v4166 = vmul.f32 %v3390, %v3989
  %v4167 = vmul.f32 %v3391, %v3989
  %v4168 = vmul.f32 %v3392, %v3989
  %v4169 = vmul.f32 %v3393, %v3989
  %v4170 = vmul.f32 %v3394, %v3989
  %v4171 = vmul.f32 %v3395, %v3989
  %v4172 = vmul.f32 %v3396, %v3989
  %v4173 = vmul.f32 %v3397, %v3989
  %v4174 = vmul.f32 %v3398, %v3989
  %v4175 = vmul.f32 %v3399, %v3989
  %v4176 = vmul.f32 %v3400, %v3989
  %v4177 = vmul.f32 %v3401, %v3989
  %v4178 = vmul.f32 %v3402, %v3989
  %v4179 = vmul.f32 %v3403, %v3989
  %v4180 = vmul.f32 %v3404, %v3989
  %v4181 = vmul.f32 %v3405, %v3989
  %v4182 = vmul.f32 %v3406, %v3989
  %v4183 = vmul.f32 %v3407, %v3989
  %v4184 = vmul.f32 %v3408, %v3989
  %v4185 = vmul.f32 %v3409, %v3989
  %v4186 = vmul.f32 %v3410, %v3989
  %v4187 = vmul.f32 %v3411, %v3989
  %v4188 = vmul.f32 %v3412, %v3989
  %v4189 = vmul.f32 %v3413, %v3989
  %v4190 = vmul.f32 %v3414, %v3989
  %v4191 = vmul.f32 %v3415, %v3989
  %v4192 = vmul.f32 %v3416, %v3989
  %v4193 = vmul.f32 %v3417, %v3989
  %v4194 = vmul.f32 %v3418, %v3989
  %v4195 = vmul.f32 %v3419, %v3989
  %v4196 = vmul.f32 %v3420, %v3989
  %v4197 = vmul.f32 %v3421, %v3989
  %v4198 = vmul.f32 %v3422, %v3989
  %v4199 = vmul.f32 %v3423, %v3989
  %v4200 = vmul.f32 %v3424, %v3989
  %v4201 = vmul.f32 %v3425, %v3989
  %v4202 = vmul.f32 %v3426, %v3989
  %v4203 = vmul.f32 %v3427, %v3989
  %v4204 = vmul.f32 %v3428, %v3989
  %v4205 = vmul.f32 %v3429, %v3989
  %v4206 = vmul.f32 %v3430, %v3989
  %v4207 = vmul.f32 %v3431, %v3989
  %v4208 = vmul.f32 %v3432, %v3989
  %v4209 = vmul.f32 %v3433, %v3989
  %v4210 = vmul.f32 %v3434, %v3989
  %v4211 = vmul.f32 %v3435, %v3989
  %v4212 = vmul.f32 %v3436, %v3989
  %v4213 = vmul.f32 %v3437, %v3989
  %v4214 = vmul.f32 %v3438, %v3989
  %v4215 = vmul.f32 %v3439, %v3989
  %v4216 = vmul.f32 %v3440, %v3989
  %v4217 = vmul.f32 %v3441, %v3989
  %v4218 = vmul.f32 %v3442, %v3989
  %v4219 = vmul.f32 %v3443, %v3989
  %v4220 = vmul.f32 %v3444, %v3989
  %v4221 = vmul.f32 %v3445, %v3989
  %v4222 = vmul.f32 %v3446, %v3989
  %v4223 = vmul.f32 %v3447, %v3989
  %v4224 = vmul.f32 %v3448, %v3989
  %v4225 = vmul.f32 %v3449, %v3989
  %v4226 = vmul.f32 %v3450, %v3989
  %v4227 = vmul.f32 %v3451, %v3989
  %v4228 = vmul.f32 %v3452, %v3989
  %v4229 = vmul.f32 %v3453, %v3989
  %v4230 = vmul.f32 %v3454, %v3989
  %v4231 = vmul.f32 %v3455, %v3989
  %v4232 = vmul.f32 %v3456, %v3989
  %v4233 = vmul.f32 %v3457, %v3989
  %v4234 = vmul.f32 %v3458, %v3989
  %v4235 = vmul.f32 %v3459, %v3989
  %v4236 = vmul.f32 %v3460, %v3989
  %v4237 = vmul.f32 %v3461, %v3989
  %v4238 = vmul.f32 %v3462, %v3989
  %v4239 = vmul.f32 %v3463, %v3989
  %v4240 = vmul.f32 %v3464, %v3989
  %v4241 = vmul.f32 %v3465, %v3989
  %v4242 = vmul.f32 %v3466, %v3989
  %v4243 = vmul.f32 %v3467, %v3989
  %v4244 = vmul.f32 %v3468, %v3989
  %v4245 = vmul.f32 %v3469, %v3989
  %v4246 = vld [vmem:[%s2] sm:$0x1]
  %v4248 = vlaneseq
  %v4249 = vshrl.u32 %v4248, 7
  %v4250 = vsub.s32 0, %v4249
  %v4251 = vrot.slane %v4246, %v4250
  %v4253 = vmul.f32 %v3990, %v4251
  %v4254 = vmul.f32 %v3991, %v4251
  %v4255 = vmul.f32 %v3992, %v4251
  %v4256 = vmul.f32 %v3993, %v4251
  %v4257 = vmul.f32 %v3994, %v4251
  %v4258 = vmul.f32 %v3995, %v4251
  %v4259 = vmul.f32 %v3996, %v4251
  %v4260 = vmul.f32 %v3997, %v4251
  %v4261 = vmul.f32 %v3998, %v4251
  %v4262 = vmul.f32 %v3999, %v4251
  %v4263 = vmul.f32 %v4000, %v4251
  %v4264 = vmul.f32 %v4001, %v4251
  %v4265 = vmul.f32 %v4002, %v4251
  %v4266 = vmul.f32 %v4003, %v4251
  %v4267 = vmul.f32 %v4004, %v4251
  %v4268 = vmul.f32 %v4005, %v4251
  %v4269 = vmul.f32 %v4006, %v4251
  %v4270 = vmul.f32 %v4007, %v4251
  %v4271 = vmul.f32 %v4008, %v4251
  %v4272 = vmul.f32 %v4009, %v4251
  %v4273 = vmul.f32 %v4010, %v4251
  %v4274 = vmul.f32 %v4011, %v4251
  %v4275 = vmul.f32 %v4012, %v4251
  %v4276 = vmul.f32 %v4013, %v4251
  %v4277 = vmul.f32 %v4014, %v4251
  %v4278 = vmul.f32 %v4015, %v4251
  %v4279 = vmul.f32 %v4016, %v4251
  %v4280 = vmul.f32 %v4017, %v4251
  %v4281 = vmul.f32 %v4018, %v4251
  %v4282 = vmul.f32 %v4019, %v4251
  %v4283 = vmul.f32 %v4020, %v4251
  %v4284 = vmul.f32 %v4021, %v4251
  %v4285 = vmul.f32 %v4022, %v4251
  %v4286 = vmul.f32 %v4023, %v4251
  %v4287 = vmul.f32 %v4024, %v4251
  %v4288 = vmul.f32 %v4025, %v4251
  %v4289 = vmul.f32 %v4026, %v4251
  %v4290 = vmul.f32 %v4027, %v4251
  %v4291 = vmul.f32 %v4028, %v4251
  %v4292 = vmul.f32 %v4029, %v4251
  %v4293 = vmul.f32 %v4030, %v4251
  %v4294 = vmul.f32 %v4031, %v4251
  %v4295 = vmul.f32 %v4032, %v4251
  %v4296 = vmul.f32 %v4033, %v4251
  %v4297 = vmul.f32 %v4034, %v4251
  %v4298 = vmul.f32 %v4035, %v4251
  %v4299 = vmul.f32 %v4036, %v4251
  %v4300 = vmul.f32 %v4037, %v4251
  %v4301 = vmul.f32 %v4038, %v4251
  %v4302 = vmul.f32 %v4039, %v4251
  %v4303 = vmul.f32 %v4040, %v4251
  %v4304 = vmul.f32 %v4041, %v4251
  %v4305 = vmul.f32 %v4042, %v4251
  %v4306 = vmul.f32 %v4043, %v4251
  %v4307 = vmul.f32 %v4044, %v4251
  %v4308 = vmul.f32 %v4045, %v4251
  %v4309 = vmul.f32 %v4046, %v4251
  %v4310 = vmul.f32 %v4047, %v4251
  %v4311 = vmul.f32 %v4048, %v4251
  %v4312 = vmul.f32 %v4049, %v4251
  %v4313 = vmul.f32 %v4050, %v4251
  %v4314 = vmul.f32 %v4051, %v4251
  %v4315 = vmul.f32 %v4052, %v4251
  %v4316 = vmul.f32 %v4053, %v4251
  %v4317 = vmul.f32 %v4054, %v4251
  %v4318 = vmul.f32 %v4055, %v4251
  %v4319 = vmul.f32 %v4056, %v4251
  %v4320 = vmul.f32 %v4057, %v4251
  %v4321 = vmul.f32 %v4058, %v4251
  %v4322 = vmul.f32 %v4059, %v4251
  %v4323 = vmul.f32 %v4060, %v4251
  %v4324 = vmul.f32 %v4061, %v4251
  %v4325 = vmul.f32 %v4062, %v4251
  %v4326 = vmul.f32 %v4063, %v4251
  %v4327 = vmul.f32 %v4064, %v4251
  %v4328 = vmul.f32 %v4065, %v4251
  %v4329 = vmul.f32 %v4066, %v4251
  %v4330 = vmul.f32 %v4067, %v4251
  %v4331 = vmul.f32 %v4068, %v4251
  %v4332 = vmul.f32 %v4069, %v4251
  %v4333 = vmul.f32 %v4070, %v4251
  %v4334 = vmul.f32 %v4071, %v4251
  %v4335 = vmul.f32 %v4072, %v4251
  %v4336 = vmul.f32 %v4073, %v4251
  %v4337 = vmul.f32 %v4074, %v4251
  %v4338 = vmul.f32 %v4075, %v4251
  %v4339 = vmul.f32 %v4076, %v4251
  %v4340 = vmul.f32 %v4077, %v4251
  %v4341 = vmul.f32 %v4078, %v4251
  %v4342 = vmul.f32 %v4079, %v4251
  %v4343 = vmul.f32 %v4080, %v4251
  %v4344 = vmul.f32 %v4081, %v4251
  %v4345 = vmul.f32 %v4082, %v4251
  %v4346 = vmul.f32 %v4083, %v4251
  %v4347 = vmul.f32 %v4084, %v4251
  %v4348 = vmul.f32 %v4085, %v4251
  %v4349 = vmul.f32 %v4086, %v4251
  %v4350 = vmul.f32 %v4087, %v4251
  %v4351 = vmul.f32 %v4088, %v4251
  %v4352 = vmul.f32 %v4089, %v4251
  %v4353 = vmul.f32 %v4090, %v4251
  %v4354 = vmul.f32 %v4091, %v4251
  %v4355 = vmul.f32 %v4092, %v4251
  %v4356 = vmul.f32 %v4093, %v4251
  %v4357 = vmul.f32 %v4094, %v4251
  %v4358 = vmul.f32 %v4095, %v4251
  %v4359 = vmul.f32 %v4096, %v4251
  %v4360 = vmul.f32 %v4097, %v4251
  %v4361 = vmul.f32 %v4098, %v4251
  %v4362 = vmul.f32 %v4099, %v4251
  %v4363 = vmul.f32 %v4100, %v4251
  %v4364 = vmul.f32 %v4101, %v4251
  %v4365 = vmul.f32 %v4102, %v4251
  %v4366 = vmul.f32 %v4103, %v4251
  %v4367 = vmul.f32 %v4104, %v4251
  %v4368 = vmul.f32 %v4105, %v4251
  %v4369 = vmul.f32 %v4106, %v4251
  %v4370 = vmul.f32 %v4107, %v4251
  %v4371 = vmul.f32 %v4108, %v4251
  %v4372 = vmul.f32 %v4109, %v4251
  %v4373 = vmul.f32 %v4110, %v4251
  %v4374 = vmul.f32 %v4111, %v4251
  %v4375 = vmul.f32 %v4112, %v4251
  %v4376 = vmul.f32 %v4113, %v4251
  %v4377 = vmul.f32 %v4114, %v4251
  %v4378 = vmul.f32 %v4115, %v4251
  %v4379 = vmul.f32 %v4116, %v4251
  %v4380 = vmul.f32 %v4117, %v4251
  %v4381 = vmul.f32 %v4118, %v4251
  %v4382 = vmul.f32 %v4119, %v4251
  %v4383 = vmul.f32 %v4120, %v4251
  %v4384 = vmul.f32 %v4121, %v4251
  %v4385 = vmul.f32 %v4122, %v4251
  %v4386 = vmul.f32 %v4123, %v4251
  %v4387 = vmul.f32 %v4124, %v4251
  %v4388 = vmul.f32 %v4125, %v4251
  %v4389 = vmul.f32 %v4126, %v4251
  %v4390 = vmul.f32 %v4127, %v4251
  %v4391 = vmul.f32 %v4128, %v4251
  %v4392 = vmul.f32 %v4129, %v4251
  %v4393 = vmul.f32 %v4130, %v4251
  %v4394 = vmul.f32 %v4131, %v4251
  %v4395 = vmul.f32 %v4132, %v4251
  %v4396 = vmul.f32 %v4133, %v4251
  %v4397 = vmul.f32 %v4134, %v4251
  %v4398 = vmul.f32 %v4135, %v4251
  %v4399 = vmul.f32 %v4136, %v4251
  %v4400 = vmul.f32 %v4137, %v4251
  %v4401 = vmul.f32 %v4138, %v4251
  %v4402 = vmul.f32 %v4139, %v4251
  %v4403 = vmul.f32 %v4140, %v4251
  %v4404 = vmul.f32 %v4141, %v4251
  %v4405 = vmul.f32 %v4142, %v4251
  %v4406 = vmul.f32 %v4143, %v4251
  %v4407 = vmul.f32 %v4144, %v4251
  %v4408 = vmul.f32 %v4145, %v4251
  %v4409 = vmul.f32 %v4146, %v4251
  %v4410 = vmul.f32 %v4147, %v4251
  %v4411 = vmul.f32 %v4148, %v4251
  %v4412 = vmul.f32 %v4149, %v4251
  %v4413 = vmul.f32 %v4150, %v4251
  %v4414 = vmul.f32 %v4151, %v4251
  %v4415 = vmul.f32 %v4152, %v4251
  %v4416 = vmul.f32 %v4153, %v4251
  %v4417 = vmul.f32 %v4154, %v4251
  %v4418 = vmul.f32 %v4155, %v4251
  %v4419 = vmul.f32 %v4156, %v4251
  %v4420 = vmul.f32 %v4157, %v4251
  %v4421 = vmul.f32 %v4158, %v4251
  %v4422 = vmul.f32 %v4159, %v4251
  %v4423 = vmul.f32 %v4160, %v4251
  %v4424 = vmul.f32 %v4161, %v4251
  %v4425 = vmul.f32 %v4162, %v4251
  %v4426 = vmul.f32 %v4163, %v4251
  %v4427 = vmul.f32 %v4164, %v4251
  %v4428 = vmul.f32 %v4165, %v4251
  %v4429 = vmul.f32 %v4166, %v4251
  %v4430 = vmul.f32 %v4167, %v4251
  %v4431 = vmul.f32 %v4168, %v4251
  %v4432 = vmul.f32 %v4169, %v4251
  %v4433 = vmul.f32 %v4170, %v4251
  %v4434 = vmul.f32 %v4171, %v4251
  %v4435 = vmul.f32 %v4172, %v4251
  %v4436 = vmul.f32 %v4173, %v4251
  %v4437 = vmul.f32 %v4174, %v4251
  %v4438 = vmul.f32 %v4175, %v4251
  %v4439 = vmul.f32 %v4176, %v4251
  %v4440 = vmul.f32 %v4177, %v4251
  %v4441 = vmul.f32 %v4178, %v4251
  %v4442 = vmul.f32 %v4179, %v4251
  %v4443 = vmul.f32 %v4180, %v4251
  %v4444 = vmul.f32 %v4181, %v4251
  %v4445 = vmul.f32 %v4182, %v4251
  %v4446 = vmul.f32 %v4183, %v4251
  %v4447 = vmul.f32 %v4184, %v4251
  %v4448 = vmul.f32 %v4185, %v4251
  %v4449 = vmul.f32 %v4186, %v4251
  %v4450 = vmul.f32 %v4187, %v4251
  %v4451 = vmul.f32 %v4188, %v4251
  %v4452 = vmul.f32 %v4189, %v4251
  %v4453 = vmul.f32 %v4190, %v4251
  %v4454 = vmul.f32 %v4191, %v4251
  %v4455 = vmul.f32 %v4192, %v4251
  %v4456 = vmul.f32 %v4193, %v4251
  %v4457 = vmul.f32 %v4194, %v4251
  %v4458 = vmul.f32 %v4195, %v4251
  %v4459 = vmul.f32 %v4196, %v4251
  %v4460 = vmul.f32 %v4197, %v4251
  %v4461 = vmul.f32 %v4198, %v4251
  %v4462 = vmul.f32 %v4199, %v4251
  %v4463 = vmul.f32 %v4200, %v4251
  %v4464 = vmul.f32 %v4201, %v4251
  %v4465 = vmul.f32 %v4202, %v4251
  %v4466 = vmul.f32 %v4203, %v4251
  %v4467 = vmul.f32 %v4204, %v4251
  %v4468 = vmul.f32 %v4205, %v4251
  %v4469 = vmul.f32 %v4206, %v4251
  %v4470 = vmul.f32 %v4207, %v4251
  %v4471 = vmul.f32 %v4208, %v4251
  %v4472 = vmul.f32 %v4209, %v4251
  %v4473 = vmul.f32 %v4210, %v4251
  %v4474 = vmul.f32 %v4211, %v4251
  %v4475 = vmul.f32 %v4212, %v4251
  %v4476 = vmul.f32 %v4213, %v4251
  %v4477 = vmul.f32 %v4214, %v4251
  %v4478 = vmul.f32 %v4215, %v4251
  %v4479 = vmul.f32 %v4216, %v4251
  %v4480 = vmul.f32 %v4217, %v4251
  %v4481 = vmul.f32 %v4218, %v4251
  %v4482 = vmul.f32 %v4219, %v4251
  %v4483 = vmul.f32 %v4220, %v4251
  %v4484 = vmul.f32 %v4221, %v4251
  %v4485 = vmul.f32 %v4222, %v4251
  %v4486 = vmul.f32 %v4223, %v4251
  %v4487 = vmul.f32 %v4224, %v4251
  %v4488 = vmul.f32 %v4225, %v4251
  %v4489 = vmul.f32 %v4226, %v4251
  %v4490 = vmul.f32 %v4227, %v4251
  %v4491 = vmul.f32 %v4228, %v4251
  %v4492 = vmul.f32 %v4229, %v4251
  %v4493 = vmul.f32 %v4230, %v4251
  %v4494 = vmul.f32 %v4231, %v4251
  %v4495 = vmul.f32 %v4232, %v4251
  %v4496 = vmul.f32 %v4233, %v4251
  %v4497 = vmul.f32 %v4234, %v4251
  %v4498 = vmul.f32 %v4235, %v4251
  %v4499 = vmul.f32 %v4236, %v4251
  %v4500 = vmul.f32 %v4237, %v4251
  %v4501 = vmul.f32 %v4238, %v4251
  %v4502 = vmul.f32 %v4239, %v4251
  %v4503 = vmul.f32 %v4240, %v4251
  %v4504 = vmul.f32 %v4241, %v4251
  %v4505 = vmul.f32 %v4242, %v4251
  %v4506 = vmul.f32 %v4243, %v4251
  %v4507 = vmul.f32 %v4244, %v4251
  %v4508 = vmul.f32 %v4245, %v4251
  %v4509 = vld [vmem:[%s3] sm:$0x1]
  %v4511 = vlaneseq
  %v4512 = vshrl.u32 %v4511, 7
  %v4513 = vsub.s32 0, %v4512
  %v4514 = vrot.slane %v4509, %v4513
  %v4516 = vadd.f32 %v4253, %v4514
  %v4517 = vadd.f32 %v4254, %v4514
  %v4518 = vadd.f32 %v4255, %v4514
  %v4519 = vadd.f32 %v4256, %v4514
  %v4520 = vadd.f32 %v4257, %v4514
  %v4521 = vadd.f32 %v4258, %v4514
  %v4522 = vadd.f32 %v4259, %v4514
  %v4523 = vadd.f32 %v4260, %v4514
  %v4524 = vadd.f32 %v4261, %v4514
  %v4525 = vadd.f32 %v4262, %v4514
  %v4526 = vadd.f32 %v4263, %v4514
  %v4527 = vadd.f32 %v4264, %v4514
  %v4528 = vadd.f32 %v4265, %v4514
  %v4529 = vadd.f32 %v4266, %v4514
  %v4530 = vadd.f32 %v4267, %v4514
  %v4531 = vadd.f32 %v4268, %v4514
  %v4532 = vadd.f32 %v4269, %v4514
  %v4533 = vadd.f32 %v4270, %v4514
  %v4534 = vadd.f32 %v4271, %v4514
  %v4535 = vadd.f32 %v4272, %v4514
  %v4536 = vadd.f32 %v4273, %v4514
  %v4537 = vadd.f32 %v4274, %v4514
  %v4538 = vadd.f32 %v4275, %v4514
  %v4539 = vadd.f32 %v4276, %v4514
  %v4540 = vadd.f32 %v4277, %v4514
  %v4541 = vadd.f32 %v4278, %v4514
  %v4542 = vadd.f32 %v4279, %v4514
  %v4543 = vadd.f32 %v4280, %v4514
  %v4544 = vadd.f32 %v4281, %v4514
  %v4545 = vadd.f32 %v4282, %v4514
  %v4546 = vadd.f32 %v4283, %v4514
  %v4547 = vadd.f32 %v4284, %v4514
  %v4548 = vadd.f32 %v4285, %v4514
  %v4549 = vadd.f32 %v4286, %v4514
  %v4550 = vadd.f32 %v4287, %v4514
  %v4551 = vadd.f32 %v4288, %v4514
  %v4552 = vadd.f32 %v4289, %v4514
  %v4553 = vadd.f32 %v4290, %v4514
  %v4554 = vadd.f32 %v4291, %v4514
  %v4555 = vadd.f32 %v4292, %v4514
  %v4556 = vadd.f32 %v4293, %v4514
  %v4557 = vadd.f32 %v4294, %v4514
  %v4558 = vadd.f32 %v4295, %v4514
  %v4559 = vadd.f32 %v4296, %v4514
  %v4560 = vadd.f32 %v4297, %v4514
  %v4561 = vadd.f32 %v4298, %v4514
  %v4562 = vadd.f32 %v4299, %v4514
  %v4563 = vadd.f32 %v4300, %v4514
  %v4564 = vadd.f32 %v4301, %v4514
  %v4565 = vadd.f32 %v4302, %v4514
  %v4566 = vadd.f32 %v4303, %v4514
  %v4567 = vadd.f32 %v4304, %v4514
  %v4568 = vadd.f32 %v4305, %v4514
  %v4569 = vadd.f32 %v4306, %v4514
  %v4570 = vadd.f32 %v4307, %v4514
  %v4571 = vadd.f32 %v4308, %v4514
  %v4572 = vadd.f32 %v4309, %v4514
  %v4573 = vadd.f32 %v4310, %v4514
  %v4574 = vadd.f32 %v4311, %v4514
  %v4575 = vadd.f32 %v4312, %v4514
  %v4576 = vadd.f32 %v4313, %v4514
  %v4577 = vadd.f32 %v4314, %v4514
  %v4578 = vadd.f32 %v4315, %v4514
  %v4579 = vadd.f32 %v4316, %v4514
  %v4580 = vadd.f32 %v4317, %v4514
  %v4581 = vadd.f32 %v4318, %v4514
  %v4582 = vadd.f32 %v4319, %v4514
  %v4583 = vadd.f32 %v4320, %v4514
  %v4584 = vadd.f32 %v4321, %v4514
  %v4585 = vadd.f32 %v4322, %v4514
  %v4586 = vadd.f32 %v4323, %v4514
  %v4587 = vadd.f32 %v4324, %v4514
  %v4588 = vadd.f32 %v4325, %v4514
  %v4589 = vadd.f32 %v4326, %v4514
  %v4590 = vadd.f32 %v4327, %v4514
  %v4591 = vadd.f32 %v4328, %v4514
  %v4592 = vadd.f32 %v4329, %v4514
  %v4593 = vadd.f32 %v4330, %v4514
  %v4594 = vadd.f32 %v4331, %v4514
  %v4595 = vadd.f32 %v4332, %v4514
  %v4596 = vadd.f32 %v4333, %v4514
  %v4597 = vadd.f32 %v4334, %v4514
  %v4598 = vadd.f32 %v4335, %v4514
  %v4599 = vadd.f32 %v4336, %v4514
  %v4600 = vadd.f32 %v4337, %v4514
  %v4601 = vadd.f32 %v4338, %v4514
  %v4602 = vadd.f32 %v4339, %v4514
  %v4603 = vadd.f32 %v4340, %v4514
  %v4604 = vadd.f32 %v4341, %v4514
  %v4605 = vadd.f32 %v4342, %v4514
  %v4606 = vadd.f32 %v4343, %v4514
  %v4607 = vadd.f32 %v4344, %v4514
  %v4608 = vadd.f32 %v4345, %v4514
  %v4609 = vadd.f32 %v4346, %v4514
  %v4610 = vadd.f32 %v4347, %v4514
  %v4611 = vadd.f32 %v4348, %v4514
  %v4612 = vadd.f32 %v4349, %v4514
  %v4613 = vadd.f32 %v4350, %v4514
  %v4614 = vadd.f32 %v4351, %v4514
  %v4615 = vadd.f32 %v4352, %v4514
  %v4616 = vadd.f32 %v4353, %v4514
  %v4617 = vadd.f32 %v4354, %v4514
  %v4618 = vadd.f32 %v4355, %v4514
  %v4619 = vadd.f32 %v4356, %v4514
  %v4620 = vadd.f32 %v4357, %v4514
  %v4621 = vadd.f32 %v4358, %v4514
  %v4622 = vadd.f32 %v4359, %v4514
  %v4623 = vadd.f32 %v4360, %v4514
  %v4624 = vadd.f32 %v4361, %v4514
  %v4625 = vadd.f32 %v4362, %v4514
  %v4626 = vadd.f32 %v4363, %v4514
  %v4627 = vadd.f32 %v4364, %v4514
  %v4628 = vadd.f32 %v4365, %v4514
  %v4629 = vadd.f32 %v4366, %v4514
  %v4630 = vadd.f32 %v4367, %v4514
  %v4631 = vadd.f32 %v4368, %v4514
  %v4632 = vadd.f32 %v4369, %v4514
  %v4633 = vadd.f32 %v4370, %v4514
  %v4634 = vadd.f32 %v4371, %v4514
  %v4635 = vadd.f32 %v4372, %v4514
  %v4636 = vadd.f32 %v4373, %v4514
  %v4637 = vadd.f32 %v4374, %v4514
  %v4638 = vadd.f32 %v4375, %v4514
  %v4639 = vadd.f32 %v4376, %v4514
  %v4640 = vadd.f32 %v4377, %v4514
  %v4641 = vadd.f32 %v4378, %v4514
  %v4642 = vadd.f32 %v4379, %v4514
  %v4643 = vadd.f32 %v4380, %v4514
  %v4644 = vadd.f32 %v4381, %v4514
  %v4645 = vadd.f32 %v4382, %v4514
  %v4646 = vadd.f32 %v4383, %v4514
  %v4647 = vadd.f32 %v4384, %v4514
  %v4648 = vadd.f32 %v4385, %v4514
  %v4649 = vadd.f32 %v4386, %v4514
  %v4650 = vadd.f32 %v4387, %v4514
  %v4651 = vadd.f32 %v4388, %v4514
  %v4652 = vadd.f32 %v4389, %v4514
  %v4653 = vadd.f32 %v4390, %v4514
  %v4654 = vadd.f32 %v4391, %v4514
  %v4655 = vadd.f32 %v4392, %v4514
  %v4656 = vadd.f32 %v4393, %v4514
  %v4657 = vadd.f32 %v4394, %v4514
  %v4658 = vadd.f32 %v4395, %v4514
  %v4659 = vadd.f32 %v4396, %v4514
  %v4660 = vadd.f32 %v4397, %v4514
  %v4661 = vadd.f32 %v4398, %v4514
  %v4662 = vadd.f32 %v4399, %v4514
  %v4663 = vadd.f32 %v4400, %v4514
  %v4664 = vadd.f32 %v4401, %v4514
  %v4665 = vadd.f32 %v4402, %v4514
  %v4666 = vadd.f32 %v4403, %v4514
  %v4667 = vadd.f32 %v4404, %v4514
  %v4668 = vadd.f32 %v4405, %v4514
  %v4669 = vadd.f32 %v4406, %v4514
  %v4670 = vadd.f32 %v4407, %v4514
  %v4671 = vadd.f32 %v4408, %v4514
  %v4672 = vadd.f32 %v4409, %v4514
  %v4673 = vadd.f32 %v4410, %v4514
  %v4674 = vadd.f32 %v4411, %v4514
  %v4675 = vadd.f32 %v4412, %v4514
  %v4676 = vadd.f32 %v4413, %v4514
  %v4677 = vadd.f32 %v4414, %v4514
  %v4678 = vadd.f32 %v4415, %v4514
  %v4679 = vadd.f32 %v4416, %v4514
  %v4680 = vadd.f32 %v4417, %v4514
  %v4681 = vadd.f32 %v4418, %v4514
  %v4682 = vadd.f32 %v4419, %v4514
  %v4683 = vadd.f32 %v4420, %v4514
  %v4684 = vadd.f32 %v4421, %v4514
  %v4685 = vadd.f32 %v4422, %v4514
  %v4686 = vadd.f32 %v4423, %v4514
  %v4687 = vadd.f32 %v4424, %v4514
  %v4688 = vadd.f32 %v4425, %v4514
  %v4689 = vadd.f32 %v4426, %v4514
  %v4690 = vadd.f32 %v4427, %v4514
  %v4691 = vadd.f32 %v4428, %v4514
  %v4692 = vadd.f32 %v4429, %v4514
  %v4693 = vadd.f32 %v4430, %v4514
  %v4694 = vadd.f32 %v4431, %v4514
  %v4695 = vadd.f32 %v4432, %v4514
  %v4696 = vadd.f32 %v4433, %v4514
  %v4697 = vadd.f32 %v4434, %v4514
  %v4698 = vadd.f32 %v4435, %v4514
  %v4699 = vadd.f32 %v4436, %v4514
  %v4700 = vadd.f32 %v4437, %v4514
  %v4701 = vadd.f32 %v4438, %v4514
  %v4702 = vadd.f32 %v4439, %v4514
  %v4703 = vadd.f32 %v4440, %v4514
  %v4704 = vadd.f32 %v4441, %v4514
  %v4705 = vadd.f32 %v4442, %v4514
  %v4706 = vadd.f32 %v4443, %v4514
  %v4707 = vadd.f32 %v4444, %v4514
  %v4708 = vadd.f32 %v4445, %v4514
  %v4709 = vadd.f32 %v4446, %v4514
  %v4710 = vadd.f32 %v4447, %v4514
  %v4711 = vadd.f32 %v4448, %v4514
  %v4712 = vadd.f32 %v4449, %v4514
  %v4713 = vadd.f32 %v4450, %v4514
  %v4714 = vadd.f32 %v4451, %v4514
  %v4715 = vadd.f32 %v4452, %v4514
  %v4716 = vadd.f32 %v4453, %v4514
  %v4717 = vadd.f32 %v4454, %v4514
  %v4718 = vadd.f32 %v4455, %v4514
  %v4719 = vadd.f32 %v4456, %v4514
  %v4720 = vadd.f32 %v4457, %v4514
  %v4721 = vadd.f32 %v4458, %v4514
  %v4722 = vadd.f32 %v4459, %v4514
  %v4723 = vadd.f32 %v4460, %v4514
  %v4724 = vadd.f32 %v4461, %v4514
  %v4725 = vadd.f32 %v4462, %v4514
  %v4726 = vadd.f32 %v4463, %v4514
  %v4727 = vadd.f32 %v4464, %v4514
  %v4728 = vadd.f32 %v4465, %v4514
  %v4729 = vadd.f32 %v4466, %v4514
  %v4730 = vadd.f32 %v4467, %v4514
  %v4731 = vadd.f32 %v4468, %v4514
  %v4732 = vadd.f32 %v4469, %v4514
  %v4733 = vadd.f32 %v4470, %v4514
  %v4734 = vadd.f32 %v4471, %v4514
  %v4735 = vadd.f32 %v4472, %v4514
  %v4736 = vadd.f32 %v4473, %v4514
  %v4737 = vadd.f32 %v4474, %v4514
  %v4738 = vadd.f32 %v4475, %v4514
  %v4739 = vadd.f32 %v4476, %v4514
  %v4740 = vadd.f32 %v4477, %v4514
  %v4741 = vadd.f32 %v4478, %v4514
  %v4742 = vadd.f32 %v4479, %v4514
  %v4743 = vadd.f32 %v4480, %v4514
  %v4744 = vadd.f32 %v4481, %v4514
  %v4745 = vadd.f32 %v4482, %v4514
  %v4746 = vadd.f32 %v4483, %v4514
  %v4747 = vadd.f32 %v4484, %v4514
  %v4748 = vadd.f32 %v4485, %v4514
  %v4749 = vadd.f32 %v4486, %v4514
  %v4750 = vadd.f32 %v4487, %v4514
  %v4751 = vadd.f32 %v4488, %v4514
  %v4752 = vadd.f32 %v4489, %v4514
  %v4753 = vadd.f32 %v4490, %v4514
  %v4754 = vadd.f32 %v4491, %v4514
  %v4755 = vadd.f32 %v4492, %v4514
  %v4756 = vadd.f32 %v4493, %v4514
  %v4757 = vadd.f32 %v4494, %v4514
  %v4758 = vadd.f32 %v4495, %v4514
  %v4759 = vadd.f32 %v4496, %v4514
  %v4760 = vadd.f32 %v4497, %v4514
  %v4761 = vadd.f32 %v4498, %v4514
  %v4762 = vadd.f32 %v4499, %v4514
  %v4763 = vadd.f32 %v4500, %v4514
  %v4764 = vadd.f32 %v4501, %v4514
  %v4765 = vadd.f32 %v4502, %v4514
  %v4766 = vadd.f32 %v4503, %v4514
  %v4767 = vadd.f32 %v4504, %v4514
  %v4768 = vadd.f32 %v4505, %v4514
  %v4769 = vadd.f32 %v4506, %v4514
  %v4770 = vadd.f32 %v4507, %v4514
  %v4771 = vadd.f32 %v4508, %v4514
  %v4772 = vmax.f32 %v4516, 0.0
  %v4773 = vmax.f32 %v4517, 0.0
  %v4774 = vmax.f32 %v4518, 0.0
  %v4775 = vmax.f32 %v4519, 0.0
  %v4776 = vmax.f32 %v4520, 0.0
  %v4777 = vmax.f32 %v4521, 0.0
  %v4778 = vmax.f32 %v4522, 0.0
  %v4779 = vmax.f32 %v4523, 0.0
  %v4780 = vmax.f32 %v4524, 0.0
  %v4781 = vmax.f32 %v4525, 0.0
  %v4782 = vmax.f32 %v4526, 0.0
  %v4783 = vmax.f32 %v4527, 0.0
  %v4784 = vmax.f32 %v4528, 0.0
  %v4785 = vmax.f32 %v4529, 0.0
  %v4786 = vmax.f32 %v4530, 0.0
  %v4787 = vmax.f32 %v4531, 0.0
  %v4788 = vmax.f32 %v4532, 0.0
  %v4789 = vmax.f32 %v4533, 0.0
  %v4790 = vmax.f32 %v4534, 0.0
  %v4791 = vmax.f32 %v4535, 0.0
  %v4792 = vmax.f32 %v4536, 0.0
  %v4793 = vmax.f32 %v4537, 0.0
  %v4794 = vmax.f32 %v4538, 0.0
  %v4795 = vmax.f32 %v4539, 0.0
  %v4796 = vmax.f32 %v4540, 0.0
  %v4797 = vmax.f32 %v4541, 0.0
  %v4798 = vmax.f32 %v4542, 0.0
  %v4799 = vmax.f32 %v4543, 0.0
  %v4800 = vmax.f32 %v4544, 0.0
  %v4801 = vmax.f32 %v4545, 0.0
  %v4802 = vmax.f32 %v4546, 0.0
  %v4803 = vmax.f32 %v4547, 0.0
  %v4804 = vmax.f32 %v4548, 0.0
  %v4805 = vmax.f32 %v4549, 0.0
  %v4806 = vmax.f32 %v4550, 0.0
  %v4807 = vmax.f32 %v4551, 0.0
  %v4808 = vmax.f32 %v4552, 0.0
  %v4809 = vmax.f32 %v4553, 0.0
  %v4810 = vmax.f32 %v4554, 0.0
  %v4811 = vmax.f32 %v4555, 0.0
  %v4812 = vmax.f32 %v4556, 0.0
  %v4813 = vmax.f32 %v4557, 0.0
  %v4814 = vmax.f32 %v4558, 0.0
  %v4815 = vmax.f32 %v4559, 0.0
  %v4816 = vmax.f32 %v4560, 0.0
  %v4817 = vmax.f32 %v4561, 0.0
  %v4818 = vmax.f32 %v4562, 0.0
  %v4819 = vmax.f32 %v4563, 0.0
  %v4820 = vmax.f32 %v4564, 0.0
  %v4821 = vmax.f32 %v4565, 0.0
  %v4822 = vmax.f32 %v4566, 0.0
  %v4823 = vmax.f32 %v4567, 0.0
  %v4824 = vmax.f32 %v4568, 0.0
  %v4825 = vmax.f32 %v4569, 0.0
  %v4826 = vmax.f32 %v4570, 0.0
  %v4827 = vmax.f32 %v4571, 0.0
  %v4828 = vmax.f32 %v4572, 0.0
  %v4829 = vmax.f32 %v4573, 0.0
  %v4830 = vmax.f32 %v4574, 0.0
  %v4831 = vmax.f32 %v4575, 0.0
  %v4832 = vmax.f32 %v4576, 0.0
  %v4833 = vmax.f32 %v4577, 0.0
  %v4834 = vmax.f32 %v4578, 0.0
  %v4835 = vmax.f32 %v4579, 0.0
  %v4836 = vmax.f32 %v4580, 0.0
  %v4837 = vmax.f32 %v4581, 0.0
  %v4838 = vmax.f32 %v4582, 0.0
  %v4839 = vmax.f32 %v4583, 0.0
  %v4840 = vmax.f32 %v4584, 0.0
  %v4841 = vmax.f32 %v4585, 0.0
  %v4842 = vmax.f32 %v4586, 0.0
  %v4843 = vmax.f32 %v4587, 0.0
  %v4844 = vmax.f32 %v4588, 0.0
  %v4845 = vmax.f32 %v4589, 0.0
  %v4846 = vmax.f32 %v4590, 0.0
  %v4847 = vmax.f32 %v4591, 0.0
  %v4848 = vmax.f32 %v4592, 0.0
  %v4849 = vmax.f32 %v4593, 0.0
  %v4850 = vmax.f32 %v4594, 0.0
  %v4851 = vmax.f32 %v4595, 0.0
  %v4852 = vmax.f32 %v4596, 0.0
  %v4853 = vmax.f32 %v4597, 0.0
  %v4854 = vmax.f32 %v4598, 0.0
  %v4855 = vmax.f32 %v4599, 0.0
  %v4856 = vmax.f32 %v4600, 0.0
  %v4857 = vmax.f32 %v4601, 0.0
  %v4858 = vmax.f32 %v4602, 0.0
  %v4859 = vmax.f32 %v4603, 0.0
  %v4860 = vmax.f32 %v4604, 0.0
  %v4861 = vmax.f32 %v4605, 0.0
  %v4862 = vmax.f32 %v4606, 0.0
  %v4863 = vmax.f32 %v4607, 0.0
  %v4864 = vmax.f32 %v4608, 0.0
  %v4865 = vmax.f32 %v4609, 0.0
  %v4866 = vmax.f32 %v4610, 0.0
  %v4867 = vmax.f32 %v4611, 0.0
  %v4868 = vmax.f32 %v4612, 0.0
  %v4869 = vmax.f32 %v4613, 0.0
  %v4870 = vmax.f32 %v4614, 0.0
  %v4871 = vmax.f32 %v4615, 0.0
  %v4872 = vmax.f32 %v4616, 0.0
  %v4873 = vmax.f32 %v4617, 0.0
  %v4874 = vmax.f32 %v4618, 0.0
  %v4875 = vmax.f32 %v4619, 0.0
  %v4876 = vmax.f32 %v4620, 0.0
  %v4877 = vmax.f32 %v4621, 0.0
  %v4878 = vmax.f32 %v4622, 0.0
  %v4879 = vmax.f32 %v4623, 0.0
  %v4880 = vmax.f32 %v4624, 0.0
  %v4881 = vmax.f32 %v4625, 0.0
  %v4882 = vmax.f32 %v4626, 0.0
  %v4883 = vmax.f32 %v4627, 0.0
  %v4884 = vmax.f32 %v4628, 0.0
  %v4885 = vmax.f32 %v4629, 0.0
  %v4886 = vmax.f32 %v4630, 0.0
  %v4887 = vmax.f32 %v4631, 0.0
  %v4888 = vmax.f32 %v4632, 0.0
  %v4889 = vmax.f32 %v4633, 0.0
  %v4890 = vmax.f32 %v4634, 0.0
  %v4891 = vmax.f32 %v4635, 0.0
  %v4892 = vmax.f32 %v4636, 0.0
  %v4893 = vmax.f32 %v4637, 0.0
  %v4894 = vmax.f32 %v4638, 0.0
  %v4895 = vmax.f32 %v4639, 0.0
  %v4896 = vmax.f32 %v4640, 0.0
  %v4897 = vmax.f32 %v4641, 0.0
  %v4898 = vmax.f32 %v4642, 0.0
  %v4899 = vmax.f32 %v4643, 0.0
  %v4900 = vmax.f32 %v4644, 0.0
  %v4901 = vmax.f32 %v4645, 0.0
  %v4902 = vmax.f32 %v4646, 0.0
  %v4903 = vmax.f32 %v4647, 0.0
  %v4904 = vmax.f32 %v4648, 0.0
  %v4905 = vmax.f32 %v4649, 0.0
  %v4906 = vmax.f32 %v4650, 0.0
  %v4907 = vmax.f32 %v4651, 0.0
  %v4908 = vmax.f32 %v4652, 0.0
  %v4909 = vmax.f32 %v4653, 0.0
  %v4910 = vmax.f32 %v4654, 0.0
  %v4911 = vmax.f32 %v4655, 0.0
  %v4912 = vmax.f32 %v4656, 0.0
  %v4913 = vmax.f32 %v4657, 0.0
  %v4914 = vmax.f32 %v4658, 0.0
  %v4915 = vmax.f32 %v4659, 0.0
  %v4916 = vmax.f32 %v4660, 0.0
  %v4917 = vmax.f32 %v4661, 0.0
  %v4918 = vmax.f32 %v4662, 0.0
  %v4919 = vmax.f32 %v4663, 0.0
  %v4920 = vmax.f32 %v4664, 0.0
  %v4921 = vmax.f32 %v4665, 0.0
  %v4922 = vmax.f32 %v4666, 0.0
  %v4923 = vmax.f32 %v4667, 0.0
  %v4924 = vmax.f32 %v4668, 0.0
  %v4925 = vmax.f32 %v4669, 0.0
  %v4926 = vmax.f32 %v4670, 0.0
  %v4927 = vmax.f32 %v4671, 0.0
  %v4928 = vmax.f32 %v4672, 0.0
  %v4929 = vmax.f32 %v4673, 0.0
  %v4930 = vmax.f32 %v4674, 0.0
  %v4931 = vmax.f32 %v4675, 0.0
  %v4932 = vmax.f32 %v4676, 0.0
  %v4933 = vmax.f32 %v4677, 0.0
  %v4934 = vmax.f32 %v4678, 0.0
  %v4935 = vmax.f32 %v4679, 0.0
  %v4936 = vmax.f32 %v4680, 0.0
  %v4937 = vmax.f32 %v4681, 0.0
  %v4938 = vmax.f32 %v4682, 0.0
  %v4939 = vmax.f32 %v4683, 0.0
  %v4940 = vmax.f32 %v4684, 0.0
  %v4941 = vmax.f32 %v4685, 0.0
  %v4942 = vmax.f32 %v4686, 0.0
  %v4943 = vmax.f32 %v4687, 0.0
  %v4944 = vmax.f32 %v4688, 0.0
  %v4945 = vmax.f32 %v4689, 0.0
  %v4946 = vmax.f32 %v4690, 0.0
  %v4947 = vmax.f32 %v4691, 0.0
  %v4948 = vmax.f32 %v4692, 0.0
  %v4949 = vmax.f32 %v4693, 0.0
  %v4950 = vmax.f32 %v4694, 0.0
  %v4951 = vmax.f32 %v4695, 0.0
  %v4952 = vmax.f32 %v4696, 0.0
  %v4953 = vmax.f32 %v4697, 0.0
  %v4954 = vmax.f32 %v4698, 0.0
  %v4955 = vmax.f32 %v4699, 0.0
  %v4956 = vmax.f32 %v4700, 0.0
  %v4957 = vmax.f32 %v4701, 0.0
  %v4958 = vmax.f32 %v4702, 0.0
  %v4959 = vmax.f32 %v4703, 0.0
  %v4960 = vmax.f32 %v4704, 0.0
  %v4961 = vmax.f32 %v4705, 0.0
  %v4962 = vmax.f32 %v4706, 0.0
  %v4963 = vmax.f32 %v4707, 0.0
  %v4964 = vmax.f32 %v4708, 0.0
  %v4965 = vmax.f32 %v4709, 0.0
  %v4966 = vmax.f32 %v4710, 0.0
  %v4967 = vmax.f32 %v4711, 0.0
  %v4968 = vmax.f32 %v4712, 0.0
  %v4969 = vmax.f32 %v4713, 0.0
  %v4970 = vmax.f32 %v4714, 0.0
  %v4971 = vmax.f32 %v4715, 0.0
  %v4972 = vmax.f32 %v4716, 0.0
  %v4973 = vmax.f32 %v4717, 0.0
  %v4974 = vmax.f32 %v4718, 0.0
  %v4975 = vmax.f32 %v4719, 0.0
  %v4976 = vmax.f32 %v4720, 0.0
  %v4977 = vmax.f32 %v4721, 0.0
  %v4978 = vmax.f32 %v4722, 0.0
  %v4979 = vmax.f32 %v4723, 0.0
  %v4980 = vmax.f32 %v4724, 0.0
  %v4981 = vmax.f32 %v4725, 0.0
  %v4982 = vmax.f32 %v4726, 0.0
  %v4983 = vmax.f32 %v4727, 0.0
  %v4984 = vmax.f32 %v4728, 0.0
  %v4985 = vmax.f32 %v4729, 0.0
  %v4986 = vmax.f32 %v4730, 0.0
  %v4987 = vmax.f32 %v4731, 0.0
  %v4988 = vmax.f32 %v4732, 0.0
  %v4989 = vmax.f32 %v4733, 0.0
  %v4990 = vmax.f32 %v4734, 0.0
  %v4991 = vmax.f32 %v4735, 0.0
  %v4992 = vmax.f32 %v4736, 0.0
  %v4993 = vmax.f32 %v4737, 0.0
  %v4994 = vmax.f32 %v4738, 0.0
  %v4995 = vmax.f32 %v4739, 0.0
  %v4996 = vmax.f32 %v4740, 0.0
  %v4997 = vmax.f32 %v4741, 0.0
  %v4998 = vmax.f32 %v4742, 0.0
  %v4999 = vmax.f32 %v4743, 0.0
  %v5000 = vmax.f32 %v4744, 0.0
  %v5001 = vmax.f32 %v4745, 0.0
  %v5002 = vmax.f32 %v4746, 0.0
  %v5003 = vmax.f32 %v4747, 0.0
  %v5004 = vmax.f32 %v4748, 0.0
  %v5005 = vmax.f32 %v4749, 0.0
  %v5006 = vmax.f32 %v4750, 0.0
  %v5007 = vmax.f32 %v4751, 0.0
  %v5008 = vmax.f32 %v4752, 0.0
  %v5009 = vmax.f32 %v4753, 0.0
  %v5010 = vmax.f32 %v4754, 0.0
  %v5011 = vmax.f32 %v4755, 0.0
  %v5012 = vmax.f32 %v4756, 0.0
  %v5013 = vmax.f32 %v4757, 0.0
  %v5014 = vmax.f32 %v4758, 0.0
  %v5015 = vmax.f32 %v4759, 0.0
  %v5016 = vmax.f32 %v4760, 0.0
  %v5017 = vmax.f32 %v4761, 0.0
  %v5018 = vmax.f32 %v4762, 0.0
  %v5019 = vmax.f32 %v4763, 0.0
  %v5020 = vmax.f32 %v4764, 0.0
  %v5021 = vmax.f32 %v4765, 0.0
  %v5022 = vmax.f32 %v4766, 0.0
  %v5023 = vmax.f32 %v4767, 0.0
  %v5024 = vmax.f32 %v4768, 0.0
  %v5025 = vmax.f32 %v4769, 0.0
  %v5026 = vmax.f32 %v4770, 0.0
  %v5027 = vmax.f32 %v4771, 0.0
  %v5028 = vpack.c.bf16 %v4773, %v4772
  %v5029 = vpack.c.bf16 %v4775, %v4774
  %v5030 = vpack.c.bf16 %v4777, %v4776
  %v5031 = vpack.c.bf16 %v4779, %v4778
  %v5032 = vpack.c.bf16 %v4781, %v4780
  %v5033 = vpack.c.bf16 %v4783, %v4782
  %v5034 = vpack.c.bf16 %v4785, %v4784
  %v5035 = vpack.c.bf16 %v4787, %v4786
  %v5036 = vpack.c.bf16 %v4789, %v4788
  %v5037 = vpack.c.bf16 %v4791, %v4790
  %v5038 = vpack.c.bf16 %v4793, %v4792
  %v5039 = vpack.c.bf16 %v4795, %v4794
  %v5040 = vpack.c.bf16 %v4797, %v4796
  %v5041 = vpack.c.bf16 %v4799, %v4798
  %v5042 = vpack.c.bf16 %v4801, %v4800
  %v5043 = vpack.c.bf16 %v4803, %v4802
  %v5044 = vpack.c.bf16 %v4805, %v4804
  %v5045 = vpack.c.bf16 %v4807, %v4806
  %v5046 = vpack.c.bf16 %v4809, %v4808
  %v5047 = vpack.c.bf16 %v4811, %v4810
  %v5048 = vpack.c.bf16 %v4813, %v4812
  %v5049 = vpack.c.bf16 %v4815, %v4814
  %v5050 = vpack.c.bf16 %v4817, %v4816
  %v5051 = vpack.c.bf16 %v4819, %v4818
  %v5052 = vpack.c.bf16 %v4821, %v4820
  %v5053 = vpack.c.bf16 %v4823, %v4822
  %v5054 = vpack.c.bf16 %v4825, %v4824
  %v5055 = vpack.c.bf16 %v4827, %v4826
  %v5056 = vpack.c.bf16 %v4829, %v4828
  %v5057 = vpack.c.bf16 %v4831, %v4830
  %v5058 = vpack.c.bf16 %v4833, %v4832
  %v5059 = vpack.c.bf16 %v4835, %v4834
  %v5060 = vpack.c.bf16 %v4837, %v4836
  %v5061 = vpack.c.bf16 %v4839, %v4838
  %v5062 = vpack.c.bf16 %v4841, %v4840
  %v5063 = vpack.c.bf16 %v4843, %v4842
  %v5064 = vpack.c.bf16 %v4845, %v4844
  %v5065 = vpack.c.bf16 %v4847, %v4846
  %v5066 = vpack.c.bf16 %v4849, %v4848
  %v5067 = vpack.c.bf16 %v4851, %v4850
  %v5068 = vpack.c.bf16 %v4853, %v4852
  %v5069 = vpack.c.bf16 %v4855, %v4854
  %v5070 = vpack.c.bf16 %v4857, %v4856
  %v5071 = vpack.c.bf16 %v4859, %v4858
  %v5072 = vpack.c.bf16 %v4861, %v4860
  %v5073 = vpack.c.bf16 %v4863, %v4862
  %v5074 = vpack.c.bf16 %v4865, %v4864
  %v5075 = vpack.c.bf16 %v4867, %v4866
  %v5076 = vpack.c.bf16 %v4869, %v4868
  %v5077 = vpack.c.bf16 %v4871, %v4870
  %v5078 = vpack.c.bf16 %v4873, %v4872
  %v5079 = vpack.c.bf16 %v4875, %v4874
  %v5080 = vpack.c.bf16 %v4877, %v4876
  %v5081 = vpack.c.bf16 %v4879, %v4878
  %v5082 = vpack.c.bf16 %v4881, %v4880
  %v5083 = vpack.c.bf16 %v4883, %v4882
  %v5084 = vpack.c.bf16 %v4885, %v4884
  %v5085 = vpack.c.bf16 %v4887, %v4886
  %v5086 = vpack.c.bf16 %v4889, %v4888
  %v5087 = vpack.c.bf16 %v4891, %v4890
  %v5088 = vpack.c.bf16 %v4893, %v4892
  %v5089 = vpack.c.bf16 %v4895, %v4894
  %v5090 = vpack.c.bf16 %v4897, %v4896
  %v5091 = vpack.c.bf16 %v4899, %v4898
  %v5092 = vpack.c.bf16 %v4901, %v4900
  %v5093 = vpack.c.bf16 %v4903, %v4902
  %v5094 = vpack.c.bf16 %v4905, %v4904
  %v5095 = vpack.c.bf16 %v4907, %v4906
  %v5096 = vpack.c.bf16 %v4909, %v4908
  %v5097 = vpack.c.bf16 %v4911, %v4910
  %v5098 = vpack.c.bf16 %v4913, %v4912
  %v5099 = vpack.c.bf16 %v4915, %v4914
  %v5100 = vpack.c.bf16 %v4917, %v4916
  %v5101 = vpack.c.bf16 %v4919, %v4918
  %v5102 = vpack.c.bf16 %v4921, %v4920
  %v5103 = vpack.c.bf16 %v4923, %v4922
  %v5104 = vpack.c.bf16 %v4925, %v4924
  %v5105 = vpack.c.bf16 %v4927, %v4926
  %v5106 = vpack.c.bf16 %v4929, %v4928
  %v5107 = vpack.c.bf16 %v4931, %v4930
  %v5108 = vpack.c.bf16 %v4933, %v4932
  %v5109 = vpack.c.bf16 %v4935, %v4934
  %v5110 = vpack.c.bf16 %v4937, %v4936
  %v5111 = vpack.c.bf16 %v4939, %v4938
  %v5112 = vpack.c.bf16 %v4941, %v4940
  %v5113 = vpack.c.bf16 %v4943, %v4942
  %v5114 = vpack.c.bf16 %v4945, %v4944
  %v5115 = vpack.c.bf16 %v4947, %v4946
  %v5116 = vpack.c.bf16 %v4949, %v4948
  %v5117 = vpack.c.bf16 %v4951, %v4950
  %v5118 = vpack.c.bf16 %v4953, %v4952
  %v5119 = vpack.c.bf16 %v4955, %v4954
  %v5120 = vpack.c.bf16 %v4957, %v4956
  %v5121 = vpack.c.bf16 %v4959, %v4958
  %v5122 = vpack.c.bf16 %v4961, %v4960
  %v5123 = vpack.c.bf16 %v4963, %v4962
  %v5124 = vpack.c.bf16 %v4965, %v4964
  %v5125 = vpack.c.bf16 %v4967, %v4966
  %v5126 = vpack.c.bf16 %v4969, %v4968
  %v5127 = vpack.c.bf16 %v4971, %v4970
  %v5128 = vpack.c.bf16 %v4973, %v4972
  %v5129 = vpack.c.bf16 %v4975, %v4974
  %v5130 = vpack.c.bf16 %v4977, %v4976
  %v5131 = vpack.c.bf16 %v4979, %v4978
  %v5132 = vpack.c.bf16 %v4981, %v4980
  %v5133 = vpack.c.bf16 %v4983, %v4982
  %v5134 = vpack.c.bf16 %v4985, %v4984
  %v5135 = vpack.c.bf16 %v4987, %v4986
  %v5136 = vpack.c.bf16 %v4989, %v4988
  %v5137 = vpack.c.bf16 %v4991, %v4990
  %v5138 = vpack.c.bf16 %v4993, %v4992
  %v5139 = vpack.c.bf16 %v4995, %v4994
  %v5140 = vpack.c.bf16 %v4997, %v4996
  %v5141 = vpack.c.bf16 %v4999, %v4998
  %v5142 = vpack.c.bf16 %v5001, %v5000
  %v5143 = vpack.c.bf16 %v5003, %v5002
  %v5144 = vpack.c.bf16 %v5005, %v5004
  %v5145 = vpack.c.bf16 %v5007, %v5006
  %v5146 = vpack.c.bf16 %v5009, %v5008
  %v5147 = vpack.c.bf16 %v5011, %v5010
  %v5148 = vpack.c.bf16 %v5013, %v5012
  %v5149 = vpack.c.bf16 %v5015, %v5014
  %v5150 = vpack.c.bf16 %v5017, %v5016
  %v5151 = vpack.c.bf16 %v5019, %v5018
  %v5152 = vpack.c.bf16 %v5021, %v5020
  %v5153 = vpack.c.bf16 %v5023, %v5022
  %v5154 = vpack.c.bf16 %v5025, %v5024
  %v5155 = vpack.c.bf16 %v5027, %v5026
  %v5284 = vunpack.c.l.b16 %v5028
  %v5285 = vunpack.c.h.b16 %v5028
  %v5286 = vunpack.c.l.b16 %v5029
  %v5287 = vunpack.c.h.b16 %v5029
  %v5288 = vunpack.c.l.b16 %v5030
  %v5289 = vunpack.c.h.b16 %v5030
  %v5290 = vunpack.c.l.b16 %v5031
  %v5291 = vunpack.c.h.b16 %v5031
  %v5292 = vunpack.c.l.b16 %v5032
  %v5293 = vunpack.c.h.b16 %v5032
  %v5294 = vunpack.c.l.b16 %v5033
  %v5295 = vunpack.c.h.b16 %v5033
  %v5296 = vunpack.c.l.b16 %v5034
  %v5297 = vunpack.c.h.b16 %v5034
  %v5298 = vunpack.c.l.b16 %v5035
  %v5299 = vunpack.c.h.b16 %v5035
  %v5300 = vunpack.c.l.b16 %v5036
  %v5301 = vunpack.c.h.b16 %v5036
  %v5302 = vunpack.c.l.b16 %v5037
  %v5303 = vunpack.c.h.b16 %v5037
  %v5304 = vunpack.c.l.b16 %v5038
  %v5305 = vunpack.c.h.b16 %v5038
  %v5306 = vunpack.c.l.b16 %v5039
  %v5307 = vunpack.c.h.b16 %v5039
  %v5308 = vunpack.c.l.b16 %v5040
  %v5309 = vunpack.c.h.b16 %v5040
  %v5310 = vunpack.c.l.b16 %v5041
  %v5311 = vunpack.c.h.b16 %v5041
  %v5312 = vunpack.c.l.b16 %v5042
  %v5313 = vunpack.c.h.b16 %v5042
  %v5314 = vunpack.c.l.b16 %v5043
  %v5315 = vunpack.c.h.b16 %v5043
  %v5316 = vunpack.c.l.b16 %v5044
  %v5317 = vunpack.c.h.b16 %v5044
  %v5318 = vunpack.c.l.b16 %v5045
  %v5319 = vunpack.c.h.b16 %v5045
  %v5320 = vunpack.c.l.b16 %v5046
  %v5321 = vunpack.c.h.b16 %v5046
  %v5322 = vunpack.c.l.b16 %v5047
  %v5323 = vunpack.c.h.b16 %v5047
  %v5324 = vunpack.c.l.b16 %v5048
  %v5325 = vunpack.c.h.b16 %v5048
  %v5326 = vunpack.c.l.b16 %v5049
  %v5327 = vunpack.c.h.b16 %v5049
  %v5328 = vunpack.c.l.b16 %v5050
  %v5329 = vunpack.c.h.b16 %v5050
  %v5330 = vunpack.c.l.b16 %v5051
  %v5331 = vunpack.c.h.b16 %v5051
  %v5332 = vunpack.c.l.b16 %v5052
  %v5333 = vunpack.c.h.b16 %v5052
  %v5334 = vunpack.c.l.b16 %v5053
  %v5335 = vunpack.c.h.b16 %v5053
  %v5336 = vunpack.c.l.b16 %v5054
  %v5337 = vunpack.c.h.b16 %v5054
  %v5338 = vunpack.c.l.b16 %v5055
  %v5339 = vunpack.c.h.b16 %v5055
  %v5340 = vunpack.c.l.b16 %v5056
  %v5341 = vunpack.c.h.b16 %v5056
  %v5342 = vunpack.c.l.b16 %v5057
  %v5343 = vunpack.c.h.b16 %v5057
  %v5344 = vunpack.c.l.b16 %v5058
  %v5345 = vunpack.c.h.b16 %v5058
  %v5346 = vunpack.c.l.b16 %v5059
  %v5347 = vunpack.c.h.b16 %v5059
  %v5348 = vunpack.c.l.b16 %v5060
  %v5349 = vunpack.c.h.b16 %v5060
  %v5350 = vunpack.c.l.b16 %v5061
  %v5351 = vunpack.c.h.b16 %v5061
  %v5352 = vunpack.c.l.b16 %v5062
  %v5353 = vunpack.c.h.b16 %v5062
  %v5354 = vunpack.c.l.b16 %v5063
  %v5355 = vunpack.c.h.b16 %v5063
  %v5356 = vunpack.c.l.b16 %v5064
  %v5357 = vunpack.c.h.b16 %v5064
  %v5358 = vunpack.c.l.b16 %v5065
  %v5359 = vunpack.c.h.b16 %v5065
  %v5360 = vunpack.c.l.b16 %v5066
  %v5361 = vunpack.c.h.b16 %v5066
  %v5362 = vunpack.c.l.b16 %v5067
  %v5363 = vunpack.c.h.b16 %v5067
  %v5364 = vunpack.c.l.b16 %v5068
  %v5365 = vunpack.c.h.b16 %v5068
  %v5366 = vunpack.c.l.b16 %v5069
  %v5367 = vunpack.c.h.b16 %v5069
  %v5368 = vunpack.c.l.b16 %v5070
  %v5369 = vunpack.c.h.b16 %v5070
  %v5370 = vunpack.c.l.b16 %v5071
  %v5371 = vunpack.c.h.b16 %v5071
  %v5372 = vunpack.c.l.b16 %v5072
  %v5373 = vunpack.c.h.b16 %v5072
  %v5374 = vunpack.c.l.b16 %v5073
  %v5375 = vunpack.c.h.b16 %v5073
  %v5376 = vunpack.c.l.b16 %v5074
  %v5377 = vunpack.c.h.b16 %v5074
  %v5378 = vunpack.c.l.b16 %v5075
  %v5379 = vunpack.c.h.b16 %v5075
  %v5380 = vunpack.c.l.b16 %v5076
  %v5381 = vunpack.c.h.b16 %v5076
  %v5382 = vunpack.c.l.b16 %v5077
  %v5383 = vunpack.c.h.b16 %v5077
  %v5384 = vunpack.c.l.b16 %v5078
  %v5385 = vunpack.c.h.b16 %v5078
  %v5386 = vunpack.c.l.b16 %v5079
  %v5387 = vunpack.c.h.b16 %v5079
  %v5388 = vunpack.c.l.b16 %v5080
  %v5389 = vunpack.c.h.b16 %v5080
  %v5390 = vunpack.c.l.b16 %v5081
  %v5391 = vunpack.c.h.b16 %v5081
  %v5392 = vunpack.c.l.b16 %v5082
  %v5393 = vunpack.c.h.b16 %v5082
  %v5394 = vunpack.c.l.b16 %v5083
  %v5395 = vunpack.c.h.b16 %v5083
  %v5396 = vunpack.c.l.b16 %v5084
  %v5397 = vunpack.c.h.b16 %v5084
  %v5398 = vunpack.c.l.b16 %v5085
  %v5399 = vunpack.c.h.b16 %v5085
  %v5400 = vunpack.c.l.b16 %v5086
  %v5401 = vunpack.c.h.b16 %v5086
  %v5402 = vunpack.c.l.b16 %v5087
  %v5403 = vunpack.c.h.b16 %v5087
  %v5404 = vunpack.c.l.b16 %v5088
  %v5405 = vunpack.c.h.b16 %v5088
  %v5406 = vunpack.c.l.b16 %v5089
  %v5407 = vunpack.c.h.b16 %v5089
  %v5408 = vunpack.c.l.b16 %v5090
  %v5409 = vunpack.c.h.b16 %v5090
  %v5410 = vunpack.c.l.b16 %v5091
  %v5411 = vunpack.c.h.b16 %v5091
  %v5412 = vunpack.c.l.b16 %v5092
  %v5413 = vunpack.c.h.b16 %v5092
  %v5414 = vunpack.c.l.b16 %v5093
  %v5415 = vunpack.c.h.b16 %v5093
  %v5416 = vunpack.c.l.b16 %v5094
  %v5417 = vunpack.c.h.b16 %v5094
  %v5418 = vunpack.c.l.b16 %v5095
  %v5419 = vunpack.c.h.b16 %v5095
  %v5420 = vunpack.c.l.b16 %v5096
  %v5421 = vunpack.c.h.b16 %v5096
  %v5422 = vunpack.c.l.b16 %v5097
  %v5423 = vunpack.c.h.b16 %v5097
  %v5424 = vunpack.c.l.b16 %v5098
  %v5425 = vunpack.c.h.b16 %v5098
  %v5426 = vunpack.c.l.b16 %v5099
  %v5427 = vunpack.c.h.b16 %v5099
  %v5428 = vunpack.c.l.b16 %v5100
  %v5429 = vunpack.c.h.b16 %v5100
  %v5430 = vunpack.c.l.b16 %v5101
  %v5431 = vunpack.c.h.b16 %v5101
  %v5432 = vunpack.c.l.b16 %v5102
  %v5433 = vunpack.c.h.b16 %v5102
  %v5434 = vunpack.c.l.b16 %v5103
  %v5435 = vunpack.c.h.b16 %v5103
  %v5436 = vunpack.c.l.b16 %v5104
  %v5437 = vunpack.c.h.b16 %v5104
  %v5438 = vunpack.c.l.b16 %v5105
  %v5439 = vunpack.c.h.b16 %v5105
  %v5440 = vunpack.c.l.b16 %v5106
  %v5441 = vunpack.c.h.b16 %v5106
  %v5442 = vunpack.c.l.b16 %v5107
  %v5443 = vunpack.c.h.b16 %v5107
  %v5444 = vunpack.c.l.b16 %v5108
  %v5445 = vunpack.c.h.b16 %v5108
  %v5446 = vunpack.c.l.b16 %v5109
  %v5447 = vunpack.c.h.b16 %v5109
  %v5448 = vunpack.c.l.b16 %v5110
  %v5449 = vunpack.c.h.b16 %v5110
  %v5450 = vunpack.c.l.b16 %v5111
  %v5451 = vunpack.c.h.b16 %v5111
  %v5452 = vunpack.c.l.b16 %v5112
  %v5453 = vunpack.c.h.b16 %v5112
  %v5454 = vunpack.c.l.b16 %v5113
  %v5455 = vunpack.c.h.b16 %v5113
  %v5456 = vunpack.c.l.b16 %v5114
  %v5457 = vunpack.c.h.b16 %v5114
  %v5458 = vunpack.c.l.b16 %v5115
  %v5459 = vunpack.c.h.b16 %v5115
  %v5460 = vunpack.c.l.b16 %v5116
  %v5461 = vunpack.c.h.b16 %v5116
  %v5462 = vunpack.c.l.b16 %v5117
  %v5463 = vunpack.c.h.b16 %v5117
  %v5464 = vunpack.c.l.b16 %v5118
  %v5465 = vunpack.c.h.b16 %v5118
  %v5466 = vunpack.c.l.b16 %v5119
  %v5467 = vunpack.c.h.b16 %v5119
  %v5468 = vunpack.c.l.b16 %v5120
  %v5469 = vunpack.c.h.b16 %v5120
  %v5470 = vunpack.c.l.b16 %v5121
  %v5471 = vunpack.c.h.b16 %v5121
  %v5472 = vunpack.c.l.b16 %v5122
  %v5473 = vunpack.c.h.b16 %v5122
  %v5474 = vunpack.c.l.b16 %v5123
  %v5475 = vunpack.c.h.b16 %v5123
  %v5476 = vunpack.c.l.b16 %v5124
  %v5477 = vunpack.c.h.b16 %v5124
  %v5478 = vunpack.c.l.b16 %v5125
  %v5479 = vunpack.c.h.b16 %v5125
  %v5480 = vunpack.c.l.b16 %v5126
  %v5481 = vunpack.c.h.b16 %v5126
  %v5482 = vunpack.c.l.b16 %v5127
  %v5483 = vunpack.c.h.b16 %v5127
  %v5484 = vunpack.c.l.b16 %v5128
  %v5485 = vunpack.c.h.b16 %v5128
  %v5486 = vunpack.c.l.b16 %v5129
  %v5487 = vunpack.c.h.b16 %v5129
  %v5488 = vunpack.c.l.b16 %v5130
  %v5489 = vunpack.c.h.b16 %v5130
  %v5490 = vunpack.c.l.b16 %v5131
  %v5491 = vunpack.c.h.b16 %v5131
  %v5492 = vunpack.c.l.b16 %v5132
  %v5493 = vunpack.c.h.b16 %v5132
  %v5494 = vunpack.c.l.b16 %v5133
  %v5495 = vunpack.c.h.b16 %v5133
  %v5496 = vunpack.c.l.b16 %v5134
  %v5497 = vunpack.c.h.b16 %v5134
  %v5498 = vunpack.c.l.b16 %v5135
  %v5499 = vunpack.c.h.b16 %v5135
  %v5500 = vunpack.c.l.b16 %v5136
  %v5501 = vunpack.c.h.b16 %v5136
  %v5502 = vunpack.c.l.b16 %v5137
  %v5503 = vunpack.c.h.b16 %v5137
  %v5504 = vunpack.c.l.b16 %v5138
  %v5505 = vunpack.c.h.b16 %v5138
  %v5506 = vunpack.c.l.b16 %v5139
  %v5507 = vunpack.c.h.b16 %v5139
  %v5508 = vunpack.c.l.b16 %v5140
  %v5509 = vunpack.c.h.b16 %v5140
  %v5510 = vunpack.c.l.b16 %v5141
  %v5511 = vunpack.c.h.b16 %v5141
  %v5512 = vunpack.c.l.b16 %v5142
  %v5513 = vunpack.c.h.b16 %v5142
  %v5514 = vunpack.c.l.b16 %v5143
  %v5515 = vunpack.c.h.b16 %v5143
  %v5516 = vunpack.c.l.b16 %v5144
  %v5517 = vunpack.c.h.b16 %v5144
  %v5518 = vunpack.c.l.b16 %v5145
  %v5519 = vunpack.c.h.b16 %v5145
  %v5520 = vunpack.c.l.b16 %v5146
  %v5521 = vunpack.c.h.b16 %v5146
  %v5522 = vunpack.c.l.b16 %v5147
  %v5523 = vunpack.c.h.b16 %v5147
  %v5524 = vunpack.c.l.b16 %v5148
  %v5525 = vunpack.c.h.b16 %v5148
  %v5526 = vunpack.c.l.b16 %v5149
  %v5527 = vunpack.c.h.b16 %v5149
  %v5528 = vunpack.c.l.b16 %v5150
  %v5529 = vunpack.c.h.b16 %v5150
  %v5530 = vunpack.c.l.b16 %v5151
  %v5531 = vunpack.c.h.b16 %v5151
  %v5532 = vunpack.c.l.b16 %v5152
  %v5533 = vunpack.c.h.b16 %v5152
  %v5534 = vunpack.c.l.b16 %v5153
  %v5535 = vunpack.c.h.b16 %v5153
  %v5536 = vunpack.c.l.b16 %v5154
  %v5537 = vunpack.c.h.b16 %v5154
  %v5538 = vunpack.c.l.b16 %v5155
  %v5539 = vunpack.c.h.b16 %v5155
  %v5540 = vpack.c.b16 %v5284, %v5284
  %v5541 = vpack.c.b16 %v5285, %v5285
  %v5542 = vpack.c.b16 %v5286, %v5286
  %v5543 = vpack.c.b16 %v5287, %v5287
  %v5544 = vpack.c.b16 %v5288, %v5288
  %v5545 = vpack.c.b16 %v5289, %v5289
  %v5546 = vpack.c.b16 %v5290, %v5290
  %v5547 = vpack.c.b16 %v5291, %v5291
  %v5548 = vpack.c.b16 %v5292, %v5292
  %v5549 = vpack.c.b16 %v5293, %v5293
  %v5550 = vpack.c.b16 %v5294, %v5294
  %v5551 = vpack.c.b16 %v5295, %v5295
  %v5552 = vpack.c.b16 %v5296, %v5296
  %v5553 = vpack.c.b16 %v5297, %v5297
  %v5554 = vpack.c.b16 %v5298, %v5298
  %v5555 = vpack.c.b16 %v5299, %v5299
  %v5556 = vpack.c.b16 %v5300, %v5300
  %v5557 = vpack.c.b16 %v5301, %v5301
  %v5558 = vpack.c.b16 %v5302, %v5302
  %v5559 = vpack.c.b16 %v5303, %v5303
  %v5560 = vpack.c.b16 %v5304, %v5304
  %v5561 = vpack.c.b16 %v5305, %v5305
  %v5562 = vpack.c.b16 %v5306, %v5306
  %v5563 = vpack.c.b16 %v5307, %v5307
  %v5564 = vpack.c.b16 %v5308, %v5308
  %v5565 = vpack.c.b16 %v5309, %v5309
  %v5566 = vpack.c.b16 %v5310, %v5310
  %v5567 = vpack.c.b16 %v5311, %v5311
  %v5568 = vpack.c.b16 %v5312, %v5312
  %v5569 = vpack.c.b16 %v5313, %v5313
  %v5570 = vpack.c.b16 %v5314, %v5314
  %v5571 = vpack.c.b16 %v5315, %v5315
  %v5572 = vpack.c.b16 %v5316, %v5316
  %v5573 = vpack.c.b16 %v5317, %v5317
  %v5574 = vpack.c.b16 %v5318, %v5318
  %v5575 = vpack.c.b16 %v5319, %v5319
  %v5576 = vpack.c.b16 %v5320, %v5320
  %v5577 = vpack.c.b16 %v5321, %v5321
  %v5578 = vpack.c.b16 %v5322, %v5322
  %v5579 = vpack.c.b16 %v5323, %v5323
  %v5580 = vpack.c.b16 %v5324, %v5324
  %v5581 = vpack.c.b16 %v5325, %v5325
  %v5582 = vpack.c.b16 %v5326, %v5326
  %v5583 = vpack.c.b16 %v5327, %v5327
  %v5584 = vpack.c.b16 %v5328, %v5328
  %v5585 = vpack.c.b16 %v5329, %v5329
  %v5586 = vpack.c.b16 %v5330, %v5330
  %v5587 = vpack.c.b16 %v5331, %v5331
  %v5588 = vpack.c.b16 %v5332, %v5332
  %v5589 = vpack.c.b16 %v5333, %v5333
  %v5590 = vpack.c.b16 %v5334, %v5334
  %v5591 = vpack.c.b16 %v5335, %v5335
  %v5592 = vpack.c.b16 %v5336, %v5336
  %v5593 = vpack.c.b16 %v5337, %v5337
  %v5594 = vpack.c.b16 %v5338, %v5338
  %v5595 = vpack.c.b16 %v5339, %v5339
  %v5596 = vpack.c.b16 %v5340, %v5340
  %v5597 = vpack.c.b16 %v5341, %v5341
  %v5598 = vpack.c.b16 %v5342, %v5342
  %v5599 = vpack.c.b16 %v5343, %v5343
  %v5600 = vpack.c.b16 %v5344, %v5344
  %v5601 = vpack.c.b16 %v5345, %v5345
  %v5602 = vpack.c.b16 %v5346, %v5346
  %v5603 = vpack.c.b16 %v5347, %v5347
  %v5604 = vpack.c.b16 %v5348, %v5348
  %v5605 = vpack.c.b16 %v5349, %v5349
  %v5606 = vpack.c.b16 %v5350, %v5350
  %v5607 = vpack.c.b16 %v5351, %v5351
  %v5608 = vpack.c.b16 %v5352, %v5352
  %v5609 = vpack.c.b16 %v5353, %v5353
  %v5610 = vpack.c.b16 %v5354, %v5354
  %v5611 = vpack.c.b16 %v5355, %v5355
  %v5612 = vpack.c.b16 %v5356, %v5356
  %v5613 = vpack.c.b16 %v5357, %v5357
  %v5614 = vpack.c.b16 %v5358, %v5358
  %v5615 = vpack.c.b16 %v5359, %v5359
  %v5616 = vpack.c.b16 %v5360, %v5360
  %v5617 = vpack.c.b16 %v5361, %v5361
  %v5618 = vpack.c.b16 %v5362, %v5362
  %v5619 = vpack.c.b16 %v5363, %v5363
  %v5620 = vpack.c.b16 %v5364, %v5364
  %v5621 = vpack.c.b16 %v5365, %v5365
  %v5622 = vpack.c.b16 %v5366, %v5366
  %v5623 = vpack.c.b16 %v5367, %v5367
  %v5624 = vpack.c.b16 %v5368, %v5368
  %v5625 = vpack.c.b16 %v5369, %v5369
  %v5626 = vpack.c.b16 %v5370, %v5370
  %v5627 = vpack.c.b16 %v5371, %v5371
  %v5628 = vpack.c.b16 %v5372, %v5372
  %v5629 = vpack.c.b16 %v5373, %v5373
  %v5630 = vpack.c.b16 %v5374, %v5374
  %v5631 = vpack.c.b16 %v5375, %v5375
  %v5632 = vpack.c.b16 %v5376, %v5376
  %v5633 = vpack.c.b16 %v5377, %v5377
  %v5634 = vpack.c.b16 %v5378, %v5378
  %v5635 = vpack.c.b16 %v5379, %v5379
  %v5636 = vpack.c.b16 %v5380, %v5380
  %v5637 = vpack.c.b16 %v5381, %v5381
  %v5638 = vpack.c.b16 %v5382, %v5382
  %v5639 = vpack.c.b16 %v5383, %v5383
  %v5640 = vpack.c.b16 %v5384, %v5384
  %v5641 = vpack.c.b16 %v5385, %v5385
  %v5642 = vpack.c.b16 %v5386, %v5386
  %v5643 = vpack.c.b16 %v5387, %v5387
  %v5644 = vpack.c.b16 %v5388, %v5388
  %v5645 = vpack.c.b16 %v5389, %v5389
  %v5646 = vpack.c.b16 %v5390, %v5390
  %v5647 = vpack.c.b16 %v5391, %v5391
  %v5648 = vpack.c.b16 %v5392, %v5392
  %v5649 = vpack.c.b16 %v5393, %v5393
  %v5650 = vpack.c.b16 %v5394, %v5394
  %v5651 = vpack.c.b16 %v5395, %v5395
  %v5652 = vpack.c.b16 %v5396, %v5396
  %v5653 = vpack.c.b16 %v5397, %v5397
  %v5654 = vpack.c.b16 %v5398, %v5398
  %v5655 = vpack.c.b16 %v5399, %v5399
  %v5656 = vpack.c.b16 %v5400, %v5400
  %v5657 = vpack.c.b16 %v5401, %v5401
  %v5658 = vpack.c.b16 %v5402, %v5402
  %v5659 = vpack.c.b16 %v5403, %v5403
  %v5660 = vpack.c.b16 %v5404, %v5404
  %v5661 = vpack.c.b16 %v5405, %v5405
  %v5662 = vpack.c.b16 %v5406, %v5406
  %v5663 = vpack.c.b16 %v5407, %v5407
  %v5664 = vpack.c.b16 %v5408, %v5408
  %v5665 = vpack.c.b16 %v5409, %v5409
  %v5666 = vpack.c.b16 %v5410, %v5410
  %v5667 = vpack.c.b16 %v5411, %v5411
  %v5668 = vpack.c.b16 %v5412, %v5412
  %v5669 = vpack.c.b16 %v5413, %v5413
  %v5670 = vpack.c.b16 %v5414, %v5414
  %v5671 = vpack.c.b16 %v5415, %v5415
  %v5672 = vpack.c.b16 %v5416, %v5416
  %v5673 = vpack.c.b16 %v5417, %v5417
  %v5674 = vpack.c.b16 %v5418, %v5418
  %v5675 = vpack.c.b16 %v5419, %v5419
  %v5676 = vpack.c.b16 %v5420, %v5420
  %v5677 = vpack.c.b16 %v5421, %v5421
  %v5678 = vpack.c.b16 %v5422, %v5422
  %v5679 = vpack.c.b16 %v5423, %v5423
  %v5680 = vpack.c.b16 %v5424, %v5424
  %v5681 = vpack.c.b16 %v5425, %v5425
  %v5682 = vpack.c.b16 %v5426, %v5426
  %v5683 = vpack.c.b16 %v5427, %v5427
  %v5684 = vpack.c.b16 %v5428, %v5428
  %v5685 = vpack.c.b16 %v5429, %v5429
  %v5686 = vpack.c.b16 %v5430, %v5430
  %v5687 = vpack.c.b16 %v5431, %v5431
  %v5688 = vpack.c.b16 %v5432, %v5432
  %v5689 = vpack.c.b16 %v5433, %v5433
  %v5690 = vpack.c.b16 %v5434, %v5434
  %v5691 = vpack.c.b16 %v5435, %v5435
  %v5692 = vpack.c.b16 %v5436, %v5436
  %v5693 = vpack.c.b16 %v5437, %v5437
  %v5694 = vpack.c.b16 %v5438, %v5438
  %v5695 = vpack.c.b16 %v5439, %v5439
  %v5696 = vpack.c.b16 %v5440, %v5440
  %v5697 = vpack.c.b16 %v5441, %v5441
  %v5698 = vpack.c.b16 %v5442, %v5442
  %v5699 = vpack.c.b16 %v5443, %v5443
  %v5700 = vpack.c.b16 %v5444, %v5444
  %v5701 = vpack.c.b16 %v5445, %v5445
  %v5702 = vpack.c.b16 %v5446, %v5446
  %v5703 = vpack.c.b16 %v5447, %v5447
  %v5704 = vpack.c.b16 %v5448, %v5448
  %v5705 = vpack.c.b16 %v5449, %v5449
  %v5706 = vpack.c.b16 %v5450, %v5450
  %v5707 = vpack.c.b16 %v5451, %v5451
  %v5708 = vpack.c.b16 %v5452, %v5452
  %v5709 = vpack.c.b16 %v5453, %v5453
  %v5710 = vpack.c.b16 %v5454, %v5454
  %v5711 = vpack.c.b16 %v5455, %v5455
  %v5712 = vpack.c.b16 %v5456, %v5456
  %v5713 = vpack.c.b16 %v5457, %v5457
  %v5714 = vpack.c.b16 %v5458, %v5458
  %v5715 = vpack.c.b16 %v5459, %v5459
  %v5716 = vpack.c.b16 %v5460, %v5460
  %v5717 = vpack.c.b16 %v5461, %v5461
  %v5718 = vpack.c.b16 %v5462, %v5462
  %v5719 = vpack.c.b16 %v5463, %v5463
  %v5720 = vpack.c.b16 %v5464, %v5464
  %v5721 = vpack.c.b16 %v5465, %v5465
  %v5722 = vpack.c.b16 %v5466, %v5466
  %v5723 = vpack.c.b16 %v5467, %v5467
  %v5724 = vpack.c.b16 %v5468, %v5468
  %v5725 = vpack.c.b16 %v5469, %v5469
  %v5726 = vpack.c.b16 %v5470, %v5470
  %v5727 = vpack.c.b16 %v5471, %v5471
  %v5728 = vpack.c.b16 %v5472, %v5472
  %v5729 = vpack.c.b16 %v5473, %v5473
  %v5730 = vpack.c.b16 %v5474, %v5474
  %v5731 = vpack.c.b16 %v5475, %v5475
  %v5732 = vpack.c.b16 %v5476, %v5476
  %v5733 = vpack.c.b16 %v5477, %v5477
  %v5734 = vpack.c.b16 %v5478, %v5478
  %v5735 = vpack.c.b16 %v5479, %v5479
  %v5736 = vpack.c.b16 %v5480, %v5480
  %v5737 = vpack.c.b16 %v5481, %v5481
  %v5738 = vpack.c.b16 %v5482, %v5482
  %v5739 = vpack.c.b16 %v5483, %v5483
  %v5740 = vpack.c.b16 %v5484, %v5484
  %v5741 = vpack.c.b16 %v5485, %v5485
  %v5742 = vpack.c.b16 %v5486, %v5486
  %v5743 = vpack.c.b16 %v5487, %v5487
  %v5744 = vpack.c.b16 %v5488, %v5488
  %v5745 = vpack.c.b16 %v5489, %v5489
  %v5746 = vpack.c.b16 %v5490, %v5490
  %v5747 = vpack.c.b16 %v5491, %v5491
  %v5748 = vpack.c.b16 %v5492, %v5492
  %v5749 = vpack.c.b16 %v5493, %v5493
  %v5750 = vpack.c.b16 %v5494, %v5494
  %v5751 = vpack.c.b16 %v5495, %v5495
  %v5752 = vpack.c.b16 %v5496, %v5496
  %v5753 = vpack.c.b16 %v5497, %v5497
  %v5754 = vpack.c.b16 %v5498, %v5498
  %v5755 = vpack.c.b16 %v5499, %v5499
  %v5756 = vpack.c.b16 %v5500, %v5500
  %v5757 = vpack.c.b16 %v5501, %v5501
  %v5758 = vpack.c.b16 %v5502, %v5502
  %v5759 = vpack.c.b16 %v5503, %v5503
  %v5760 = vpack.c.b16 %v5504, %v5504
  %v5761 = vpack.c.b16 %v5505, %v5505
  %v5762 = vpack.c.b16 %v5506, %v5506
  %v5763 = vpack.c.b16 %v5507, %v5507
  %v5764 = vpack.c.b16 %v5508, %v5508
  %v5765 = vpack.c.b16 %v5509, %v5509
  %v5766 = vpack.c.b16 %v5510, %v5510
  %v5767 = vpack.c.b16 %v5511, %v5511
  %v5768 = vpack.c.b16 %v5512, %v5512
  %v5769 = vpack.c.b16 %v5513, %v5513
  %v5770 = vpack.c.b16 %v5514, %v5514
  %v5771 = vpack.c.b16 %v5515, %v5515
  %v5772 = vpack.c.b16 %v5516, %v5516
  %v5773 = vpack.c.b16 %v5517, %v5517
  %v5774 = vpack.c.b16 %v5518, %v5518
  %v5775 = vpack.c.b16 %v5519, %v5519
  %v5776 = vpack.c.b16 %v5520, %v5520
  %v5777 = vpack.c.b16 %v5521, %v5521
  %v5778 = vpack.c.b16 %v5522, %v5522
  %v5779 = vpack.c.b16 %v5523, %v5523
  %v5780 = vpack.c.b16 %v5524, %v5524
  %v5781 = vpack.c.b16 %v5525, %v5525
  %v5782 = vpack.c.b16 %v5526, %v5526
  %v5783 = vpack.c.b16 %v5527, %v5527
  %v5784 = vpack.c.b16 %v5528, %v5528
  %v5785 = vpack.c.b16 %v5529, %v5529
  %v5786 = vpack.c.b16 %v5530, %v5530
  %v5787 = vpack.c.b16 %v5531, %v5531
  %v5788 = vpack.c.b16 %v5532, %v5532
  %v5789 = vpack.c.b16 %v5533, %v5533
  %v5790 = vpack.c.b16 %v5534, %v5534
  %v5791 = vpack.c.b16 %v5535, %v5535
  %v5792 = vpack.c.b16 %v5536, %v5536
  %v5793 = vpack.c.b16 %v5537, %v5537
  %v5794 = vpack.c.b16 %v5538, %v5538
  %v5795 = vpack.c.b16 %v5539, %v5539
  %6052 = vst [vmem:[%s4] sm:$0xf] %v5540
  %6053 = vst [vmem:[%s4 + $0x4] sm:$0xf] %v5541
  %6054 = vst [vmem:[%s4 + $0x8] sm:$0xf] %v5542
  %6055 = vst [vmem:[%s4 + $0xc] sm:$0xf] %v5543
  %6056 = vst [vmem:[%s4 + $0x10] sm:$0xf] %v5544
  %6057 = vst [vmem:[%s4 + $0x14] sm:$0xf] %v5545
  %6058 = vst [vmem:[%s4 + $0x18] sm:$0xf] %v5546
  %6059 = vst [vmem:[%s4 + $0x1c] sm:$0xf] %v5547
  %6060 = vst [vmem:[%s4 + $0x20] sm:$0xf] %v5548
  %6061 = vst [vmem:[%s4 + $0x24] sm:$0xf] %v5549
  %6062 = vst [vmem:[%s4 + $0x28] sm:$0xf] %v5550
  %6063 = vst [vmem:[%s4 + $0x2c] sm:$0xf] %v5551
  %6064 = vst [vmem:[%s4 + $0x30] sm:$0xf] %v5552
  %6065 = vst [vmem:[%s4 + $0x34] sm:$0xf] %v5553
  %6066 = vst [vmem:[%s4 + $0x38] sm:$0xf] %v5554
  %6067 = vst [vmem:[%s4 + $0x3c] sm:$0xf] %v5555
  %6068 = vst [vmem:[%s4 + $0x40] sm:$0xf] %v5556
  %6069 = vst [vmem:[%s4 + $0x44] sm:$0xf] %v5557
  %6070 = vst [vmem:[%s4 + $0x48] sm:$0xf] %v5558
  %6071 = vst [vmem:[%s4 + $0x4c] sm:$0xf] %v5559
  %6072 = vst [vmem:[%s4 + $0x50] sm:$0xf] %v5560
  %6073 = vst [vmem:[%s4 + $0x54] sm:$0xf] %v5561
  %6074 = vst [vmem:[%s4 + $0x58] sm:$0xf] %v5562
  %6075 = vst [vmem:[%s4 + $0x5c] sm:$0xf] %v5563
  %6076 = vst [vmem:[%s4 + $0x60] sm:$0xf] %v5564
  %6077 = vst [vmem:[%s4 + $0x64] sm:$0xf] %v5565
  %6078 = vst [vmem:[%s4 + $0x68] sm:$0xf] %v5566
  %6079 = vst [vmem:[%s4 + $0x6c] sm:$0xf] %v5567
  %6080 = vst [vmem:[%s4 + $0x70] sm:$0xf] %v5568
  %6081 = vst [vmem:[%s4 + $0x74] sm:$0xf] %v5569
  %6082 = vst [vmem:[%s4 + $0x78] sm:$0xf] %v5570
  %6083 = vst [vmem:[%s4 + $0x7c] sm:$0xf] %v5571
  %6084 = vst [vmem:[%s4 + $0x80] sm:$0xf] %v5572
  %6085 = vst [vmem:[%s4 + $0x84] sm:$0xf] %v5573
  %6086 = vst [vmem:[%s4 + $0x88] sm:$0xf] %v5574
  %6087 = vst [vmem:[%s4 + $0x8c] sm:$0xf] %v5575
  %6088 = vst [vmem:[%s4 + $0x90] sm:$0xf] %v5576
  %6089 = vst [vmem:[%s4 + $0x94] sm:$0xf] %v5577
  %6090 = vst [vmem:[%s4 + $0x98] sm:$0xf] %v5578
  %6091 = vst [vmem:[%s4 + $0x9c] sm:$0xf] %v5579
  %6092 = vst [vmem:[%s4 + $0xa0] sm:$0xf] %v5580
  %6093 = vst [vmem:[%s4 + $0xa4] sm:$0xf] %v5581
  %6094 = vst [vmem:[%s4 + $0xa8] sm:$0xf] %v5582
  %6095 = vst [vmem:[%s4 + $0xac] sm:$0xf] %v5583
  %6096 = vst [vmem:[%s4 + $0xb0] sm:$0xf] %v5584
  %6097 = vst [vmem:[%s4 + $0xb4] sm:$0xf] %v5585
  %6098 = vst [vmem:[%s4 + $0xb8] sm:$0xf] %v5586
  %6099 = vst [vmem:[%s4 + $0xbc] sm:$0xf] %v5587
  %6100 = vst [vmem:[%s4 + $0xc0] sm:$0xf] %v5588
  %6101 = vst [vmem:[%s4 + $0xc4] sm:$0xf] %v5589
  %6102 = vst [vmem:[%s4 + $0xc8] sm:$0xf] %v5590
  %6103 = vst [vmem:[%s4 + $0xcc] sm:$0xf] %v5591
  %6104 = vst [vmem:[%s4 + $0xd0] sm:$0xf] %v5592
  %6105 = vst [vmem:[%s4 + $0xd4] sm:$0xf] %v5593
  %6106 = vst [vmem:[%s4 + $0xd8] sm:$0xf] %v5594
  %6107 = vst [vmem:[%s4 + $0xdc] sm:$0xf] %v5595
  %6108 = vst [vmem:[%s4 + $0xe0] sm:$0xf] %v5596
  %6109 = vst [vmem:[%s4 + $0xe4] sm:$0xf] %v5597
  %6110 = vst [vmem:[%s4 + $0xe8] sm:$0xf] %v5598
  %6111 = vst [vmem:[%s4 + $0xec] sm:$0xf] %v5599
  %6112 = vst [vmem:[%s4 + $0xf0] sm:$0xf] %v5600
  %6113 = vst [vmem:[%s4 + $0xf4] sm:$0xf] %v5601
  %6114 = vst [vmem:[%s4 + $0xf8] sm:$0xf] %v5602
  %6115 = vst [vmem:[%s4 + $0xfc] sm:$0xf] %v5603
  %6116 = vst [vmem:[%s4 + $0x100] sm:$0xf] %v5604
  %6117 = vst [vmem:[%s4 + $0x104] sm:$0xf] %v5605
  %6118 = vst [vmem:[%s4 + $0x108] sm:$0xf] %v5606
  %6119 = vst [vmem:[%s4 + $0x10c] sm:$0xf] %v5607
  %6120 = vst [vmem:[%s4 + $0x110] sm:$0xf] %v5608
  %6121 = vst [vmem:[%s4 + $0x114] sm:$0xf] %v5609
  %6122 = vst [vmem:[%s4 + $0x118] sm:$0xf] %v5610
  %6123 = vst [vmem:[%s4 + $0x11c] sm:$0xf] %v5611
  %6124 = vst [vmem:[%s4 + $0x120] sm:$0xf] %v5612
  %6125 = vst [vmem:[%s4 + $0x124] sm:$0xf] %v5613
  %6126 = vst [vmem:[%s4 + $0x128] sm:$0xf] %v5614
  %6127 = vst [vmem:[%s4 + $0x12c] sm:$0xf] %v5615
  %6128 = vst [vmem:[%s4 + $0x130] sm:$0xf] %v5616
  %6129 = vst [vmem:[%s4 + $0x134] sm:$0xf] %v5617
  %6130 = vst [vmem:[%s4 + $0x138] sm:$0xf] %v5618
  %6131 = vst [vmem:[%s4 + $0x13c] sm:$0xf] %v5619
  %6132 = vst [vmem:[%s4 + $0x140] sm:$0xf] %v5620
  %6133 = vst [vmem:[%s4 + $0x144] sm:$0xf] %v5621
  %6134 = vst [vmem:[%s4 + $0x148] sm:$0xf] %v5622
  %6135 = vst [vmem:[%s4 + $0x14c] sm:$0xf] %v5623
  %6136 = vst [vmem:[%s4 + $0x150] sm:$0xf] %v5624
  %6137 = vst [vmem:[%s4 + $0x154] sm:$0xf] %v5625
  %6138 = vst [vmem:[%s4 + $0x158] sm:$0xf] %v5626
  %6139 = vst [vmem:[%s4 + $0x15c] sm:$0xf] %v5627
  %6140 = vst [vmem:[%s4 + $0x160] sm:$0xf] %v5628
  %6141 = vst [vmem:[%s4 + $0x164] sm:$0xf] %v5629
  %6142 = vst [vmem:[%s4 + $0x168] sm:$0xf] %v5630
  %6143 = vst [vmem:[%s4 + $0x16c] sm:$0xf] %v5631
  %6144 = vst [vmem:[%s4 + $0x170] sm:$0xf] %v5632
  %6145 = vst [vmem:[%s4 + $0x174] sm:$0xf] %v5633
  %6146 = vst [vmem:[%s4 + $0x178] sm:$0xf] %v5634
  %6147 = vst [vmem:[%s4 + $0x17c] sm:$0xf] %v5635
  %6148 = vst [vmem:[%s4 + $0x180] sm:$0xf] %v5636
  %6149 = vst [vmem:[%s4 + $0x184] sm:$0xf] %v5637
  %6150 = vst [vmem:[%s4 + $0x188] sm:$0xf] %v5638
  %6151 = vst [vmem:[%s4 + $0x18c] sm:$0xf] %v5639
  %6152 = vst [vmem:[%s4 + $0x190] sm:$0xf] %v5640
  %6153 = vst [vmem:[%s4 + $0x194] sm:$0xf] %v5641
  %6154 = vst [vmem:[%s4 + $0x198] sm:$0xf] %v5642
  %6155 = vst [vmem:[%s4 + $0x19c] sm:$0xf] %v5643
  %6156 = vst [vmem:[%s4 + $0x1a0] sm:$0xf] %v5644
  %6157 = vst [vmem:[%s4 + $0x1a4] sm:$0xf] %v5645
  %6158 = vst [vmem:[%s4 + $0x1a8] sm:$0xf] %v5646
  %6159 = vst [vmem:[%s4 + $0x1ac] sm:$0xf] %v5647
  %6160 = vst [vmem:[%s4 + $0x1b0] sm:$0xf] %v5648
  %6161 = vst [vmem:[%s4 + $0x1b4] sm:$0xf] %v5649
  %6162 = vst [vmem:[%s4 + $0x1b8] sm:$0xf] %v5650
  %6163 = vst [vmem:[%s4 + $0x1bc] sm:$0xf] %v5651
  %6164 = vst [vmem:[%s4 + $0x1c0] sm:$0xf] %v5652
  %6165 = vst [vmem:[%s4 + $0x1c4] sm:$0xf] %v5653
  %6166 = vst [vmem:[%s4 + $0x1c8] sm:$0xf] %v5654
  %6167 = vst [vmem:[%s4 + $0x1cc] sm:$0xf] %v5655
  %6168 = vst [vmem:[%s4 + $0x1d0] sm:$0xf] %v5656
  %6169 = vst [vmem:[%s4 + $0x1d4] sm:$0xf] %v5657
  %6170 = vst [vmem:[%s4 + $0x1d8] sm:$0xf] %v5658
  %6171 = vst [vmem:[%s4 + $0x1dc] sm:$0xf] %v5659
  %6172 = vst [vmem:[%s4 + $0x1e0] sm:$0xf] %v5660
  %6173 = vst [vmem:[%s4 + $0x1e4] sm:$0xf] %v5661
  %6174 = vst [vmem:[%s4 + $0x1e8] sm:$0xf] %v5662
  %6175 = vst [vmem:[%s4 + $0x1ec] sm:$0xf] %v5663
  %6176 = vst [vmem:[%s4 + $0x1f0] sm:$0xf] %v5664
  %6177 = vst [vmem:[%s4 + $0x1f4] sm:$0xf] %v5665
  %6178 = vst [vmem:[%s4 + $0x1f8] sm:$0xf] %v5666
  %6179 = vst [vmem:[%s4 + $0x1fc] sm:$0xf] %v5667
  %6180 = vst [vmem:[%s4 + $0x200] sm:$0xf] %v5668
  %6181 = vst [vmem:[%s4 + $0x204] sm:$0xf] %v5669
  %6182 = vst [vmem:[%s4 + $0x208] sm:$0xf] %v5670
  %6183 = vst [vmem:[%s4 + $0x20c] sm:$0xf] %v5671
  %6184 = vst [vmem:[%s4 + $0x210] sm:$0xf] %v5672
  %6185 = vst [vmem:[%s4 + $0x214] sm:$0xf] %v5673
  %6186 = vst [vmem:[%s4 + $0x218] sm:$0xf] %v5674
  %6187 = vst [vmem:[%s4 + $0x21c] sm:$0xf] %v5675
  %6188 = vst [vmem:[%s4 + $0x220] sm:$0xf] %v5676
  %6189 = vst [vmem:[%s4 + $0x224] sm:$0xf] %v5677
  %6190 = vst [vmem:[%s4 + $0x228] sm:$0xf] %v5678
  %6191 = vst [vmem:[%s4 + $0x22c] sm:$0xf] %v5679
  %6192 = vst [vmem:[%s4 + $0x230] sm:$0xf] %v5680
  %6193 = vst [vmem:[%s4 + $0x234] sm:$0xf] %v5681
  %6194 = vst [vmem:[%s4 + $0x238] sm:$0xf] %v5682
  %6195 = vst [vmem:[%s4 + $0x23c] sm:$0xf] %v5683
  %6196 = vst [vmem:[%s4 + $0x240] sm:$0xf] %v5684
  %6197 = vst [vmem:[%s4 + $0x244] sm:$0xf] %v5685
  %6198 = vst [vmem:[%s4 + $0x248] sm:$0xf] %v5686
  %6199 = vst [vmem:[%s4 + $0x24c] sm:$0xf] %v5687
  %6200 = vst [vmem:[%s4 + $0x250] sm:$0xf] %v5688
  %6201 = vst [vmem:[%s4 + $0x254] sm:$0xf] %v5689
  %6202 = vst [vmem:[%s4 + $0x258] sm:$0xf] %v5690
  %6203 = vst [vmem:[%s4 + $0x25c] sm:$0xf] %v5691
  %6204 = vst [vmem:[%s4 + $0x260] sm:$0xf] %v5692
  %6205 = vst [vmem:[%s4 + $0x264] sm:$0xf] %v5693
  %6206 = vst [vmem:[%s4 + $0x268] sm:$0xf] %v5694
  %6207 = vst [vmem:[%s4 + $0x26c] sm:$0xf] %v5695
  %6208 = vst [vmem:[%s4 + $0x270] sm:$0xf] %v5696
  %6209 = vst [vmem:[%s4 + $0x274] sm:$0xf] %v5697
  %6210 = vst [vmem:[%s4 + $0x278] sm:$0xf] %v5698
  %6211 = vst [vmem:[%s4 + $0x27c] sm:$0xf] %v5699
  %6212 = vst [vmem:[%s4 + $0x280] sm:$0xf] %v5700
  %6213 = vst [vmem:[%s4 + $0x284] sm:$0xf] %v5701
  %6214 = vst [vmem:[%s4 + $0x288] sm:$0xf] %v5702
  %6215 = vst [vmem:[%s4 + $0x28c] sm:$0xf] %v5703
  %6216 = vst [vmem:[%s4 + $0x290] sm:$0xf] %v5704
  %6217 = vst [vmem:[%s4 + $0x294] sm:$0xf] %v5705
  %6218 = vst [vmem:[%s4 + $0x298] sm:$0xf] %v5706
  %6219 = vst [vmem:[%s4 + $0x29c] sm:$0xf] %v5707
  %6220 = vst [vmem:[%s4 + $0x2a0] sm:$0xf] %v5708
  %6221 = vst [vmem:[%s4 + $0x2a4] sm:$0xf] %v5709
  %6222 = vst [vmem:[%s4 + $0x2a8] sm:$0xf] %v5710
  %6223 = vst [vmem:[%s4 + $0x2ac] sm:$0xf] %v5711
  %6224 = vst [vmem:[%s4 + $0x2b0] sm:$0xf] %v5712
  %6225 = vst [vmem:[%s4 + $0x2b4] sm:$0xf] %v5713
  %6226 = vst [vmem:[%s4 + $0x2b8] sm:$0xf] %v5714
  %6227 = vst [vmem:[%s4 + $0x2bc] sm:$0xf] %v5715
  %6228 = vst [vmem:[%s4 + $0x2c0] sm:$0xf] %v5716
  %6229 = vst [vmem:[%s4 + $0x2c4] sm:$0xf] %v5717
  %6230 = vst [vmem:[%s4 + $0x2c8] sm:$0xf] %v5718
  %6231 = vst [vmem:[%s4 + $0x2cc] sm:$0xf] %v5719
  %6232 = vst [vmem:[%s4 + $0x2d0] sm:$0xf] %v5720
  %6233 = vst [vmem:[%s4 + $0x2d4] sm:$0xf] %v5721
  %6234 = vst [vmem:[%s4 + $0x2d8] sm:$0xf] %v5722
  %6235 = vst [vmem:[%s4 + $0x2dc] sm:$0xf] %v5723
  %6236 = vst [vmem:[%s4 + $0x2e0] sm:$0xf] %v5724
  %6237 = vst [vmem:[%s4 + $0x2e4] sm:$0xf] %v5725
  %6238 = vst [vmem:[%s4 + $0x2e8] sm:$0xf] %v5726
  %6239 = vst [vmem:[%s4 + $0x2ec] sm:$0xf] %v5727
  %6240 = vst [vmem:[%s4 + $0x2f0] sm:$0xf] %v5728
  %6241 = vst [vmem:[%s4 + $0x2f4] sm:$0xf] %v5729
  %6242 = vst [vmem:[%s4 + $0x2f8] sm:$0xf] %v5730
  %6243 = vst [vmem:[%s4 + $0x2fc] sm:$0xf] %v5731
  %6244 = vst [vmem:[%s4 + $0x300] sm:$0xf] %v5732
  %6245 = vst [vmem:[%s4 + $0x304] sm:$0xf] %v5733
  %6246 = vst [vmem:[%s4 + $0x308] sm:$0xf] %v5734
  %6247 = vst [vmem:[%s4 + $0x30c] sm:$0xf] %v5735
  %6248 = vst [vmem:[%s4 + $0x310] sm:$0xf] %v5736
  %6249 = vst [vmem:[%s4 + $0x314] sm:$0xf] %v5737
  %6250 = vst [vmem:[%s4 + $0x318] sm:$0xf] %v5738
  %6251 = vst [vmem:[%s4 + $0x31c] sm:$0xf] %v5739
  %6252 = vst [vmem:[%s4 + $0x320] sm:$0xf] %v5740
  %6253 = vst [vmem:[%s4 + $0x324] sm:$0xf] %v5741
  %6254 = vst [vmem:[%s4 + $0x328] sm:$0xf] %v5742
  %6255 = vst [vmem:[%s4 + $0x32c] sm:$0xf] %v5743
  %6256 = vst [vmem:[%s4 + $0x330] sm:$0xf] %v5744
  %6257 = vst [vmem:[%s4 + $0x334] sm:$0xf] %v5745
  %6258 = vst [vmem:[%s4 + $0x338] sm:$0xf] %v5746
  %6259 = vst [vmem:[%s4 + $0x33c] sm:$0xf] %v5747
  %6260 = vst [vmem:[%s4 + $0x340] sm:$0xf] %v5748
  %6261 = vst [vmem:[%s4 + $0x344] sm:$0xf] %v5749
  %6262 = vst [vmem:[%s4 + $0x348] sm:$0xf] %v5750
  %6263 = vst [vmem:[%s4 + $0x34c] sm:$0xf] %v5751
  %6264 = vst [vmem:[%s4 + $0x350] sm:$0xf] %v5752
  %6265 = vst [vmem:[%s4 + $0x354] sm:$0xf] %v5753
  %6266 = vst [vmem:[%s4 + $0x358] sm:$0xf] %v5754
  %6267 = vst [vmem:[%s4 + $0x35c] sm:$0xf] %v5755
  %6268 = vst [vmem:[%s4 + $0x360] sm:$0xf] %v5756
  %6269 = vst [vmem:[%s4 + $0x364] sm:$0xf] %v5757
  %6270 = vst [vmem:[%s4 + $0x368] sm:$0xf] %v5758
  %6271 = vst [vmem:[%s4 + $0x36c] sm:$0xf] %v5759
  %6272 = vst [vmem:[%s4 + $0x370] sm:$0xf] %v5760
  %6273 = vst [vmem:[%s4 + $0x374] sm:$0xf] %v5761
  %6274 = vst [vmem:[%s4 + $0x378] sm:$0xf] %v5762
  %6275 = vst [vmem:[%s4 + $0x37c] sm:$0xf] %v5763
  %6276 = vst [vmem:[%s4 + $0x380] sm:$0xf] %v5764
  %6277 = vst [vmem:[%s4 + $0x384] sm:$0xf] %v5765
  %6278 = vst [vmem:[%s4 + $0x388] sm:$0xf] %v5766
  %6279 = vst [vmem:[%s4 + $0x38c] sm:$0xf] %v5767
  %6280 = vst [vmem:[%s4 + $0x390] sm:$0xf] %v5768
  %6281 = vst [vmem:[%s4 + $0x394] sm:$0xf] %v5769
  %6282 = vst [vmem:[%s4 + $0x398] sm:$0xf] %v5770
  %6283 = vst [vmem:[%s4 + $0x39c] sm:$0xf] %v5771
  %6284 = vst [vmem:[%s4 + $0x3a0] sm:$0xf] %v5772
  %6285 = vst [vmem:[%s4 + $0x3a4] sm:$0xf] %v5773
  %6286 = vst [vmem:[%s4 + $0x3a8] sm:$0xf] %v5774
  %6287 = vst [vmem:[%s4 + $0x3ac] sm:$0xf] %v5775
  %6288 = vst [vmem:[%s4 + $0x3b0] sm:$0xf] %v5776
  %6289 = vst [vmem:[%s4 + $0x3b4] sm:$0xf] %v5777
  %6290 = vst [vmem:[%s4 + $0x3b8] sm:$0xf] %v5778
  %6291 = vst [vmem:[%s4 + $0x3bc] sm:$0xf] %v5779
  %6292 = vst [vmem:[%s4 + $0x3c0] sm:$0xf] %v5780
  %6293 = vst [vmem:[%s4 + $0x3c4] sm:$0xf] %v5781
  %6294 = vst [vmem:[%s4 + $0x3c8] sm:$0xf] %v5782
  %6295 = vst [vmem:[%s4 + $0x3cc] sm:$0xf] %v5783
  %6296 = vst [vmem:[%s4 + $0x3d0] sm:$0xf] %v5784
  %6297 = vst [vmem:[%s4 + $0x3d4] sm:$0xf] %v5785
  %6298 = vst [vmem:[%s4 + $0x3d8] sm:$0xf] %v5786
  %6299 = vst [vmem:[%s4 + $0x3dc] sm:$0xf] %v5787
  %6300 = vst [vmem:[%s4 + $0x3e0] sm:$0xf] %v5788
  %6301 = vst [vmem:[%s4 + $0x3e4] sm:$0xf] %v5789
  %6302 = vst [vmem:[%s4 + $0x3e8] sm:$0xf] %v5790
  %6303 = vst [vmem:[%s4 + $0x3ec] sm:$0xf] %v5791
  %6304 = vst [vmem:[%s4 + $0x3f0] sm:$0xf] %v5792
  %6305 = vst [vmem:[%s4 + $0x3f4] sm:$0xf] %v5793
  %6306 = vst [vmem:[%s4 + $0x3f8] sm:$0xf] %v5794
  %6307 = vst [vmem:[%s4 + $0x3fc] sm:$0xf] %v5795
  // Predicated region
  $region18: #{stem.1} parent=0 // pred_check
    _
  $region19: #{stem.1} parent=0 // pred_check_branch
    %6309 = sbr.rel (0) target = $region21
  $region20: #{stem.1} parent=0 // pred_region
    _
  $region21: #{stem.1} parent=0 // pred_fallthru
    _
  // Predicated region
  $region22: #{stem.1} parent=0 // pred_check
    _
  $region23: #{stem.1} parent=0 // pred_check_branch
    %6311 = sbr.rel (0) target = $region25
  $region24: #{stem.1} parent=0 // pred_region
    _
  $region25: #{stem.1} parent=0 // pred_fallthru
    _

</llo_original>
